<compile_context>
chip_gen: v6e
topology: v6e:2x2x1
jax: 0.10.0
libtpu: 0.0.40
codegen_flags: <defaults>
</compile_context>

<pallas_src>
import functools
import math

import jax
import jax.numpy as jnp
from jax.experimental import pallas as pl
from jax.experimental.pallas import tpu as pltpu

_EPS = 1e-5          # torch nn.LayerNorm default eps
_NEG = -1e20         # neginf(float32) used by masked_fill_ in the reference

# dot_general contraction patterns (no explicit transposes in-kernel)
_DN_NN = (((1,), (0,)), ((), ()))   # a @ b      (standard matmul)
_DN_NT = (((1,), (1,)), ((), ()))   # a @ b.T    (contract last dim of both)


# ----------------------------------------------------------------------------
# Capability probes / budgets
# ----------------------------------------------------------------------------
def _probe_single_buffering():
    """Check whether pipeline_mode=pl.Buffered(1) is accepted end-to-end."""
    if not hasattr(pl, "Buffered"):
        return {}
    try:
        def _k(a_ref, o_ref):
            o_ref[...] = a_ref[...]
        probe = pl.pallas_call(
            _k,
            out_shape=jax.ShapeDtypeStruct((8, 128), jnp.float32),
            grid=(1,),
            in_specs=[pl.BlockSpec((8, 128), lambda i: (0, 0),
                                   pipeline_mode=pl.Buffered(1))],
            out_specs=pl.BlockSpec((8, 128), lambda i: (i, 0)),
        )
        jax.jit(probe).lower(jnp.zeros((8, 128), jnp.float32)).compile()
        return {"pipeline_mode": pl.Buffered(1)}
    except Exception:
        return {}


_RESIDENT = _probe_single_buffering()   # kwargs for constant-index param specs


def _vmem_capacity_bytes():
    try:
        return int(pltpu.get_tpu_info().vmem_capacity_bytes)
    except Exception:
        return 128 << 20                 # v5e / v6e default


def _vmem_limit(est_bytes):
    """Generation-aware VMEM budget: 2x headroom, ceiling ~= 5/8 of physical."""
    cap = _vmem_capacity_bytes()
    ceiling = max((cap * 5) // 8, 32 << 20)   # ~40 MiB on v7x, ~80 MiB on v5e/v6e
    return int(min(max(2 * est_bytes + (4 << 20), 32 << 20), ceiling))


def _compute_dtype(x_dtype, force_bf16):
    """MXU operand dtype: bf16 for bf16 models (or when forced), else f32."""
    if force_bf16 or x_dtype == jnp.bfloat16:
        return jnp.bfloat16
    return jnp.float32


# ----------------------------------------------------------------------------
# Kernels
# ----------------------------------------------------------------------------
def _mha_block_kernel(q_ref, kv_ref, mask_ref,
                      wqT_ref, bq_ref, wkT_ref, bk_ref, wvT_ref, bv_ref,
                      woT_ref, bo_ref, gamma_ref, beta_ref, out_ref,
                      *, n_heads, inv_scale, causal, q_tile):
    """Fused MHA + residual + LayerNorm for one (batch, query-tile) step.

    q_ref   : (1, tq, D)   query / residual tile
    kv_ref  : (1, Lk, D)   key/value source (resident across query tiles)
    mask_ref: (1, 1, Lk)   key-padding mask, 1.0 = attend; causal part is
                           generated in-kernel via iota compares.
    wqT/wkT/wvT/woT : (D, D)  pre-transposed weights (NN contraction)
    bq/bk/bv/bo/gamma/beta : (1, D) f32
    """
    x = q_ref[0]                                   # (tq, D) model dtype
    kv = kv_ref[0]                                 # (Lk, D)
    tq, d = x.shape
    lk = kv.shape[0]
    dh = d // n_heads
    cdt = wqT_ref.dtype                            # MXU operand dtype

    xc = x.astype(cdt)
    kvc = kv.astype(cdt)

    # Fused lane-dense projections (full-D matmuls, f32 accumulation).
    q_all = (jax.lax.dot_general(xc, wqT_ref[...], _DN_NN,
                                 preferred_element_type=jnp.float32)
             + bq_ref[...]) * inv_scale            # (tq, D) f32
    k_all = jax.lax.dot_general(kvc, wkT_ref[...], _DN_NN,
                                preferred_element_type=jnp.float32) + bk_ref[...]
    v_all = jax.lax.dot_general(kvc, wvT_ref[...], _DN_NN,
                                preferred_element_type=jnp.float32) + bv_ref[...]

    # Validity mask: key padding (broadcast) AND in-kernel causal iota compare.
    valid = jnp.broadcast_to(mask_ref[0] > 0.5, (tq, lk))
    if causal:
        row = (jax.lax.broadcasted_iota(jnp.int32, (tq, lk), 0)
               + pl.program_id(1) * q_tile)
        col = jax.lax.broadcasted_iota(jnp.int32, (tq, lk), 1)
        valid = jnp.logical_and(valid, row >= col)

    # Per-head scores / context only; exact softmax (parity with torch).
    ctx_heads = []
    for h in range(n_heads):                       # static unroll (small H)
        sl = slice(h * dh, (h + 1) * dh)
        s = jax.lax.dot_general(q_all[:, sl].astype(cdt),
                                k_all[:, sl].astype(cdt), _DN_NT,
                                preferred_element_type=jnp.float32)   # (tq, Lk)
        s = jnp.where(valid, s, _NEG)
        e = jnp.exp(s - jnp.max(s, axis=-1, keepdims=True))
        p = e / jnp.sum(e, axis=-1, keepdims=True)                    # exact divide
        ctx_heads.append(
            jax.lax.dot_general(p.astype(cdt), v_all[:, sl].astype(cdt),
                                _DN_NN, preferred_element_type=jnp.float32))
    ctx = jnp.concatenate(ctx_heads, axis=-1) if n_heads > 1 else ctx_heads[0]

    # Single lane-dense output projection.
    attn = jax.lax.dot_general(ctx.astype(cdt), woT_ref[...], _DN_NN,
                               preferred_element_type=jnp.float32) + bo_ref[...]

    # residual + LayerNorm (f32 statistics)
    y = x.astype(jnp.float32) + attn
    mu = jnp.mean(y, axis=-1, keepdims=True)
    yc = y - mu
    var = jnp.mean(yc * yc, axis=-1, keepdims=True)
    out_ref[0] = ((yc * jax.lax.rsqrt(var + _EPS)) * gamma_ref[...]
                  + beta_ref[...]).astype(out_ref.dtype)


def _ffn_block_kernel(x_ref, w1T_ref, b1_ref, w2T_ref, b2_ref,
                      gamma_ref, beta_ref, out_ref):
    """Fused lin1 + ReLU + lin2 + residual + LayerNorm on a row tile."""
    x = x_ref[...]                                 # (tm, D)
    cdt = w1T_ref.dtype
    h = jax.lax.dot_general(x.astype(cdt), w1T_ref[...], _DN_NN,
                            preferred_element_type=jnp.float32) + b1_ref[...]
    h = jnp.maximum(h, 0.0)
    y2 = jax.lax.dot_general(h.astype(cdt), w2T_ref[...], _DN_NN,
                             preferred_element_type=jnp.float32) + b2_ref[...]
    y = x.astype(jnp.float32) + y2
    mu = jnp.mean(y, axis=-1, keepdims=True)
    yc = y - mu
    var = jnp.mean(yc * yc, axis=-1, keepdims=True)
    out_ref[...] = ((yc * jax.lax.rsqrt(var + _EPS)) * gamma_ref[...]
                    + beta_ref[...]).astype(out_ref.dtype)


# ----------------------------------------------------------------------------
# pallas_call wrappers
# ----------------------------------------------------------------------------
def _mha_block(q_in, kv_in, key_mask, attn_p, norm_p, n_heads,
               *, causal, compute_dtype, q_tile_max=256):
    """LayerNorm(q_in + MultiHeadAttention(q_in, kv_in, mask))."""
    b, lq, d = q_in.shape
    lk = kv_in.shape[1]
    dh = d // n_heads
    inv_scale = 1.0 / math.sqrt(dh)

    tq = lq if lq <= q_tile_max else q_tile_max
    n_q = pl.cdiv(lq, tq)

    # One-time HBM-side layout plumbing: pre-transpose weights for NN dots and
    # pre-cast to the MXU operand dtype; biases / LN params stay f32.
    cdt = compute_dtype
    wqT = attn_p["wq"].T.astype(cdt)
    wkT = attn_p["wk"].T.astype(cdt)
    wvT = attn_p["wv"].T.astype(cdt)
    woT = attn_p["wo"].T.astype(cdt)
    bq = attn_p["bq"].reshape(1, d).astype(jnp.float32)
    bk = attn_p["bk"].reshape(1, d).astype(jnp.float32)
    bv = attn_p["bv"].reshape(1, d).astype(jnp.float32)
    bo = attn_p["bo"].reshape(1, d).astype(jnp.float32)
    gamma = norm_p["gamma"].reshape(1, d).astype(jnp.float32)
    beta = norm_p["beta"].reshape(1, d).astype(jnp.float32)
    mask = key_mask.reshape(b, 1, lk).astype(jnp.float32)   # tiny, not (B,L,Lk)

    w_bytes = jnp.dtype(cdt).itemsize
    est = (4 * d * d * w_bytes + 7 * d * 4                    # resident params
           + 2 * 4 * (lk * d + lk)                            # kv + mask (dbl buf)
           + 2 * 2 * 4 * tq * d                               # q / out tiles
           + 4 * ((tq + 2 * lk) * d + 3 * tq * lk + 2 * tq * d))  # live temps

    batch_map3 = lambda i, j: (i, 0, 0)
    qtile_map3 = lambda i, j: (i, j, 0)
    const2 = lambda i, j: (0, 0)

    w_spec = pl.BlockSpec((d, d), const2, **_RESIDENT)
    v_spec = pl.BlockSpec((1, d), const2, **_RESIDENT)

    kernel = functools.partial(_mha_block_kernel, n_heads=n_heads,
                               inv_scale=inv_scale, causal=causal, q_tile=tq)

    return pl.pallas_call(
        kernel,
        out_shape=jax.ShapeDtypeStruct((b, lq, d), q_in.dtype),
        grid=(b, n_q),
        in_specs=[
            pl.BlockSpec((1, tq, d), qtile_map3),      # query / residual tile
            pl.BlockSpec((1, lk, d), batch_map3),      # key/value source
            pl.BlockSpec((1, 1, lk), batch_map3),      # key-padding mask
            w_spec, v_spec,                            # wqT, bq
            w_spec, v_spec,                            # wkT, bk
            w_spec, v_spec,                            # wvT, bv
            w_spec, v_spec,                            # woT, bo
            v_spec, v_spec,                            # gamma, beta
        ],
        out_specs=pl.BlockSpec((1, tq, d), qtile_map3),
        compiler_params=pltpu.CompilerParams(
            dimension_semantics=("parallel", "parallel"),
            vmem_limit_bytes=_vmem_limit(est)),
    )(q_in, kv_in, mask, wqT, bq, wkT, bk, wvT, bv, woT, bo, gamma, beta)


def _ffn_block(x, ffn_p, norm_p, *, compute_dtype, row_tile=512):
    """LayerNorm(x + lin2(relu(lin1(x)))) over flattened rows."""
    b, l, d = x.shape
    f = ffn_p["w1"].shape[0]
    m = b * l
    x2 = x.reshape(m, d)
    tm = m if m <= row_tile else row_tile

    cdt = compute_dtype
    w1T = ffn_p["w1"].T.astype(cdt)                 # (D, F)
    w2T = ffn_p["w2"].T.astype(cdt)                 # (F, D)
    b1 = ffn_p["b1"].reshape(1, f).astype(jnp.float32)
    b2 = ffn_p["b2"].reshape(1, d).astype(jnp.float32)
    gamma = norm_p["gamma"].reshape(1, d).astype(jnp.float32)
    beta = norm_p["beta"].reshape(1, d).astype(jnp.float32)

    w_bytes = jnp.dtype(cdt).itemsize
    est = (2 * f * d * w_bytes + (f + 3 * d) * 4    # resident params
           + 2 * 2 * 4 * tm * d                     # dbl-buffered x / out tiles
           + 4 * (tm * f + 3 * tm * d))             # live temporaries

    const2 = lambda i: (0, 0)
    out = pl.pallas_call(
        _ffn_block_kernel,
        out_shape=jax.ShapeDtypeStruct((m, d), x.dtype),
        grid=(pl.cdiv(m, tm),),
        in_specs=[
            pl.BlockSpec((tm, d), lambda i: (i, 0)),
            pl.BlockSpec((d, f), const2, **_RESIDENT),
            pl.BlockSpec((1, f), const2, **_RESIDENT),
            pl.BlockSpec((f, d), const2, **_RESIDENT),
            pl.BlockSpec((1, d), const2, **_RESIDENT),
            pl.BlockSpec((1, d), const2, **_RESIDENT),
            pl.BlockSpec((1, d), const2, **_RESIDENT),
        ],
        out_specs=pl.BlockSpec((tm, d), lambda i: (i, 0)),
        compiler_params=pltpu.CompilerParams(
            dimension_semantics=("parallel",),
            vmem_limit_bytes=_vmem_limit(est)),
    )(x2, w1T, b1, w2T, b2, gamma, beta)
    return out.reshape(b, l, d)


def transformer_decoder_layer_kg_forward(params, x, encoder_output, encoder_mask,
                                         kg_encoder_output=None, kg_encoder_mask=None,
                                         db_encoder_output=None, db_encoder_mask=None,
                                         n_heads=2, use_bf16_matmul=False):
    """Equivalent of TransformerDecoderLayerKG.forward (dropout p=0 -> identity)."""
    del kg_encoder_output, kg_encoder_mask, db_encoder_output, db_encoder_mask  # unused in torch forward
    b, l, d = x.shape
    cdt = _compute_dtype(x.dtype, use_bf16_matmul)

    # self-attention: causal mask generated in-kernel; key-padding mask = ones
    ones_mask = jnp.ones((b, l), jnp.float32)
    x = _mha_block(x, x, ones_mask, params["self_attn"], params["norm1"],
                   n_heads, causal=True, compute_dtype=cdt)

    # encoder (cross) attention; encoder_mask is (B, Lk) with 1 = valid
    x = _mha_block(x, encoder_output, encoder_mask, params["enc_attn"],
                   params["norm2"], n_heads, causal=False, compute_dtype=cdt)

    # feed-forward block
    x = _ffn_block(x, params["ffn"], params["norm3"], compute_dtype=cdt)
    return x


# ----------------------------------------------------------------------------
# Pure-JAX reference (correctness check only)
# ----------------------------------------------------------------------------
def _reference_layer(params, x, enc_out, enc_mask, n_heads):
    b, l, d = x.shape

    def linear(t, wt, bt):
        return jnp.einsum("...i,oi->...o", t, wt) + bt

    def mha(q_in, kv_in, mask, p):
        bq, lq, dm = q_in.shape
        lk = kv_in.shape[1]
        dh = dm // n_heads
        q = linear(q_in, p["wq"], p["bq"]).reshape(bq, lq, n_heads, dh)
        k = linear(kv_in, p["wk"], p["bk"]).reshape(bq, lk, n_heads, dh)
        v = linear(kv_in, p["wv"], p["bv"]).reshape(bq, lk, n_heads, dh)
        s = jnp.einsum("bqhd,bkhd->bhqk", q / math.sqrt(dh), k)
        s = jnp.where(mask[:, None] > 0.5, s, _NEG)
        a = jax.nn.softmax(s, axis=-1)
        ctx = jnp.einsum("bhqk,bkhd->bqhd", a, v).reshape(bq, lq, dm)
        return linear(ctx, p["wo"], p["bo"])

    def ln(t, p):
        mu = t.mean(-1, keepdims=True)
        var = ((t - mu) ** 2).mean(-1, keepdims=True)
        return (t - mu) / jnp.sqrt(var + _EPS) * p["gamma"] + p["beta"]

    causal = jnp.broadcast_to(jnp.tril(jnp.ones((l, l), jnp.float32))[None], (b, l, l))
    h = ln(x + mha(x, x, causal, params["self_attn"]), params["norm1"])
    m2 = jnp.broadcast_to(enc_mask.astype(jnp.float32).reshape(b, 1, -1),
                          (b, l, enc_out.shape[1]))
    h = ln(h + mha(h, enc_out, m2, params["enc_attn"]), params["norm2"])
    ff = linear(jnp.maximum(linear(h, params["ffn"]["w1"], params["ffn"]["b1"]), 0.0),
                params["ffn"]["w2"], params["ffn"]["b2"])
    return ln(h + ff, params["norm3"])


# ----------------------------------------------------------------------------
# Demo / self-check
# ----------------------------------------------------------------------------
if __name__ == "__main__":
    B, L, LK, D, H, FF = 2, 8, 12, 32, 2, 64
    key = jax.random.PRNGKey(0)
    keys = jax.random.split(key, 32)
    kit = iter(keys)

    def rnd(shape, scale):
        return jax.random.normal(next(kit), shape, jnp.float32) * scale

    def mha_params(dim):
        s = 1.0 / math.sqrt(dim)
        return dict(wq=rnd((dim, dim), s), bq=rnd((1, dim), 0.05),
                    wk=rnd((dim, dim), s), bk=rnd((1, dim), 0.05),
                    wv=rnd((dim, dim), s), bv=rnd((1, dim), 0.05),
                    wo=rnd((dim, dim), s), bo=rnd((1, dim), 0.05))

    def norm_params(dim):
        return dict(gamma=1.0 + rnd((1, dim), 0.05), beta=rnd((1, dim), 0.05))

    params = dict(
        self_attn=mha_params(D), norm1=norm_params(D),
        enc_attn=mha_params(D), norm2=norm_params(D),
        ffn=dict(w1=rnd((FF, D), 1.0 / math.sqrt(D)), b1=rnd((1, FF), 0.05),
                 w2=rnd((D, FF), 1.0 / math.sqrt(FF)), b2=rnd((1, D), 0.05)),
        norm3=norm_params(D),
    )

    x = jax.random.normal(next(kit), (B, L, D), jnp.float32)
    encoder_output = jax.random.normal(next(kit), (B, LK, D), jnp.float32)
    # batch 0: all keys valid; batch 1: last 3 keys padded out
    encoder_mask = (jnp.arange(LK)[None, :] < jnp.array([[LK], [LK - 3]])).astype(jnp.float32)
    # kg / db inputs are accepted but unused by the torch forward
    kg_out = jax.random.normal(next(kit), (B, 6, D), jnp.float32)
    kg_mask = jnp.ones((B, 6), jnp.float32)
    db_out = jax.random.normal(next(kit), (B, 5, D), jnp.float32)
    db_mask = jnp.ones((B, 5), jnp.float32)

    fwd = jax.jit(functools.partial(transformer_decoder_layer_kg_forward, n_heads=H))
    out = fwd(params, x, encoder_output, encoder_mask,
              kg_out, kg_mask, db_out, db_mask)
    out = jax.block_until_ready(out)

    ref = _reference_layer(params, x, encoder_output, encoder_mask, n_heads=H)
    assert out.shape == (B, L, D)
    max_diff = float(jnp.max(jnp.abs(out - ref)))
    assert bool(jnp.allclose(out, ref, atol=2e-3, rtol=2e-3)), f"max abs diff {max_diff}"

    print("KERNEL_OK")
</pallas_src>

<mosaic_0001>
module attributes {stable_mosaic.version = 11 : i64} {
  func.func @_mha_block_kernel(%arg0: i32, %arg1: i32, %arg2: memref<1x8x32xf32, #tpu.memory_space<vmem>>, %arg3: memref<1x8x32xf32, #tpu.memory_space<vmem>>, %arg4: memref<1x1x8xf32, #tpu.memory_space<vmem>>, %arg5: memref<32x32xf32, #tpu.memory_space<vmem>>, %arg6: memref<1x32xf32, #tpu.memory_space<vmem>>, %arg7: memref<32x32xf32, #tpu.memory_space<vmem>>, %arg8: memref<1x32xf32, #tpu.memory_space<vmem>>, %arg9: memref<32x32xf32, #tpu.memory_space<vmem>>, %arg10: memref<1x32xf32, #tpu.memory_space<vmem>>, %arg11: memref<32x32xf32, #tpu.memory_space<vmem>>, %arg12: memref<1x32xf32, #tpu.memory_space<vmem>>, %arg13: memref<1x32xf32, #tpu.memory_space<vmem>>, %arg14: memref<1x32xf32, #tpu.memory_space<vmem>>, %arg15: memref<1x8x32xf32, #tpu.memory_space<vmem>>) attributes {dimension_semantics = [#tpu.dimension_semantics<parallel>, #tpu.dimension_semantics<parallel>], iteration_bounds = array<i64: 2, 1>, scalar_prefetch = 0 : i64, scratch_operands = 0 : i64, tpu.core_type = #tpu.core_type<tc>, window_params = [{transform_indices = @transform_0, window_bounds = array<i64: 1, 8, 32>}, {transform_indices = @transform_1, window_bounds = array<i64: 1, 8, 32>}, {transform_indices = @transform_2, window_bounds = array<i64: 1, 1, 8>}, {pipeline_mode = #tpu.pipeline_mode<synchronous>, transform_indices = @transform_3, window_bounds = array<i64: 32, 32>}, {pipeline_mode = #tpu.pipeline_mode<synchronous>, transform_indices = @transform_4, window_bounds = array<i64: 1, 32>}, {pipeline_mode = #tpu.pipeline_mode<synchronous>, transform_indices = @transform_5, window_bounds = array<i64: 32, 32>}, {pipeline_mode = #tpu.pipeline_mode<synchronous>, transform_indices = @transform_6, window_bounds = array<i64: 1, 32>}, {pipeline_mode = #tpu.pipeline_mode<synchronous>, transform_indices = @transform_7, window_bounds = array<i64: 32, 32>}, {pipeline_mode = #tpu.pipeline_mode<synchronous>, transform_indices = @transform_8, window_bounds = array<i64: 1, 32>}, {pipeline_mode = #tpu.pipeline_mode<synchronous>, transform_indices = @transform_9, window_bounds = array<i64: 32, 32>}, {pipeline_mode = #tpu.pipeline_mode<synchronous>, transform_indices = @transform_10, window_bounds = array<i64: 1, 32>}, {pipeline_mode = #tpu.pipeline_mode<synchronous>, transform_indices = @transform_11, window_bounds = array<i64: 1, 32>}, {pipeline_mode = #tpu.pipeline_mode<synchronous>, transform_indices = @transform_12, window_bounds = array<i64: 1, 32>}, {transform_indices = @transform_13, window_bounds = array<i64: 1, 8, 32>}]} {
    %c0 = arith.constant 0 : index
    %c0_0 = arith.constant 0 : index
    %c0_1 = arith.constant 0 : index
    %0 = vector.load %arg2[%c0, %c0_0, %c0_1] : memref<1x8x32xf32, #tpu.memory_space<vmem>>, vector<1x8x32xf32>
    %1 = vector.shape_cast %0 : vector<1x8x32xf32> to vector<8x32xf32>
    %c0_2 = arith.constant 0 : index
    %c0_3 = arith.constant 0 : index
    %c0_4 = arith.constant 0 : index
    %2 = vector.load %arg3[%c0_2, %c0_3, %c0_4] : memref<1x8x32xf32, #tpu.memory_space<vmem>>, vector<1x8x32xf32>
    %3 = vector.shape_cast %2 : vector<1x8x32xf32> to vector<8x32xf32>
    %c0_5 = arith.constant 0 : index
    %c0_6 = arith.constant 0 : index
    %4 = vector.load %arg5[%c0_5, %c0_6] : memref<32x32xf32, #tpu.memory_space<vmem>>, vector<32x32xf32>
    %cst = arith.constant dense<0.000000e+00> : vector<8x32xf32>
    %5 = tpu.matmul %1, %4, %cst {dimension_numbers = #tpu.dot_dimension_numbers<[1], [0], [0], [1], [0, 0, 1, 1], [], []>} : vector<8x32xf32>, vector<32x32xf32>, vector<8x32xf32> -> vector<8x32xf32>
    %c0_7 = arith.constant 0 : index
    %c0_8 = arith.constant 0 : index
    %6 = vector.load %arg6[%c0_7, %c0_8] : memref<1x32xf32, #tpu.memory_space<vmem>>, vector<1x32xf32>
    %7 = vector.broadcast %6 : vector<1x32xf32> to vector<8x32xf32>
    %8 = arith.addf %5, %7 : vector<8x32xf32>
    %cst_9 = arith.constant 2.500000e-01 : f32
    %9 = vector.broadcast %cst_9 : f32 to vector<8x32xf32>
    %10 = arith.mulf %8, %9 : vector<8x32xf32>
    %c0_10 = arith.constant 0 : index
    %c0_11 = arith.constant 0 : index
    %11 = vector.load %arg7[%c0_10, %c0_11] : memref<32x32xf32, #tpu.memory_space<vmem>>, vector<32x32xf32>
    %cst_12 = arith.constant dense<0.000000e+00> : vector<8x32xf32>
    %12 = tpu.matmul %3, %11, %cst_12 {dimension_numbers = #tpu.dot_dimension_numbers<[1], [0], [0], [1], [0, 0, 1, 1], [], []>} : vector<8x32xf32>, vector<32x32xf32>, vector<8x32xf32> -> vector<8x32xf32>
    %c0_13 = arith.constant 0 : index
    %c0_14 = arith.constant 0 : index
    %13 = vector.load %arg8[%c0_13, %c0_14] : memref<1x32xf32, #tpu.memory_space<vmem>>, vector<1x32xf32>
    %14 = vector.broadcast %13 : vector<1x32xf32> to vector<8x32xf32>
    %15 = arith.addf %12, %14 : vector<8x32xf32>
    %c0_15 = arith.constant 0 : index
    %c0_16 = arith.constant 0 : index
    %16 = vector.load %arg9[%c0_15, %c0_16] : memref<32x32xf32, #tpu.memory_space<vmem>>, vector<32x32xf32>
    %cst_17 = arith.constant dense<0.000000e+00> : vector<8x32xf32>
    %17 = tpu.matmul %3, %16, %cst_17 {dimension_numbers = #tpu.dot_dimension_numbers<[1], [0], [0], [1], [0, 0, 1, 1], [], []>} : vector<8x32xf32>, vector<32x32xf32>, vector<8x32xf32> -> vector<8x32xf32>
    %c0_18 = arith.constant 0 : index
    %c0_19 = arith.constant 0 : index
    %18 = vector.load %arg10[%c0_18, %c0_19] : memref<1x32xf32, #tpu.memory_space<vmem>>, vector<1x32xf32>
    %19 = vector.broadcast %18 : vector<1x32xf32> to vector<8x32xf32>
    %20 = arith.addf %17, %19 : vector<8x32xf32>
    %c0_20 = arith.constant 0 : index
    %c0_21 = arith.constant 0 : index
    %c0_22 = arith.constant 0 : index
    %21 = vector.load %arg4[%c0_20, %c0_21, %c0_22] : memref<1x1x8xf32, #tpu.memory_space<vmem>>, vector<1x1x8xf32>
    %22 = vector.shape_cast %21 : vector<1x1x8xf32> to vector<1x8xf32>
    %cst_23 = arith.constant 5.000000e-01 : f32
    %23 = vector.broadcast %cst_23 : f32 to vector<1x8xf32>
    %24 = arith.cmpf ogt, %22, %23 : vector<1x8xf32>
    %25 = vector.shape_cast %24 : vector<1x8xi1> to vector<1x8xi1>
    %26 = vector.broadcast %25 : vector<1x8xi1> to vector<8x8xi1>
    %27 = tpu.iota {dimensions = array<i32: 0>} : vector<8x8xi32>
    %c8_i32 = arith.constant 8 : i32
    %28 = arith.muli %arg1, %c8_i32 : i32
    %29 = vector.broadcast %28 : i32 to vector<8x8xi32>
    %30 = arith.addi %27, %29 : vector<8x8xi32>
    %31 = tpu.iota {dimensions = array<i32: 1>} : vector<8x8xi32>
    %32 = arith.cmpi sge, %30, %31 : vector<8x8xi32>
    %33 = arith.andi %26, %32 : vector<8x8xi1>
    %34 = vector.extract_strided_slice %10 {offsets = [0, 0], sizes = [8, 16], strides = [1, 1]} : vector<8x32xf32> to vector<8x16xf32>
    %35 = vector.extract_strided_slice %15 {offsets = [0, 0], sizes = [8, 16], strides = [1, 1]} : vector<8x32xf32> to vector<8x16xf32>
    %cst_24 = arith.constant dense<0.000000e+00> : vector<8x8xf32>
    %36 = tpu.matmul %34, %35, %cst_24 {dimension_numbers = #tpu.dot_dimension_numbers<[1], [1], [0], [0], [0, 0, 1, 0], [], []>} : vector<8x16xf32>, vector<8x16xf32>, vector<8x8xf32> -> vector<8x8xf32>
    %cst_25 = arith.constant -1.000000e+20 : f32
    %37 = vector.broadcast %cst_25 : f32 to vector<8x8xf32>
    %38 = arith.select %33, %36, %37 : vector<8x8xi1>, vector<8x8xf32>
    %cst_26 = arith.constant dense<0xFF800000> : vector<8xf32>
    %39 = vector.multi_reduction <maximumf>, %38, %cst_26 [1] : vector<8x8xf32> to vector<8xf32>
    %40 = vector.shape_cast %39 : vector<8xf32> to vector<8x1xf32>
    %41 = vector.broadcast %40 : vector<8x1xf32> to vector<8x8xf32>
    %42 = arith.subf %38, %41 : vector<8x8xf32>
    %43 = math.exp %42 : vector<8x8xf32>
    %cst_27 = arith.constant dense<0.000000e+00> : vector<8xf32>
    %44 = vector.multi_reduction <add>, %43, %cst_27 [1] : vector<8x8xf32> to vector<8xf32>
    %45 = vector.shape_cast %44 : vector<8xf32> to vector<8x1xf32>
    %46 = vector.broadcast %45 : vector<8x1xf32> to vector<8x8xf32>
    %47 = arith.divf %43, %46 : vector<8x8xf32>
    %48 = vector.extract_strided_slice %20 {offsets = [0, 0], sizes = [8, 16], strides = [1, 1]} : vector<8x32xf32> to vector<8x16xf32>
    %cst_28 = arith.constant dense<0.000000e+00> : vector<8x16xf32>
    %49 = tpu.matmul %47, %48, %cst_28 {dimension_numbers = #tpu.dot_dimension_numbers<[1], [0], [0], [1], [0, 0, 1, 1], [], []>} : vector<8x8xf32>, vector<8x16xf32>, vector<8x16xf32> -> vector<8x16xf32>
    %50 = vector.extract_strided_slice %10 {offsets = [0, 16], sizes = [8, 16], strides = [1, 1]} : vector<8x32xf32> to vector<8x16xf32>
    %51 = vector.extract_strided_slice %15 {offsets = [0, 16], sizes = [8, 16], strides = [1, 1]} : vector<8x32xf32> to vector<8x16xf32>
    %cst_29 = arith.constant dense<0.000000e+00> : vector<8x8xf32>
    %52 = tpu.matmul %50, %51, %cst_29 {dimension_numbers = #tpu.dot_dimension_numbers<[1], [1], [0], [0], [0, 0, 1, 0], [], []>} : vector<8x16xf32>, vector<8x16xf32>, vector<8x8xf32> -> vector<8x8xf32>
    %cst_30 = arith.constant -1.000000e+20 : f32
    %53 = vector.broadcast %cst_30 : f32 to vector<8x8xf32>
    %54 = arith.select %33, %52, %53 : vector<8x8xi1>, vector<8x8xf32>
    %cst_31 = arith.constant dense<0xFF800000> : vector<8xf32>
    %55 = vector.multi_reduction <maximumf>, %54, %cst_31 [1] : vector<8x8xf32> to vector<8xf32>
    %56 = vector.shape_cast %55 : vector<8xf32> to vector<8x1xf32>
    %57 = vector.broadcast %56 : vector<8x1xf32> to vector<8x8xf32>
    %58 = arith.subf %54, %57 : vector<8x8xf32>
    %59 = math.exp %58 : vector<8x8xf32>
    %cst_32 = arith.constant dense<0.000000e+00> : vector<8xf32>
    %60 = vector.multi_reduction <add>, %59, %cst_32 [1] : vector<8x8xf32> to vector<8xf32>
    %61 = vector.shape_cast %60 : vector<8xf32> to vector<8x1xf32>
    %62 = vector.broadcast %61 : vector<8x1xf32> to vector<8x8xf32>
    %63 = arith.divf %59, %62 : vector<8x8xf32>
    %64 = vector.extract_strided_slice %20 {offsets = [0, 16], sizes = [8, 16], strides = [1, 1]} : vector<8x32xf32> to vector<8x16xf32>
    %cst_33 = arith.constant dense<0.000000e+00> : vector<8x16xf32>
    %65 = tpu.matmul %63, %64, %cst_33 {dimension_numbers = #tpu.dot_dimension_numbers<[1], [0], [0], [1], [0, 0, 1, 1], [], []>} : vector<8x8xf32>, vector<8x16xf32>, vector<8x16xf32> -> vector<8x16xf32>
    %66 = tpu.concatenate %49, %65 in 1 : vector<8x16xf32>, vector<8x16xf32> -> vector<8x32xf32>
    %c0_34 = arith.constant 0 : index
    %c0_35 = arith.constant 0 : index
    %67 = vector.load %arg11[%c0_34, %c0_35] : memref<32x32xf32, #tpu.memory_space<vmem>>, vector<32x32xf32>
    %cst_36 = arith.constant dense<0.000000e+00> : vector<8x32xf32>
    %68 = tpu.matmul %66, %67, %cst_36 {dimension_numbers = #tpu.dot_dimension_numbers<[1], [0], [0], [1], [0, 0, 1, 1], [], []>} : vector<8x32xf32>, vector<32x32xf32>, vector<8x32xf32> -> vector<8x32xf32>
    %c0_37 = arith.constant 0 : index
    %c0_38 = arith.constant 0 : index
    %69 = vector.load %arg12[%c0_37, %c0_38] : memref<1x32xf32, #tpu.memory_space<vmem>>, vector<1x32xf32>
    %70 = vector.broadcast %69 : vector<1x32xf32> to vector<8x32xf32>
    %71 = arith.addf %68, %70 : vector<8x32xf32>
    %72 = arith.addf %1, %71 : vector<8x32xf32>
    %cst_39 = arith.constant dense<0.000000e+00> : vector<8xf32>
    %73 = vector.multi_reduction <add>, %72, %cst_39 [1] : vector<8x32xf32> to vector<8xf32>
    %74 = vector.shape_cast %73 : vector<8xf32> to vector<8x1xf32>
    %cst_40 = arith.constant 3.200000e+01 : f32
    %75 = vector.broadcast %cst_40 : f32 to vector<8x1xf32>
    %76 = arith.divf %74, %75 : vector<8x1xf32>
    %77 = vector.broadcast %76 : vector<8x1xf32> to vector<8x32xf32>
    %78 = arith.subf %72, %77 : vector<8x32xf32>
    %79 = arith.mulf %78, %78 : vector<8x32xf32>
    %cst_41 = arith.constant dense<0.000000e+00> : vector<8xf32>
    %80 = vector.multi_reduction <add>, %79, %cst_41 [1] : vector<8x32xf32> to vector<8xf32>
    %81 = vector.shape_cast %80 : vector<8xf32> to vector<8x1xf32>
    %cst_42 = arith.constant 3.200000e+01 : f32
    %82 = vector.broadcast %cst_42 : f32 to vector<8x1xf32>
    %83 = arith.divf %81, %82 : vector<8x1xf32>
    %cst_43 = arith.constant 9.99999974E-6 : f32
    %84 = vector.broadcast %cst_43 : f32 to vector<8x1xf32>
    %85 = arith.addf %83, %84 : vector<8x1xf32>
    %86 = math.rsqrt %85 : vector<8x1xf32>
    %87 = vector.broadcast %86 : vector<8x1xf32> to vector<8x32xf32>
    %88 = arith.mulf %78, %87 : vector<8x32xf32>
    %c0_44 = arith.constant 0 : index
    %c0_45 = arith.constant 0 : index
    %89 = vector.load %arg13[%c0_44, %c0_45] : memref<1x32xf32, #tpu.memory_space<vmem>>, vector<1x32xf32>
    %90 = vector.broadcast %89 : vector<1x32xf32> to vector<8x32xf32>
    %91 = arith.mulf %88, %90 : vector<8x32xf32>
    %c0_46 = arith.constant 0 : index
    %c0_47 = arith.constant 0 : index
    %92 = vector.load %arg14[%c0_46, %c0_47] : memref<1x32xf32, #tpu.memory_space<vmem>>, vector<1x32xf32>
    %93 = vector.broadcast %92 : vector<1x32xf32> to vector<8x32xf32>
    %94 = arith.addf %91, %93 : vector<8x32xf32>
    %c0_48 = arith.constant 0 : index
    %c0_49 = arith.constant 0 : index
    %c0_50 = arith.constant 0 : index
    %95 = vector.load %arg15[%c0_48, %c0_49, %c0_50] : memref<1x8x32xf32, #tpu.memory_space<vmem>>, vector<1x8x32xf32>
    %96 = vector.shape_cast %95 : vector<1x8x32xf32> to vector<8x32xf32>
    %97 = vector.shape_cast %94 : vector<8x32xf32> to vector<1x8x32xf32>
    tpu.vector_store %arg15[%c0_48, %c0_49, %c0_50], %97 {strides = array<i32>} : memref<1x8x32xf32, #tpu.memory_space<vmem>>, vector<1x8x32xf32>,
    return
  }
  func.func @transform_0(%arg0: i32, %arg1: i32) -> (i32, i32, i32) {
    %c0_i32 = arith.constant 0 : i32
    %c0_i32_0 = arith.constant 0 : i32
    return %arg0, %arg1, %c0_i32 : i32, i32, i32
  }
  func.func @transform_1(%arg0: i32, %arg1: i32) -> (i32, i32, i32) {
    %c0_i32 = arith.constant 0 : i32
    %c0_i32_0 = arith.constant 0 : i32
    %c0_i32_1 = arith.constant 0 : i32
    return %arg0, %c0_i32, %c0_i32_0 : i32, i32, i32
  }
  func.func @transform_2(%arg0: i32, %arg1: i32) -> (i32, i32, i32) {
    %c0_i32 = arith.constant 0 : i32
    %c0_i32_0 = arith.constant 0 : i32
    %c0_i32_1 = arith.constant 0 : i32
    return %arg0, %c0_i32, %c0_i32_0 : i32, i32, i32
  }
  func.func @transform_3(%arg0: i32, %arg1: i32) -> (i32, i32) {
    %c0_i32 = arith.constant 0 : i32
    %c0_i32_0 = arith.constant 0 : i32
    %c0_i32_1 = arith.constant 0 : i32
    return %c0_i32, %c0_i32_0 : i32, i32
  }
  func.func @transform_4(%arg0: i32, %arg1: i32) -> (i32, i32) {
    %c0_i32 = arith.constant 0 : i32
    %c0_i32_0 = arith.constant 0 : i32
    %c0_i32_1 = arith.constant 0 : i32
    return %c0_i32, %c0_i32_0 : i32, i32
  }
  func.func @transform_5(%arg0: i32, %arg1: i32) -> (i32, i32) {
    %c0_i32 = arith.constant 0 : i32
    %c0_i32_0 = arith.constant 0 : i32
    %c0_i32_1 = arith.constant 0 : i32
    return %c0_i32, %c0_i32_0 : i32, i32
  }
  func.func @transform_6(%arg0: i32, %arg1: i32) -> (i32, i32) {
    %c0_i32 = arith.constant 0 : i32
    %c0_i32_0 = arith.constant 0 : i32
    %c0_i32_1 = arith.constant 0 : i32
    return %c0_i32, %c0_i32_0 : i32, i32
  }
  func.func @transform_7(%arg0: i32, %arg1: i32) -> (i32, i32) {
    %c0_i32 = arith.constant 0 : i32
    %c0_i32_0 = arith.constant 0 : i32
    %c0_i32_1 = arith.constant 0 : i32
    return %c0_i32, %c0_i32_0 : i32, i32
  }
  func.func @transform_8(%arg0: i32, %arg1: i32) -> (i32, i32) {
    %c0_i32 = arith.constant 0 : i32
    %c0_i32_0 = arith.constant 0 : i32
    %c0_i32_1 = arith.constant 0 : i32
    return %c0_i32, %c0_i32_0 : i32, i32
  }
  func.func @transform_9(%arg0: i32, %arg1: i32) -> (i32, i32) {
    %c0_i32 = arith.constant 0 : i32
    %c0_i32_0 = arith.constant 0 : i32
    %c0_i32_1 = arith.constant 0 : i32
    return %c0_i32, %c0_i32_0 : i32, i32
  }
  func.func @transform_10(%arg0: i32, %arg1: i32) -> (i32, i32) {
    %c0_i32 = arith.constant 0 : i32
    %c0_i32_0 = arith.constant 0 : i32
    %c0_i32_1 = arith.constant 0 : i32
    return %c0_i32, %c0_i32_0 : i32, i32
  }
  func.func @transform_11(%arg0: i32, %arg1: i32) -> (i32, i32) {
    %c0_i32 = arith.constant 0 : i32
    %c0_i32_0 = arith.constant 0 : i32
    %c0_i32_1 = arith.constant 0 : i32
    return %c0_i32, %c0_i32_0 : i32, i32
  }
  func.func @transform_12(%arg0: i32, %arg1: i32) -> (i32, i32) {
    %c0_i32 = arith.constant 0 : i32
    %c0_i32_0 = arith.constant 0 : i32
    %c0_i32_1 = arith.constant 0 : i32
    return %c0_i32, %c0_i32_0 : i32, i32
  }
  func.func @transform_13(%arg0: i32, %arg1: i32) -> (i32, i32, i32) {
    %c0_i32 = arith.constant 0 : i32
    %c0_i32_0 = arith.constant 0 : i32
    return %arg0, %arg1, %c0_i32 : i32, i32, i32
  }
}

module attributes {stable_mosaic.version = 11 : i64} {
  func.func @_mha_block_kernel(%arg0: i32, %arg1: i32, %arg2: memref<1x8x32xf32, #tpu.memory_space<vmem>>, %arg3: memref<1x12x32xf32, #tpu.memory_space<vmem>>, %arg4: memref<1x1x12xf32, #tpu.memory_space<vmem>>, %arg5: memref<32x32xf32, #tpu.memory_space<vmem>>, %arg6: memref<1x32xf32, #tpu.memory_space<vmem>>, %arg7: memref<32x32xf32, #tpu.memory_space<vmem>>, %arg8: memref<1x32xf32, #tpu.memory_space<vmem>>, %arg9: memref<32x32xf32, #tpu.memory_space<vmem>>, %arg10: memref<1x32xf32, #tpu.memory_space<vmem>>, %arg11: memref<32x32xf32, #tpu.memory_space<vmem>>, %arg12: memref<1x32xf32, #tpu.memory_space<vmem>>, %arg13: memref<1x32xf32, #tpu.memory_space<vmem>>, %arg14: memref<1x32xf32, #tpu.memory_space<vmem>>, %arg15: memref<1x8x32xf32, #tpu.memory_space<vmem>>) attributes {dimension_semantics = [#tpu.dimension_semantics<parallel>, #tpu.dimension_semantics<parallel>], iteration_bounds = array<i64: 2, 1>, scalar_prefetch = 0 : i64, scratch_operands = 0 : i64, tpu.core_type = #tpu.core_type<tc>, window_params = [{transform_indices = @transform_0, window_bounds = array<i64: 1, 8, 32>}, {transform_indices = @transform_1, window_bounds = array<i64: 1, 12, 32>}, {transform_indices = @transform_2, window_bounds = array<i64: 1, 1, 12>}, {pipeline_mode = #tpu.pipeline_mode<synchronous>, transform_indices = @transform_3, window_bounds = array<i64: 32, 32>}, {pipeline_mode = #tpu.pipeline_mode<synchronous>, transform_indices = @transform_4, window_bounds = array<i64: 1, 32>}, {pipeline_mode = #tpu.pipeline_mode<synchronous>, transform_indices = @transform_5, window_bounds = array<i64: 32, 32>}, {pipeline_mode = #tpu.pipeline_mode<synchronous>, transform_indices = @transform_6, window_bounds = array<i64: 1, 32>}, {pipeline_mode = #tpu.pipeline_mode<synchronous>, transform_indices = @transform_7, window_bounds = array<i64: 32, 32>}, {pipeline_mode = #tpu.pipeline_mode<synchronous>, transform_indices = @transform_8, window_bounds = array<i64: 1, 32>}, {pipeline_mode = #tpu.pipeline_mode<synchronous>, transform_indices = @transform_9, window_bounds = array<i64: 32, 32>}, {pipeline_mode = #tpu.pipeline_mode<synchronous>, transform_indices = @transform_10, window_bounds = array<i64: 1, 32>}, {pipeline_mode = #tpu.pipeline_mode<synchronous>, transform_indices = @transform_11, window_bounds = array<i64: 1, 32>}, {pipeline_mode = #tpu.pipeline_mode<synchronous>, transform_indices = @transform_12, window_bounds = array<i64: 1, 32>}, {transform_indices = @transform_13, window_bounds = array<i64: 1, 8, 32>}]} {
    %c0 = arith.constant 0 : index
    %c0_0 = arith.constant 0 : index
    %c0_1 = arith.constant 0 : index
    %0 = vector.load %arg2[%c0, %c0_0, %c0_1] : memref<1x8x32xf32, #tpu.memory_space<vmem>>, vector<1x8x32xf32>
    %1 = vector.shape_cast %0 : vector<1x8x32xf32> to vector<8x32xf32>
    %c0_2 = arith.constant 0 : index
    %c0_3 = arith.constant 0 : index
    %c0_4 = arith.constant 0 : index
    %2 = vector.load %arg3[%c0_2, %c0_3, %c0_4] : memref<1x12x32xf32, #tpu.memory_space<vmem>>, vector<1x12x32xf32>
    %3 = vector.shape_cast %2 : vector<1x12x32xf32> to vector<12x32xf32>
    %c0_5 = arith.constant 0 : index
    %c0_6 = arith.constant 0 : index
    %4 = vector.load %arg5[%c0_5, %c0_6] : memref<32x32xf32, #tpu.memory_space<vmem>>, vector<32x32xf32>
    %cst = arith.constant dense<0.000000e+00> : vector<8x32xf32>
    %5 = tpu.matmul %1, %4, %cst {dimension_numbers = #tpu.dot_dimension_numbers<[1], [0], [0], [1], [0, 0, 1, 1], [], []>} : vector<8x32xf32>, vector<32x32xf32>, vector<8x32xf32> -> vector<8x32xf32>
    %c0_7 = arith.constant 0 : index
    %c0_8 = arith.constant 0 : index
    %6 = vector.load %arg6[%c0_7, %c0_8] : memref<1x32xf32, #tpu.memory_space<vmem>>, vector<1x32xf32>
    %7 = vector.broadcast %6 : vector<1x32xf32> to vector<8x32xf32>
    %8 = arith.addf %5, %7 : vector<8x32xf32>
    %cst_9 = arith.constant 2.500000e-01 : f32
    %9 = vector.broadcast %cst_9 : f32 to vector<8x32xf32>
    %10 = arith.mulf %8, %9 : vector<8x32xf32>
    %c0_10 = arith.constant 0 : index
    %c0_11 = arith.constant 0 : index
    %11 = vector.load %arg7[%c0_10, %c0_11] : memref<32x32xf32, #tpu.memory_space<vmem>>, vector<32x32xf32>
    %cst_12 = arith.constant dense<0.000000e+00> : vector<12x32xf32>
    %12 = tpu.matmul %3, %11, %cst_12 {dimension_numbers = #tpu.dot_dimension_numbers<[1], [0], [0], [1], [0, 0, 1, 1], [], []>} : vector<12x32xf32>, vector<32x32xf32>, vector<12x32xf32> -> vector<12x32xf32>
    %c0_13 = arith.constant 0 : index
    %c0_14 = arith.constant 0 : index
    %13 = vector.load %arg8[%c0_13, %c0_14] : memref<1x32xf32, #tpu.memory_space<vmem>>, vector<1x32xf32>
    %14 = vector.broadcast %13 : vector<1x32xf32> to vector<12x32xf32>
    %15 = arith.addf %12, %14 : vector<12x32xf32>
    %c0_15 = arith.constant 0 : index
    %c0_16 = arith.constant 0 : index
    %16 = vector.load %arg9[%c0_15, %c0_16] : memref<32x32xf32, #tpu.memory_space<vmem>>, vector<32x32xf32>
    %cst_17 = arith.constant dense<0.000000e+00> : vector<12x32xf32>
    %17 = tpu.matmul %3, %16, %cst_17 {dimension_numbers = #tpu.dot_dimension_numbers<[1], [0], [0], [1], [0, 0, 1, 1], [], []>} : vector<12x32xf32>, vector<32x32xf32>, vector<12x32xf32> -> vector<12x32xf32>
    %c0_18 = arith.constant 0 : index
    %c0_19 = arith.constant 0 : index
    %18 = vector.load %arg10[%c0_18, %c0_19] : memref<1x32xf32, #tpu.memory_space<vmem>>, vector<1x32xf32>
    %19 = vector.broadcast %18 : vector<1x32xf32> to vector<12x32xf32>
    %20 = arith.addf %17, %19 : vector<12x32xf32>
    %c0_20 = arith.constant 0 : index
    %c0_21 = arith.constant 0 : index
    %c0_22 = arith.constant 0 : index
    %21 = vector.load %arg4[%c0_20, %c0_21, %c0_22] : memref<1x1x12xf32, #tpu.memory_space<vmem>>, vector<1x1x12xf32>
    %22 = vector.shape_cast %21 : vector<1x1x12xf32> to vector<1x12xf32>
    %cst_23 = arith.constant 5.000000e-01 : f32
    %23 = vector.broadcast %cst_23 : f32 to vector<1x12xf32>
    %24 = arith.cmpf ogt, %22, %23 : vector<1x12xf32>
    %25 = vector.shape_cast %24 : vector<1x12xi1> to vector<1x12xi1>
    %26 = vector.broadcast %25 : vector<1x12xi1> to vector<8x12xi1>
    %27 = vector.extract_strided_slice %10 {offsets = [0, 0], sizes = [8, 16], strides = [1, 1]} : vector<8x32xf32> to vector<8x16xf32>
    %28 = vector.extract_strided_slice %15 {offsets = [0, 0], sizes = [12, 16], strides = [1, 1]} : vector<12x32xf32> to vector<12x16xf32>
    %cst_24 = arith.constant dense<0.000000e+00> : vector<8x12xf32>
    %29 = tpu.matmul %27, %28, %cst_24 {dimension_numbers = #tpu.dot_dimension_numbers<[1], [1], [0], [0], [0, 0, 1, 0], [], []>} : vector<8x16xf32>, vector<12x16xf32>, vector<8x12xf32> -> vector<8x12xf32>
    %cst_25 = arith.constant -1.000000e+20 : f32
    %30 = vector.broadcast %cst_25 : f32 to vector<8x12xf32>
    %31 = arith.select %26, %29, %30 : vector<8x12xi1>, vector<8x12xf32>
    %cst_26 = arith.constant dense<0xFF800000> : vector<8xf32>
    %32 = vector.multi_reduction <maximumf>, %31, %cst_26 [1] : vector<8x12xf32> to vector<8xf32>
    %33 = vector.shape_cast %32 : vector<8xf32> to vector<8x1xf32>
    %34 = vector.broadcast %33 : vector<8x1xf32> to vector<8x12xf32>
    %35 = arith.subf %31, %34 : vector<8x12xf32>
    %36 = math.exp %35 : vector<8x12xf32>
    %cst_27 = arith.constant dense<0.000000e+00> : vector<8xf32>
    %37 = vector.multi_reduction <add>, %36, %cst_27 [1] : vector<8x12xf32> to vector<8xf32>
    %38 = vector.shape_cast %37 : vector<8xf32> to vector<8x1xf32>
    %39 = vector.broadcast %38 : vector<8x1xf32> to vector<8x12xf32>
    %40 = arith.divf %36, %39 : vector<8x12xf32>
    %41 = vector.extract_strided_slice %20 {offsets = [0, 0], sizes = [12, 16], strides = [1, 1]} : vector<12x32xf32> to vector<12x16xf32>
    %cst_28 = arith.constant dense<0.000000e+00> : vector<8x16xf32>
    %42 = tpu.matmul %40, %41, %cst_28 {dimension_numbers = #tpu.dot_dimension_numbers<[1], [0], [0], [1], [0, 0, 1, 1], [], []>} : vector<8x12xf32>, vector<12x16xf32>, vector<8x16xf32> -> vector<8x16xf32>
    %43 = vector.extract_strided_slice %10 {offsets = [0, 16], sizes = [8, 16], strides = [1, 1]} : vector<8x32xf32> to vector<8x16xf32>
    %44 = vector.extract_strided_slice %15 {offsets = [0, 16], sizes = [12, 16], strides = [1, 1]} : vector<12x32xf32> to vector<12x16xf32>
    %cst_29 = arith.constant dense<0.000000e+00> : vector<8x12xf32>
    %45 = tpu.matmul %43, %44, %cst_29 {dimension_numbers = #tpu.dot_dimension_numbers<[1], [1], [0], [0], [0, 0, 1, 0], [], []>} : vector<8x16xf32>, vector<12x16xf32>, vector<8x12xf32> -> vector<8x12xf32>
    %cst_30 = arith.constant -1.000000e+20 : f32
    %46 = vector.broadcast %cst_30 : f32 to vector<8x12xf32>
    %47 = arith.select %26, %45, %46 : vector<8x12xi1>, vector<8x12xf32>
    %cst_31 = arith.constant dense<0xFF800000> : vector<8xf32>
    %48 = vector.multi_reduction <maximumf>, %47, %cst_31 [1] : vector<8x12xf32> to vector<8xf32>
    %49 = vector.shape_cast %48 : vector<8xf32> to vector<8x1xf32>
    %50 = vector.broadcast %49 : vector<8x1xf32> to vector<8x12xf32>
    %51 = arith.subf %47, %50 : vector<8x12xf32>
    %52 = math.exp %51 : vector<8x12xf32>
    %cst_32 = arith.constant dense<0.000000e+00> : vector<8xf32>
    %53 = vector.multi_reduction <add>, %52, %cst_32 [1] : vector<8x12xf32> to vector<8xf32>
    %54 = vector.shape_cast %53 : vector<8xf32> to vector<8x1xf32>
    %55 = vector.broadcast %54 : vector<8x1xf32> to vector<8x12xf32>
    %56 = arith.divf %52, %55 : vector<8x12xf32>
    %57 = vector.extract_strided_slice %20 {offsets = [0, 16], sizes = [12, 16], strides = [1, 1]} : vector<12x32xf32> to vector<12x16xf32>
    %cst_33 = arith.constant dense<0.000000e+00> : vector<8x16xf32>
    %58 = tpu.matmul %56, %57, %cst_33 {dimension_numbers = #tpu.dot_dimension_numbers<[1], [0], [0], [1], [0, 0, 1, 1], [], []>} : vector<8x12xf32>, vector<12x16xf32>, vector<8x16xf32> -> vector<8x16xf32>
    %59 = tpu.concatenate %42, %58 in 1 : vector<8x16xf32>, vector<8x16xf32> -> vector<8x32xf32>
    %c0_34 = arith.constant 0 : index
    %c0_35 = arith.constant 0 : index
    %60 = vector.load %arg11[%c0_34, %c0_35] : memref<32x32xf32, #tpu.memory_space<vmem>>, vector<32x32xf32>
    %cst_36 = arith.constant dense<0.000000e+00> : vector<8x32xf32>
    %61 = tpu.matmul %59, %60, %cst_36 {dimension_numbers = #tpu.dot_dimension_numbers<[1], [0], [0], [1], [0, 0, 1, 1], [], []>} : vector<8x32xf32>, vector<32x32xf32>, vector<8x32xf32> -> vector<8x32xf32>
    %c0_37 = arith.constant 0 : index
    %c0_38 = arith.constant 0 : index
    %62 = vector.load %arg12[%c0_37, %c0_38] : memref<1x32xf32, #tpu.memory_space<vmem>>, vector<1x32xf32>
    %63 = vector.broadcast %62 : vector<1x32xf32> to vector<8x32xf32>
    %64 = arith.addf %61, %63 : vector<8x32xf32>
    %65 = arith.addf %1, %64 : vector<8x32xf32>
    %cst_39 = arith.constant dense<0.000000e+00> : vector<8xf32>
    %66 = vector.multi_reduction <add>, %65, %cst_39 [1] : vector<8x32xf32> to vector<8xf32>
    %67 = vector.shape_cast %66 : vector<8xf32> to vector<8x1xf32>
    %cst_40 = arith.constant 3.200000e+01 : f32
    %68 = vector.broadcast %cst_40 : f32 to vector<8x1xf32>
    %69 = arith.divf %67, %68 : vector<8x1xf32>
    %70 = vector.broadcast %69 : vector<8x1xf32> to vector<8x32xf32>
    %71 = arith.subf %65, %70 : vector<8x32xf32>
    %72 = arith.mulf %71, %71 : vector<8x32xf32>
    %cst_41 = arith.constant dense<0.000000e+00> : vector<8xf32>
    %73 = vector.multi_reduction <add>, %72, %cst_41 [1] : vector<8x32xf32> to vector<8xf32>
    %74 = vector.shape_cast %73 : vector<8xf32> to vector<8x1xf32>
    %cst_42 = arith.constant 3.200000e+01 : f32
    %75 = vector.broadcast %cst_42 : f32 to vector<8x1xf32>
    %76 = arith.divf %74, %75 : vector<8x1xf32>
    %cst_43 = arith.constant 9.99999974E-6 : f32
    %77 = vector.broadcast %cst_43 : f32 to vector<8x1xf32>
    %78 = arith.addf %76, %77 : vector<8x1xf32>
    %79 = math.rsqrt %78 : vector<8x1xf32>
    %80 = vector.broadcast %79 : vector<8x1xf32> to vector<8x32xf32>
    %81 = arith.mulf %71, %80 : vector<8x32xf32>
    %c0_44 = arith.constant 0 : index
    %c0_45 = arith.constant 0 : index
    %82 = vector.load %arg13[%c0_44, %c0_45] : memref<1x32xf32, #tpu.memory_space<vmem>>, vector<1x32xf32>
    %83 = vector.broadcast %82 : vector<1x32xf32> to vector<8x32xf32>
    %84 = arith.mulf %81, %83 : vector<8x32xf32>
    %c0_46 = arith.constant 0 : index
    %c0_47 = arith.constant 0 : index
    %85 = vector.load %arg14[%c0_46, %c0_47] : memref<1x32xf32, #tpu.memory_space<vmem>>, vector<1x32xf32>
    %86 = vector.broadcast %85 : vector<1x32xf32> to vector<8x32xf32>
    %87 = arith.addf %84, %86 : vector<8x32xf32>
    %c0_48 = arith.constant 0 : index
    %c0_49 = arith.constant 0 : index
    %c0_50 = arith.constant 0 : index
    %88 = vector.load %arg15[%c0_48, %c0_49, %c0_50] : memref<1x8x32xf32, #tpu.memory_space<vmem>>, vector<1x8x32xf32>
    %89 = vector.shape_cast %88 : vector<1x8x32xf32> to vector<8x32xf32>
    %90 = vector.shape_cast %87 : vector<8x32xf32> to vector<1x8x32xf32>
    tpu.vector_store %arg15[%c0_48, %c0_49, %c0_50], %90 {strides = array<i32>} : memref<1x8x32xf32, #tpu.memory_space<vmem>>, vector<1x8x32xf32>,
    return
  }
  func.func @transform_0(%arg0: i32, %arg1: i32) -> (i32, i32, i32) {
    %c0_i32 = arith.constant 0 : i32
    %c0_i32_0 = arith.constant 0 : i32
    return %arg0, %arg1, %c0_i32 : i32, i32, i32
  }
  func.func @transform_1(%arg0: i32, %arg1: i32) -> (i32, i32, i32) {
    %c0_i32 = arith.constant 0 : i32
    %c0_i32_0 = arith.constant 0 : i32
    %c0_i32_1 = arith.constant 0 : i32
    return %arg0, %c0_i32, %c0_i32_0 : i32, i32, i32
  }
  func.func @transform_2(%arg0: i32, %arg1: i32) -> (i32, i32, i32) {
    %c0_i32 = arith.constant 0 : i32
    %c0_i32_0 = arith.constant 0 : i32
    %c0_i32_1 = arith.constant 0 : i32
    return %arg0, %c0_i32, %c0_i32_0 : i32, i32, i32
  }
  func.func @transform_3(%arg0: i32, %arg1: i32) -> (i32, i32) {
    %c0_i32 = arith.constant 0 : i32
    %c0_i32_0 = arith.constant 0 : i32
    %c0_i32_1 = arith.constant 0 : i32
    return %c0_i32, %c0_i32_0 : i32, i32
  }
  func.func @transform_4(%arg0: i32, %arg1: i32) -> (i32, i32) {
    %c0_i32 = arith.constant 0 : i32
    %c0_i32_0 = arith.constant 0 : i32
    %c0_i32_1 = arith.constant 0 : i32
    return %c0_i32, %c0_i32_0 : i32, i32
  }
  func.func @transform_5(%arg0: i32, %arg1: i32) -> (i32, i32) {
    %c0_i32 = arith.constant 0 : i32
    %c0_i32_0 = arith.constant 0 : i32
    %c0_i32_1 = arith.constant 0 : i32
    return %c0_i32, %c0_i32_0 : i32, i32
  }
  func.func @transform_6(%arg0: i32, %arg1: i32) -> (i32, i32) {
    %c0_i32 = arith.constant 0 : i32
    %c0_i32_0 = arith.constant 0 : i32
    %c0_i32_1 = arith.constant 0 : i32
    return %c0_i32, %c0_i32_0 : i32, i32
  }
  func.func @transform_7(%arg0: i32, %arg1: i32) -> (i32, i32) {
    %c0_i32 = arith.constant 0 : i32
    %c0_i32_0 = arith.constant 0 : i32
    %c0_i32_1 = arith.constant 0 : i32
    return %c0_i32, %c0_i32_0 : i32, i32
  }
  func.func @transform_8(%arg0: i32, %arg1: i32) -> (i32, i32) {
    %c0_i32 = arith.constant 0 : i32
    %c0_i32_0 = arith.constant 0 : i32
    %c0_i32_1 = arith.constant 0 : i32
    return %c0_i32, %c0_i32_0 : i32, i32
  }
  func.func @transform_9(%arg0: i32, %arg1: i32) -> (i32, i32) {
    %c0_i32 = arith.constant 0 : i32
    %c0_i32_0 = arith.constant 0 : i32
    %c0_i32_1 = arith.constant 0 : i32
    return %c0_i32, %c0_i32_0 : i32, i32
  }
  func.func @transform_10(%arg0: i32, %arg1: i32) -> (i32, i32) {
    %c0_i32 = arith.constant 0 : i32
    %c0_i32_0 = arith.constant 0 : i32
    %c0_i32_1 = arith.constant 0 : i32
    return %c0_i32, %c0_i32_0 : i32, i32
  }
  func.func @transform_11(%arg0: i32, %arg1: i32) -> (i32, i32) {
    %c0_i32 = arith.constant 0 : i32
    %c0_i32_0 = arith.constant 0 : i32
    %c0_i32_1 = arith.constant 0 : i32
    return %c0_i32, %c0_i32_0 : i32, i32
  }
  func.func @transform_12(%arg0: i32, %arg1: i32) -> (i32, i32) {
    %c0_i32 = arith.constant 0 : i32
    %c0_i32_0 = arith.constant 0 : i32
    %c0_i32_1 = arith.constant 0 : i32
    return %c0_i32, %c0_i32_0 : i32, i32
  }
  func.func @transform_13(%arg0: i32, %arg1: i32) -> (i32, i32, i32) {
    %c0_i32 = arith.constant 0 : i32
    %c0_i32_0 = arith.constant 0 : i32
    return %arg0, %arg1, %c0_i32 : i32, i32, i32
  }
}

module attributes {stable_mosaic.version = 11 : i64} {
  func.func @_ffn_block_kernel(%arg0: i32, %arg1: memref<16x32xf32, #tpu.memory_space<vmem>>, %arg2: memref<32x64xf32, #tpu.memory_space<vmem>>, %arg3: memref<1x64xf32, #tpu.memory_space<vmem>>, %arg4: memref<64x32xf32, #tpu.memory_space<vmem>>, %arg5: memref<1x32xf32, #tpu.memory_space<vmem>>, %arg6: memref<1x32xf32, #tpu.memory_space<vmem>>, %arg7: memref<1x32xf32, #tpu.memory_space<vmem>>, %arg8: memref<16x32xf32, #tpu.memory_space<vmem>>) attributes {dimension_semantics = [#tpu.dimension_semantics<parallel>], iteration_bounds = array<i64: 1>, scalar_prefetch = 0 : i64, scratch_operands = 0 : i64, tpu.core_type = #tpu.core_type<tc>, window_params = [{transform_indices = @transform_0, window_bounds = array<i64: 16, 32>}, {pipeline_mode = #tpu.pipeline_mode<synchronous>, transform_indices = @transform_1, window_bounds = array<i64: 32, 64>}, {pipeline_mode = #tpu.pipeline_mode<synchronous>, transform_indices = @transform_2, window_bounds = array<i64: 1, 64>}, {pipeline_mode = #tpu.pipeline_mode<synchronous>, transform_indices = @transform_3, window_bounds = array<i64: 64, 32>}, {pipeline_mode = #tpu.pipeline_mode<synchronous>, transform_indices = @transform_4, window_bounds = array<i64: 1, 32>}, {pipeline_mode = #tpu.pipeline_mode<synchronous>, transform_indices = @transform_5, window_bounds = array<i64: 1, 32>}, {pipeline_mode = #tpu.pipeline_mode<synchronous>, transform_indices = @transform_6, window_bounds = array<i64: 1, 32>}, {transform_indices = @transform_7, window_bounds = array<i64: 16, 32>}]} {
    %c0 = arith.constant 0 : index
    %c0_0 = arith.constant 0 : index
    %0 = vector.load %arg1[%c0, %c0_0] : memref<16x32xf32, #tpu.memory_space<vmem>>, vector<16x32xf32>
    %c0_1 = arith.constant 0 : index
    %c0_2 = arith.constant 0 : index
    %1 = vector.load %arg2[%c0_1, %c0_2] : memref<32x64xf32, #tpu.memory_space<vmem>>, vector<32x64xf32>
    %cst = arith.constant dense<0.000000e+00> : vector<16x64xf32>
    %2 = tpu.matmul %0, %1, %cst {dimension_numbers = #tpu.dot_dimension_numbers<[1], [0], [0], [1], [0, 0, 1, 1], [], []>} : vector<16x32xf32>, vector<32x64xf32>, vector<16x64xf32> -> vector<16x64xf32>
    %c0_3 = arith.constant 0 : index
    %c0_4 = arith.constant 0 : index
    %3 = vector.load %arg3[%c0_3, %c0_4] : memref<1x64xf32, #tpu.memory_space<vmem>>, vector<1x64xf32>
    %4 = vector.broadcast %3 : vector<1x64xf32> to vector<16x64xf32>
    %5 = arith.addf %2, %4 : vector<16x64xf32>
    %cst_5 = arith.constant 0.000000e+00 : f32
    %6 = vector.broadcast %cst_5 : f32 to vector<16x64xf32>
    %7 = arith.maximumf %5, %6 : vector<16x64xf32>
    %c0_6 = arith.constant 0 : index
    %c0_7 = arith.constant 0 : index
    %8 = vector.load %arg4[%c0_6, %c0_7] : memref<64x32xf32, #tpu.memory_space<vmem>>, vector<64x32xf32>
    %cst_8 = arith.constant dense<0.000000e+00> : vector<16x32xf32>
    %9 = tpu.matmul %7, %8, %cst_8 {dimension_numbers = #tpu.dot_dimension_numbers<[1], [0], [0], [1], [0, 0, 1, 1], [], []>} : vector<16x64xf32>, vector<64x32xf32>, vector<16x32xf32> -> vector<16x32xf32>
    %c0_9 = arith.constant 0 : index
    %c0_10 = arith.constant 0 : index
    %10 = vector.load %arg5[%c0_9, %c0_10] : memref<1x32xf32, #tpu.memory_space<vmem>>, vector<1x32xf32>
    %11 = vector.broadcast %10 : vector<1x32xf32> to vector<16x32xf32>
    %12 = arith.addf %9, %11 : vector<16x32xf32>
    %13 = arith.addf %0, %12 : vector<16x32xf32>
    %cst_11 = arith.constant dense<0.000000e+00> : vector<16xf32>
    %14 = vector.multi_reduction <add>, %13, %cst_11 [1] : vector<16x32xf32> to vector<16xf32>
    %15 = vector.shape_cast %14 : vector<16xf32> to vector<16x1xf32>
    %cst_12 = arith.constant 3.200000e+01 : f32
    %16 = vector.broadcast %cst_12 : f32 to vector<16x1xf32>
    %17 = arith.divf %15, %16 : vector<16x1xf32>
    %18 = vector.broadcast %17 : vector<16x1xf32> to vector<16x32xf32>
    %19 = arith.subf %13, %18 : vector<16x32xf32>
    %20 = arith.mulf %19, %19 : vector<16x32xf32>
    %cst_13 = arith.constant dense<0.000000e+00> : vector<16xf32>
    %21 = vector.multi_reduction <add>, %20, %cst_13 [1] : vector<16x32xf32> to vector<16xf32>
    %22 = vector.shape_cast %21 : vector<16xf32> to vector<16x1xf32>
    %cst_14 = arith.constant 3.200000e+01 : f32
    %23 = vector.broadcast %cst_14 : f32 to vector<16x1xf32>
    %24 = arith.divf %22, %23 : vector<16x1xf32>
    %cst_15 = arith.constant 9.99999974E-6 : f32
    %25 = vector.broadcast %cst_15 : f32 to vector<16x1xf32>
    %26 = arith.addf %24, %25 : vector<16x1xf32>
    %27 = math.rsqrt %26 : vector<16x1xf32>
    %28 = vector.broadcast %27 : vector<16x1xf32> to vector<16x32xf32>
    %29 = arith.mulf %19, %28 : vector<16x32xf32>
    %c0_16 = arith.constant 0 : index
    %c0_17 = arith.constant 0 : index
    %30 = vector.load %arg6[%c0_16, %c0_17] : memref<1x32xf32, #tpu.memory_space<vmem>>, vector<1x32xf32>
    %31 = vector.broadcast %30 : vector<1x32xf32> to vector<16x32xf32>
    %32 = arith.mulf %29, %31 : vector<16x32xf32>
    %c0_18 = arith.constant 0 : index
    %c0_19 = arith.constant 0 : index
    %33 = vector.load %arg7[%c0_18, %c0_19] : memref<1x32xf32, #tpu.memory_space<vmem>>, vector<1x32xf32>
    %34 = vector.broadcast %33 : vector<1x32xf32> to vector<16x32xf32>
    %35 = arith.addf %32, %34 : vector<16x32xf32>
    %c0_20 = arith.constant 0 : index
    %c0_21 = arith.constant 0 : index
    %36 = vector.load %arg8[%c0_20, %c0_21] : memref<16x32xf32, #tpu.memory_space<vmem>>, vector<16x32xf32>
    tpu.vector_store %arg8[%c0_20, %c0_21], %35 {strides = array<i32>} : memref<16x32xf32, #tpu.memory_space<vmem>>, vector<16x32xf32>,
    return
  }
  func.func @transform_0(%arg0: i32) -> (i32, i32) {
    %c0_i32 = arith.constant 0 : i32
    %c0_i32_0 = arith.constant 0 : i32
    return %arg0, %c0_i32 : i32, i32
  }
  func.func @transform_1(%arg0: i32) -> (i32, i32) {
    %c0_i32 = arith.constant 0 : i32
    %c0_i32_0 = arith.constant 0 : i32
    %c0_i32_1 = arith.constant 0 : i32
    return %c0_i32, %c0_i32_0 : i32, i32
  }
  func.func @transform_2(%arg0: i32) -> (i32, i32) {
    %c0_i32 = arith.constant 0 : i32
    %c0_i32_0 = arith.constant 0 : i32
    %c0_i32_1 = arith.constant 0 : i32
    return %c0_i32, %c0_i32_0 : i32, i32
  }
  func.func @transform_3(%arg0: i32) -> (i32, i32) {
    %c0_i32 = arith.constant 0 : i32
    %c0_i32_0 = arith.constant 0 : i32
    %c0_i32_1 = arith.constant 0 : i32
    return %c0_i32, %c0_i32_0 : i32, i32
  }
  func.func @transform_4(%arg0: i32) -> (i32, i32) {
    %c0_i32 = arith.constant 0 : i32
    %c0_i32_0 = arith.constant 0 : i32
    %c0_i32_1 = arith.constant 0 : i32
    return %c0_i32, %c0_i32_0 : i32, i32
  }
  func.func @transform_5(%arg0: i32) -> (i32, i32) {
    %c0_i32 = arith.constant 0 : i32
    %c0_i32_0 = arith.constant 0 : i32
    %c0_i32_1 = arith.constant 0 : i32
    return %c0_i32, %c0_i32_0 : i32, i32
  }
  func.func @transform_6(%arg0: i32) -> (i32, i32) {
    %c0_i32 = arith.constant 0 : i32
    %c0_i32_0 = arith.constant 0 : i32
    %c0_i32_1 = arith.constant 0 : i32
    return %c0_i32, %c0_i32_0 : i32, i32
  }
  func.func @transform_7(%arg0: i32) -> (i32, i32) {
    %c0_i32 = arith.constant 0 : i32
    %c0_i32_0 = arith.constant 0 : i32
    return %arg0, %c0_i32 : i32, i32
  }
}

</mosaic_0001>

<llo_original>
// kernel: transformer_decoder_layer_kg_forward.5
$region0: #{transformer_decoder_layer_kg_forward.5}
  #allocation0 [shape = 'u32[]', space=smem, size = 0x4, offset = 0x4, fixed_abs, tag = 'smem constant byte address 0x4 - core index']
  #allocation1 [shape = 'u32[144,128]{1,0:T(1,128)}', space=vmem, size = 0x12000, scoped, tag = 'internal scratch']
  %s0 = inlined_call_operand.vmem [shape: f32[16,32], index: 0, kind: input, shape index: {}]
  %s1 = inlined_call_operand.vmem [shape: f32[32,64], index: 1, kind: input, shape index: {}]
  %s2 = inlined_call_operand.vmem [shape: f32[1,64], index: 2, kind: input, shape index: {}]
  %s3 = inlined_call_operand.vmem [shape: f32[64,32], index: 3, kind: input, shape index: {}]
  %s4 = inlined_call_operand.vmem [shape: f32[1,32], index: 4, kind: input, shape index: {}]
  %s5 = inlined_call_operand.vmem [shape: f32[1,32], index: 5, kind: input, shape index: {}]
  %s6 = inlined_call_operand.vmem [shape: f32[1,32], index: 6, kind: input, shape index: {}]
  %s7 = inlined_call_operand.hbm [shape: f32[16,32], index: 7, kind: output, shape index: {}]
  %s8 = sld [smem:[#allocation0]]
  $region38: #{transformer_decoder_layer_kg_forward.5} parent=0
    _
  %s10 = ssub.s32 1, %s8
  %s11 = scalar_select 0, %s10, %s8
  $region1: #{transformer_decoder_layer_kg_forward.5} parent=0
    #allocation2 [shape = 'u8[8192]{0}', space=vmem, size = 0x2000, scoped, tag = 'output window, operand 0, single buffered']
    #allocation3 [shape = 's32[1]{0}', space=sflag, size = 0x4, scoped, tag = 'scoped memory for transformer_decoder_layer_kg_forward.5']
    %12 = vsyncpa [#allocation3], 0
    // Predicated region
    $region2: #{transformer_decoder_layer_kg_forward.5} parent=1 // pred_check
      _
    $region3: #{transformer_decoder_layer_kg_forward.5} parent=1 // pred_check_branch
      %14 = sbr.rel (0) target = $region5
    $region4: #{transformer_decoder_layer_kg_forward.5} parent=1 // pred_region
      _
    $region5: #{transformer_decoder_layer_kg_forward.5} parent=1 // pred_fallthru
      _
    // Predicated region
    $region6: #{transformer_decoder_layer_kg_forward.5} parent=1 // pred_check
      _
    $region7: #{transformer_decoder_layer_kg_forward.5} parent=1 // pred_check_branch
      %16 = sbr.rel (0) target = $region9
    $region8: #{transformer_decoder_layer_kg_forward.5} parent=1 // pred_region
      _
    $region9: #{transformer_decoder_layer_kg_forward.5} parent=1 // pred_fallthru
      _
    // Predicated region
    $region10: #{transformer_decoder_layer_kg_forward.5} parent=1 // pred_check
      _
    $region11: #{transformer_decoder_layer_kg_forward.5} parent=1 // pred_check_branch
      %18 = sbr.rel (0) target = $region13
    $region12: #{transformer_decoder_layer_kg_forward.5} parent=1 // pred_region
      _
    $region13: #{transformer_decoder_layer_kg_forward.5} parent=1 // pred_fallthru
      _
    // Predicated region
    $region14: #{transformer_decoder_layer_kg_forward.5} parent=1 // pred_check
      _
    $region15: #{transformer_decoder_layer_kg_forward.5} parent=1 // pred_check_branch
      %20 = sbr.rel (0) target = $region17
    $region16: #{transformer_decoder_layer_kg_forward.5} parent=1 // pred_region
      _
    $region17: #{transformer_decoder_layer_kg_forward.5} parent=1 // pred_fallthru
      _
    // Predicated region
    $region18: #{transformer_decoder_layer_kg_forward.5} parent=1 // pred_check
      _
    $region19: #{transformer_decoder_layer_kg_forward.5} parent=1 // pred_check_branch
      %22 = sbr.rel (0) target = $region21
    $region20: #{transformer_decoder_layer_kg_forward.5} parent=1 // pred_region
      _
    $region21: #{transformer_decoder_layer_kg_forward.5} parent=1 // pred_fallthru
      _
    // Predicated region
    $region22: #{transformer_decoder_layer_kg_forward.5} parent=1 // pred_check
      _
    $region23: #{transformer_decoder_layer_kg_forward.5} parent=1 // pred_check_branch
      %24 = sbr.rel (0) target = $region25
    $region24: #{transformer_decoder_layer_kg_forward.5} parent=1 // pred_region
      _
    $region25: #{transformer_decoder_layer_kg_forward.5} parent=1 // pred_fallthru
      _
    // Predicated region
    $region26: #{transformer_decoder_layer_kg_forward.5} parent=1 // pred_check
      _
    $region27: #{transformer_decoder_layer_kg_forward.5} parent=1 // pred_check_branch
      %26 = sbr.rel (0) target = $region29
    $region28: #{transformer_decoder_layer_kg_forward.5} parent=1 // pred_region
      _
    $region29: #{transformer_decoder_layer_kg_forward.5} parent=1 // pred_fallthru
      _
    %v27 = vld [vmem:[%s0] sm:$0xff]
    %v28 = vld [vmem:[%s0 + $0x8] sm:$0xff]
    %v29 = vld [vmem:[%s1] sm:$0xff]
    %v30 = vld [vmem:[%s1 + $0x8] sm:$0xff]
    %v31 = vld [vmem:[%s1 + $0x10] sm:$0xff]
    %v32 = vld [vmem:[%s1 + $0x18] sm:$0xff]
    %v33 = vld [vmem:[%s2] sm:$0x1]
    %v35 = vlaneseq
    %v36 = vshrl.u32 %v35, 7
    %v37 = vsub.s32 0, %v36
    %v38 = vrot.slane %v33, %v37
    %vm40 = vcmask 261120
    %v42 = vsel %vm40, %v27, 0
    %v45 = vsel %vm40, %v28, 0
    %47 = vmatprep.subr.mxu0 0.0
    %48 = vmatpush1.msra.mxu0 0.0
    %49 = vmatprep.subr.mxu0 0.0
    %50 = vmatpush1.msra.mxu0 0.0
    %51 = vmatprep.subr.mxu0 0.0
    %52 = vmatpush1.msra.mxu0 0.0
    %53 = vmatprep.subr.mxu0 0.0
    %54 = vmatpush1.msra.mxu0 0.0
    %55 = vmatprep.subr.mxu0 0.0
    %56 = vmatpush1.msra.mxu0 0.0
    %57 = vmatprep.subr.mxu0 0.0
    %58 = vmatpush1.msra.mxu0 0.0
    %59 = vmatprep.subr.mxu0 0.0
    %60 = vmatpush1.msra.mxu0 0.0
    %61 = vmatprep.subr.mxu0 0.0
    %62 = vmatpush1.msra.mxu0 0.0
    %63 = vmatprep.subr.mxu0 0.0
    %64 = vmatpush1.msra.mxu0 0.0
    %65 = vmatprep.subr.mxu0 0.0
    %66 = vmatpush1.msra.mxu0 0.0
    %67 = vmatprep.subr.mxu0 0.0
    %68 = vmatpush1.msra.mxu0 0.0
    %69 = vmatprep.subr.mxu0 0.0
    %70 = vmatpush1.msra.mxu0 0.0
    %71 = vmatprep.subr.mxu0 0.0
    %72 = vmatpush1.msra.mxu0 %v32
    %73 = vmatprep.subr.mxu0 0.0
    %74 = vmatpush1.msra.mxu0 %v31
    %75 = vmatprep.subr.mxu0 0.0
    %76 = vmatpush1.msra.mxu0 %v30
    %77 = vmatprep.subr.mxu0 0.0
    %78 = vmatpush1.msra.mxu0 %v29
    %79 = vmatprep.subr.mxu0 0.0
    %80 = vmatpush2.msra.mxu0 0.0
    %81 = vmatprep.subr.mxu0 0.0
    %82 = vmatpush2.msra.mxu0 0.0
    %83 = vmatprep.subr.mxu0 0.0
    %84 = vmatpush2.msra.mxu0 0.0
    %85 = vmatprep.subr.mxu0 0.0
    %86 = vmatpush2.msra.mxu0 0.0
    %87 = vmatprep.subr.mxu0 0.0
    %88 = vmatpush2.msra.mxu0 0.0
    %89 = vmatprep.subr.mxu0 0.0
    %90 = vmatpush2.msra.mxu0 0.0
    %91 = vmatprep.subr.mxu0 0.0
    %92 = vmatpush2.msra.mxu0 0.0
    %93 = vmatprep.subr.mxu0 0.0
    %94 = vmatpush2.msra.mxu0 0.0
    %95 = vmatprep.subr.mxu0 0.0
    %96 = vmatpush2.msra.mxu0 0.0
    %97 = vmatprep.subr.mxu0 0.0
    %98 = vmatpush2.msra.mxu0 0.0
    %99 = vmatprep.subr.mxu0 0.0
    %100 = vmatpush2.msra.mxu0 0.0
    %101 = vmatprep.subr.mxu0 0.0
    %102 = vmatpush2.msra.mxu0 0.0
    %103 = vmatprep.subr.mxu0 0.0
    %104 = vmatpush2.msra.mxu0 0.0
    %105 = vmatprep.subr.mxu0 0.0
    %106 = vmatpush2.msra.mxu0 0.0
    %107 = vmatprep.subr.mxu0 0.0
    %108 = vmatpush2.msra.mxu0 0.0
    %109 = vmatprep.subr.mxu0 0.0
    %110 = vmatpush2.msra.mxu0 0.0
    %111 = vmatprep.mubr.f32.mxu0 0.0
    %112 = vmatmul.mubr.f32.gmra.mxu0 %v42
    %v113 = vpop.f32.mrf.mxu0
    %v114 = vadd.f32 %v38, %v113
    %v115 = vpop.f32.mrf.mxu0
    %116 = vmatprep.mubr.f32.mxu0 0.0
    %117 = vmatmul.mubr.f32.gmra.mxu0 %v45
    %v118 = vpop.f32.mrf.mxu0
    %v119 = vadd.f32 %v38, %v118
    %v120 = vpop.f32.mrf.mxu0
    %121 = vdwg.mxu0
    %v122 = vmax.f32 %v114, 0.0
    %v123 = vmax.f32 %v119, 0.0
    %v124 = vld [vmem:[%s3] sm:$0xff]
    %v125 = vld [vmem:[%s3 + $0x8] sm:$0xff]
    %v126 = vld [vmem:[%s3 + $0x10] sm:$0xff]
    %v127 = vld [vmem:[%s3 + $0x18] sm:$0xff]
    %v128 = vld [vmem:[%s3 + $0x20] sm:$0xff]
    %v129 = vld [vmem:[%s3 + $0x28] sm:$0xff]
    %v130 = vld [vmem:[%s3 + $0x30] sm:$0xff]
    %v131 = vld [vmem:[%s3 + $0x38] sm:$0xff]
    %v132 = vld [vmem:[%s4] sm:$0x1]
    %v134 = vlaneseq
    %v135 = vshrl.u32 %v134, 7
    %v136 = vsub.s32 0, %v135
    %v137 = vrot.slane %v132, %v136
    %vm139 = vcmask 523264
    %v141 = vsel %vm139, %v122, 0
    %v144 = vsel %vm139, %v123, 0
    %146 = vmatprep.subr.mxu0 0.0
    %147 = vmatpush1.msra.mxu0 0.0
    %148 = vmatprep.subr.mxu0 0.0
    %149 = vmatpush1.msra.mxu0 0.0
    %150 = vmatprep.subr.mxu0 0.0
    %151 = vmatpush1.msra.mxu0 0.0
    %152 = vmatprep.subr.mxu0 0.0
    %153 = vmatpush1.msra.mxu0 0.0
    %154 = vmatprep.subr.mxu0 0.0
    %155 = vmatpush1.msra.mxu0 0.0
    %156 = vmatprep.subr.mxu0 0.0
    %157 = vmatpush1.msra.mxu0 0.0
    %158 = vmatprep.subr.mxu0 0.0
    %159 = vmatpush1.msra.mxu0 0.0
    %160 = vmatprep.subr.mxu0 0.0
    %161 = vmatpush1.msra.mxu0 0.0
    %162 = vmatprep.subr.mxu0 0.0
    %163 = vmatpush1.msra.mxu0 %v131
    %164 = vmatprep.subr.mxu0 0.0
    %165 = vmatpush1.msra.mxu0 %v130
    %166 = vmatprep.subr.mxu0 0.0
    %167 = vmatpush1.msra.mxu0 %v129
    %168 = vmatprep.subr.mxu0 0.0
    %169 = vmatpush1.msra.mxu0 %v128
    %170 = vmatprep.subr.mxu0 0.0
    %171 = vmatpush1.msra.mxu0 %v127
    %172 = vmatprep.subr.mxu0 0.0
    %173 = vmatpush1.msra.mxu0 %v126
    %174 = vmatprep.subr.mxu0 0.0
    %175 = vmatpush1.msra.mxu0 %v125
    %176 = vmatprep.subr.mxu0 0.0
    %177 = vmatpush1.msra.mxu0 %v124
    %178 = vmatprep.subr.mxu0 0.0
    %179 = vmatpush2.msra.mxu0 0.0
    %180 = vmatprep.subr.mxu0 0.0
    %181 = vmatpush2.msra.mxu0 0.0
    %182 = vmatprep.subr.mxu0 0.0
    %183 = vmatpush2.msra.mxu0 0.0
    %184 = vmatprep.subr.mxu0 0.0
    %185 = vmatpush2.msra.mxu0 0.0
    %186 = vmatprep.subr.mxu0 0.0
    %187 = vmatpush2.msra.mxu0 0.0
    %188 = vmatprep.subr.mxu0 0.0
    %189 = vmatpush2.msra.mxu0 0.0
    %190 = vmatprep.subr.mxu0 0.0
    %191 = vmatpush2.msra.mxu0 0.0
    %192 = vmatprep.subr.mxu0 0.0
    %193 = vmatpush2.msra.mxu0 0.0
    %194 = vmatprep.subr.mxu0 0.0
    %195 = vmatpush2.msra.mxu0 0.0
    %196 = vmatprep.subr.mxu0 0.0
    %197 = vmatpush2.msra.mxu0 0.0
    %198 = vmatprep.subr.mxu0 0.0
    %199 = vmatpush2.msra.mxu0 0.0
    %200 = vmatprep.subr.mxu0 0.0
    %201 = vmatpush2.msra.mxu0 0.0
    %202 = vmatprep.subr.mxu0 0.0
    %203 = vmatpush2.msra.mxu0 0.0
    %204 = vmatprep.subr.mxu0 0.0
    %205 = vmatpush2.msra.mxu0 0.0
    %206 = vmatprep.subr.mxu0 0.0
    %207 = vmatpush2.msra.mxu0 0.0
    %208 = vmatprep.subr.mxu0 0.0
    %209 = vmatpush2.msra.mxu0 0.0
    %210 = vmatprep.mubr.f32.mxu0 0.0
    %211 = vmatmul.mubr.f32.gmra.mxu0 %v141
    %v212 = vpop.f32.mrf.mxu0
    %v213 = vadd.f32 %v137, %v212
    %v214 = vpop.f32.mrf.mxu0
    %215 = vmatprep.mubr.f32.mxu0 0.0
    %216 = vmatmul.mubr.f32.gmra.mxu0 %v144
    %v217 = vpop.f32.mrf.mxu0
    %v218 = vadd.f32 %v137, %v217
    %v219 = vpop.f32.mrf.mxu0
    %220 = vdwg.mxu0
    %v221 = vadd.f32 %v27, %v213
    %v222 = vadd.f32 %v28, %v218
    %v223 = vsel %vm40, %v221, 0.0
    %224 = vadd.xlane.f32.xlu0 %v223
    %v225 = vpop.xlane.xlu0 %224
    %v226 = vsel %vm40, %v222, 0.0
    %227 = vadd.xlane.f32.xlu0 %v226
    %v228 = vpop.xlane.xlu0 %227
    %v229 = vrcp.pop 32.0
    %v230 = vmul.f32 %v225, %v229
    %v231 = vmul.f32 %v228, %v229
    %v232 = vsub.f32 %v221, %v230
    %v233 = vsub.f32 %v222, %v231
    %v234 = vmul.f32 %v232, %v232
    %v235 = vmul.f32 %v233, %v233
    %v236 = vsel %vm40, %v234, 0.0
    %237 = vadd.xlane.f32.xlu0 %v236
    %v238 = vpop.xlane.xlu0 %237
    %v239 = vsel %vm40, %v235, 0.0
    %240 = vadd.xlane.f32.xlu0 %v239
    %v241 = vpop.xlane.xlu0 %240
    %v242 = vmul.f32 %v238, %v229
    %v243 = vmul.f32 %v241, %v229
    %v244 = vadd.f32 %v242, 1e-05
    %v245 = vadd.f32 %v243, 1e-05
    %v246 = vrsqrt.pop %v244
    %v247 = vrsqrt.pop %v245
    %v248 = vmul.f32 %v232, %v246
    %v249 = vmul.f32 %v233, %v247
    %v250 = vld [vmem:[%s5] sm:$0x1]
    %v252 = vlaneseq
    %v253 = vshrl.u32 %v252, 7
    %v254 = vsub.s32 0, %v253
    %v255 = vrot.slane %v250, %v254
    %v257 = vmul.f32 %v248, %v255
    %v258 = vmul.f32 %v249, %v255
    %v259 = vld [vmem:[%s6] sm:$0x1]
    %v261 = vlaneseq
    %v262 = vshrl.u32 %v261, 7
    %v263 = vsub.s32 0, %v262
    %v264 = vrot.slane %v259, %v263
    %v266 = vadd.f32 %v257, %v264
    %v267 = vadd.f32 %v258, %v264
    %268 = vst.msk [vmem:[#allocation2] sm:$0xff] %vm40, %v266
    %269 = vst.msk [vmem:[#allocation2 + $0x8] sm:$0xff] %vm40, %v267
    // Predicated region
    $region30: #{transformer_decoder_layer_kg_forward.5} parent=1 // pred_check
      _
    $region31: #{transformer_decoder_layer_kg_forward.5} parent=1 // pred_check_branch
      %271 = sbr.rel (0) target = $region33
    $region32: #{transformer_decoder_layer_kg_forward.5} parent=1 // pred_region
      %s273 = ssub.s32 256, 256
      %274 = vsyncadd [#allocation3], %s273
      %s275 = sshll.u32 [#allocation2], 4
      %s276 = int_to_ptr.vmem [resolvable:$true] %s275
      %281 = dma.vmem_to_hbm [thread:$0]  %s276, 256, %s7, [#allocation3], 128, 128, 8
    $region33: #{transformer_decoder_layer_kg_forward.5} parent=1 // pred_fallthru
      _
    // Predicated region
    $region34: #{transformer_decoder_layer_kg_forward.5} parent=1 // pred_check
      _
    $region35: #{transformer_decoder_layer_kg_forward.5} parent=1 // pred_check_branch
      %283 = sbr.rel (0) target = $region37
    $region36: #{transformer_decoder_layer_kg_forward.5} parent=1 // pred_region
      %284 = dma.done [#allocation3], 256
    $region37: #{transformer_decoder_layer_kg_forward.5} parent=1 // pred_fallthru
      _
    %285 = vsyncpa [#allocation3], 1

// kernel: transformer_decoder_layer_kg_forward.3
$region0: #{transformer_decoder_layer_kg_forward.3}
  #allocation0 [shape = 'u32[]', space=smem, size = 0x4, offset = 0x4, fixed_abs, tag = 'smem constant byte address 0x4 - core index']
  #allocation1 [shape = 'u32[144,128]{1,0:T(1,128)}', space=vmem, size = 0x12000, scoped, tag = 'internal scratch']
  %s0 = inlined_call_operand.vmem [shape: f32[2,8,32], index: 0, kind: input, shape index: {}, may-alias: {0,1}]
  %s1 = inlined_call_operand.vmem [shape: f32[2,8,32], index: 1, kind: input, shape index: {}, may-alias: {0,1}]
  %s2 = inlined_call_operand.vmem [shape: f32[2,1,8], index: 2, kind: input, shape index: {}]
  %s3 = inlined_call_operand.vmem [shape: f32[32,32], index: 3, kind: input, shape index: {}]
  %s4 = inlined_call_operand.vmem [shape: f32[1,32], index: 4, kind: input, shape index: {}]
  %s5 = inlined_call_operand.vmem [shape: f32[32,32], index: 5, kind: input, shape index: {}]
  %s6 = inlined_call_operand.vmem [shape: f32[1,32], index: 6, kind: input, shape index: {}]
  %s7 = inlined_call_operand.vmem [shape: f32[32,32], index: 7, kind: input, shape index: {}]
  %s8 = inlined_call_operand.vmem [shape: f32[1,32], index: 8, kind: input, shape index: {}]
  %s9 = inlined_call_operand.vmem [shape: f32[32,32], index: 9, kind: input, shape index: {}]
  %s10 = inlined_call_operand.vmem [shape: f32[1,32], index: 10, kind: input, shape index: {}]
  %s11 = inlined_call_operand.vmem [shape: f32[1,32], index: 11, kind: input, shape index: {}]
  %s12 = inlined_call_operand.vmem [shape: f32[1,32], index: 12, kind: input, shape index: {}]
  %s13 = inlined_call_operand.vmem [shape: f32[2,8,32], index: 13, kind: output, shape index: {}]
  %s14 = sld [smem:[#allocation0]]
  $region85: #{transformer_decoder_layer_kg_forward.3} parent=0
    _
  %s16 = ssub.s32 1, %s14
  %s17 = scalar_select 0, %s16, %s14
  loop: start=0, step=1, limit=4
  $region2: #{transformer_decoder_layer_kg_forward.3} parent=0 // loop_pre_header
    _
  $region3: #{transformer_decoder_layer_kg_forward.3} parent=0 // loop_header
    %s19 = sphi 0, %s23
    %p20 = scmp.ge.s32.totalorder %s19, 4
    %s26 = sphi 0, %s38
    %s27 = sphi 0, %s34
    %s28 = sphi 0, %s26
    %s29 = sphi 0, %s27
    %s30 = sphi 0, %s28
    %s31 = sphi 0, %s29
    %s43 = sphi 0, %s45
    %s46 = sphi 0, %s43
    %s47 = sphi 0, %s46
    %s63 = sphi 0, %s47
    %s69 = sphi 0, %s71
    %s72 = sphi 0, %s69
    %s73 = sphi 0, %s72
    %s89 = sphi 0, %s73
    %s95 = sphi 0, %s97
    %s98 = sphi 0, %s95
    %s99 = sphi 0, %s98
    %s115 = sphi 0, %s99
    %s119 = sphi 0, %s119
    %s121 = sphi 0, %s119
    %s122 = sphi 0, %s121
    %s136 = sphi 0, %s122
    %s140 = sphi 0, %s140
    %s142 = sphi 0, %s140
    %s143 = sphi 0, %s142
    %s157 = sphi 0, %s143
    %s161 = sphi 0, %s161
    %s163 = sphi 0, %s161
    %s164 = sphi 0, %s163
    %s178 = sphi 0, %s164
    %s182 = sphi 0, %s182
    %s184 = sphi 0, %s182
    %s185 = sphi 0, %s184
    %s199 = sphi 0, %s185
    %s203 = sphi 0, %s203
    %s205 = sphi 0, %s203
    %s206 = sphi 0, %s205
    %s220 = sphi 0, %s206
    %s224 = sphi 0, %s224
    %s226 = sphi 0, %s224
    %s227 = sphi 0, %s226
    %s241 = sphi 0, %s227
    %s245 = sphi 0, %s245
    %s247 = sphi 0, %s245
    %s248 = sphi 0, %s247
    %s262 = sphi 0, %s248
    %s266 = sphi 0, %s266
    %s268 = sphi 0, %s266
    %s269 = sphi 0, %s268
    %s283 = sphi 0, %s269
    %s287 = sphi 0, %s287
    %s289 = sphi 0, %s287
    %s290 = sphi 0, %s289
    %s304 = sphi 0, %s290
    %s308 = sphi 0, %s308
    %s310 = sphi 0, %s308
    %s311 = sphi 0, %s310
    %s325 = sphi 0, %s311
    %s333 = sphi 0, %s335
    %s336 = sphi 0, %s333
    %s337 = sphi 0, %s336
    %s353 = sphi 0, %s337
  $region4: #{transformer_decoder_layer_kg_forward.3} parent=0 // loop_header_branch
    %22 = sbr.rel (%p20) target = $region8
  $region5: #{transformer_decoder_layer_kg_forward.3} parent=0 // loop_body
    %s24 = ssub.s32 %s19, 1
    %s25 = ssub.s32 %s19, 2
    %s32 = sadd.s32 1, %s27
    %p33 = scmp.ge.s32.totalorder %s32, 1
    %s34 = scalar_select %p33, 0, %s32
    %s35 = sadd.s32 1, %s26
    %s36 = scalar_select %p33, %s35, %s26
    %p37 = scmp.ge.s32.totalorder %s36, 2
    %s38 = scalar_select %p37, 0, %s36
    %s39 = ssub.s32 %s26, %s38
    %s40 = ssub.s32 %s27, %s34
    %s41 = sor.u32 %s39, %s40
    %p42 = scmp.eq.s32.totalorder %s41, 0
    %s44 = sadd.s32 %s43, 1
    %s45 = scalar_select %p42, %s43, %s44
    %p48 = pneg %p42
    %p49 = scmp.eq.s32.totalorder %s19, 1
    %p50 = por %p48, %p49
    %p51 = scmp.ne.s32.totalorder %s43, %s46
    %p52 = scmp.eq.s32.totalorder %s19, 0
    %p53 = por %p51, %p52
    %p54 = scmp.ne.s32.totalorder %s43, %s46
    %p55 = scmp.eq.s32.totalorder %s24, 1
    %p56 = por %p54, %p55
    %p57 = scmp.ne.s32.totalorder %s46, %s47
    %p58 = scmp.eq.s32.totalorder %s24, 0
    %p59 = por %p57, %p58
    %p60 = scmp.ne.s32.totalorder %s46, %s47
    %p61 = scmp.eq.s32.totalorder %s25, 1
    %p62 = por %p60, %p61
    %p64 = scmp.ne.s32.totalorder %s47, %s63
    %p65 = scmp.eq.s32.totalorder %s25, 0
    %p66 = por %p64, %p65
    %s67 = ssub.s32 %s26, %s38
    %p68 = scmp.eq.s32.totalorder %s67, 0
    %s70 = sadd.s32 %s69, 1
    %s71 = scalar_select %p68, %s69, %s70
    %p74 = pneg %p68
    %p75 = scmp.eq.s32.totalorder %s19, 1
    %p76 = por %p74, %p75
    %p77 = scmp.ne.s32.totalorder %s69, %s72
    %p78 = scmp.eq.s32.totalorder %s19, 0
    %p79 = por %p77, %p78
    %p80 = scmp.ne.s32.totalorder %s69, %s72
    %p81 = scmp.eq.s32.totalorder %s24, 1
    %p82 = por %p80, %p81
    %p83 = scmp.ne.s32.totalorder %s72, %s73
    %p84 = scmp.eq.s32.totalorder %s24, 0
    %p85 = por %p83, %p84
    %p86 = scmp.ne.s32.totalorder %s72, %s73
    %p87 = scmp.eq.s32.totalorder %s25, 1
    %p88 = por %p86, %p87
    %p90 = scmp.ne.s32.totalorder %s73, %s89
    %p91 = scmp.eq.s32.totalorder %s25, 0
    %p92 = por %p90, %p91
    %s93 = ssub.s32 %s26, %s38
    %p94 = scmp.eq.s32.totalorder %s93, 0
    %s96 = sadd.s32 %s95, 1
    %s97 = scalar_select %p94, %s95, %s96
    %p100 = pneg %p94
    %p101 = scmp.eq.s32.totalorder %s19, 1
    %p102 = por %p100, %p101
    %p103 = scmp.ne.s32.totalorder %s95, %s98
    %p104 = scmp.eq.s32.totalorder %s19, 0
    %p105 = por %p103, %p104
    %p106 = scmp.ne.s32.totalorder %s95, %s98
    %p107 = scmp.eq.s32.totalorder %s24, 1
    %p108 = por %p106, %p107
    %p109 = scmp.ne.s32.totalorder %s98, %s99
    %p110 = scmp.eq.s32.totalorder %s24, 0
    %p111 = por %p109, %p110
    %p112 = scmp.ne.s32.totalorder %s98, %s99
    %p113 = scmp.eq.s32.totalorder %s25, 1
    %p114 = por %p112, %p113
    %p116 = scmp.ne.s32.totalorder %s99, %s115
    %p117 = scmp.eq.s32.totalorder %s25, 0
    %p118 = por %p116, %p117
    %s120 = sadd.s32 %s119, 1
    %p123 = scmp.eq.s32.totalorder %s19, 1
    %p124 = scmp.ne.s32.totalorder %s119, %s121
    %p125 = scmp.eq.s32.totalorder %s19, 0
    %p126 = por %p124, %p125
    %p127 = scmp.ne.s32.totalorder %s119, %s121
    %p128 = scmp.eq.s32.totalorder %s24, 1
    %p129 = por %p127, %p128
    %p130 = scmp.ne.s32.totalorder %s121, %s122
    %p131 = scmp.eq.s32.totalorder %s24, 0
    %p132 = por %p130, %p131
    %p133 = scmp.ne.s32.totalorder %s121, %s122
    %p134 = scmp.eq.s32.totalorder %s25, 1
    %p135 = por %p133, %p134
    %p137 = scmp.ne.s32.totalorder %s122, %s136
    %p138 = scmp.eq.s32.totalorder %s25, 0
    %p139 = por %p137, %p138
    %s141 = sadd.s32 %s140, 1
    %p144 = scmp.eq.s32.totalorder %s19, 1
    %p145 = scmp.ne.s32.totalorder %s140, %s142
    %p146 = scmp.eq.s32.totalorder %s19, 0
    %p147 = por %p145, %p146
    %p148 = scmp.ne.s32.totalorder %s140, %s142
    %p149 = scmp.eq.s32.totalorder %s24, 1
    %p150 = por %p148, %p149
    %p151 = scmp.ne.s32.totalorder %s142, %s143
    %p152 = scmp.eq.s32.totalorder %s24, 0
    %p153 = por %p151, %p152
    %p154 = scmp.ne.s32.totalorder %s142, %s143
    %p155 = scmp.eq.s32.totalorder %s25, 1
    %p156 = por %p154, %p155
    %p158 = scmp.ne.s32.totalorder %s143, %s157
    %p159 = scmp.eq.s32.totalorder %s25, 0
    %p160 = por %p158, %p159
    %s162 = sadd.s32 %s161, 1
    %p165 = scmp.eq.s32.totalorder %s19, 1
    %p166 = scmp.ne.s32.totalorder %s161, %s163
    %p167 = scmp.eq.s32.totalorder %s19, 0
    %p168 = por %p166, %p167
    %p169 = scmp.ne.s32.totalorder %s161, %s163
    %p170 = scmp.eq.s32.totalorder %s24, 1
    %p171 = por %p169, %p170
    %p172 = scmp.ne.s32.totalorder %s163, %s164
    %p173 = scmp.eq.s32.totalorder %s24, 0
    %p174 = por %p172, %p173
    %p175 = scmp.ne.s32.totalorder %s163, %s164
    %p176 = scmp.eq.s32.totalorder %s25, 1
    %p177 = por %p175, %p176
    %p179 = scmp.ne.s32.totalorder %s164, %s178
    %p180 = scmp.eq.s32.totalorder %s25, 0
    %p181 = por %p179, %p180
    %s183 = sadd.s32 %s182, 1
    %p186 = scmp.eq.s32.totalorder %s19, 1
    %p187 = scmp.ne.s32.totalorder %s182, %s184
    %p188 = scmp.eq.s32.totalorder %s19, 0
    %p189 = por %p187, %p188
    %p190 = scmp.ne.s32.totalorder %s182, %s184
    %p191 = scmp.eq.s32.totalorder %s24, 1
    %p192 = por %p190, %p191
    %p193 = scmp.ne.s32.totalorder %s184, %s185
    %p194 = scmp.eq.s32.totalorder %s24, 0
    %p195 = por %p193, %p194
    %p196 = scmp.ne.s32.totalorder %s184, %s185
    %p197 = scmp.eq.s32.totalorder %s25, 1
    %p198 = por %p196, %p197
    %p200 = scmp.ne.s32.totalorder %s185, %s199
    %p201 = scmp.eq.s32.totalorder %s25, 0
    %p202 = por %p200, %p201
    %s204 = sadd.s32 %s203, 1
    %p207 = scmp.eq.s32.totalorder %s19, 1
    %p208 = scmp.ne.s32.totalorder %s203, %s205
    %p209 = scmp.eq.s32.totalorder %s19, 0
    %p210 = por %p208, %p209
    %p211 = scmp.ne.s32.totalorder %s203, %s205
    %p212 = scmp.eq.s32.totalorder %s24, 1
    %p213 = por %p211, %p212
    %p214 = scmp.ne.s32.totalorder %s205, %s206
    %p215 = scmp.eq.s32.totalorder %s24, 0
    %p216 = por %p214, %p215
    %p217 = scmp.ne.s32.totalorder %s205, %s206
    %p218 = scmp.eq.s32.totalorder %s25, 1
    %p219 = por %p217, %p218
    %p221 = scmp.ne.s32.totalorder %s206, %s220
    %p222 = scmp.eq.s32.totalorder %s25, 0
    %p223 = por %p221, %p222
    %s225 = sadd.s32 %s224, 1
    %p228 = scmp.eq.s32.totalorder %s19, 1
    %p229 = scmp.ne.s32.totalorder %s224, %s226
    %p230 = scmp.eq.s32.totalorder %s19, 0
    %p231 = por %p229, %p230
    %p232 = scmp.ne.s32.totalorder %s224, %s226
    %p233 = scmp.eq.s32.totalorder %s24, 1
    %p234 = por %p232, %p233
    %p235 = scmp.ne.s32.totalorder %s226, %s227
    %p236 = scmp.eq.s32.totalorder %s24, 0
    %p237 = por %p235, %p236
    %p238 = scmp.ne.s32.totalorder %s226, %s227
    %p239 = scmp.eq.s32.totalorder %s25, 1
    %p240 = por %p238, %p239
    %p242 = scmp.ne.s32.totalorder %s227, %s241
    %p243 = scmp.eq.s32.totalorder %s25, 0
    %p244 = por %p242, %p243
    %s246 = sadd.s32 %s245, 1
    %p249 = scmp.eq.s32.totalorder %s19, 1
    %p250 = scmp.ne.s32.totalorder %s245, %s247
    %p251 = scmp.eq.s32.totalorder %s19, 0
    %p252 = por %p250, %p251
    %p253 = scmp.ne.s32.totalorder %s245, %s247
    %p254 = scmp.eq.s32.totalorder %s24, 1
    %p255 = por %p253, %p254
    %p256 = scmp.ne.s32.totalorder %s247, %s248
    %p257 = scmp.eq.s32.totalorder %s24, 0
    %p258 = por %p256, %p257
    %p259 = scmp.ne.s32.totalorder %s247, %s248
    %p260 = scmp.eq.s32.totalorder %s25, 1
    %p261 = por %p259, %p260
    %p263 = scmp.ne.s32.totalorder %s248, %s262
    %p264 = scmp.eq.s32.totalorder %s25, 0
    %p265 = por %p263, %p264
    %s267 = sadd.s32 %s266, 1
    %p270 = scmp.eq.s32.totalorder %s19, 1
    %p271 = scmp.ne.s32.totalorder %s266, %s268
    %p272 = scmp.eq.s32.totalorder %s19, 0
    %p273 = por %p271, %p272
    %p274 = scmp.ne.s32.totalorder %s266, %s268
    %p275 = scmp.eq.s32.totalorder %s24, 1
    %p276 = por %p274, %p275
    %p277 = scmp.ne.s32.totalorder %s268, %s269
    %p278 = scmp.eq.s32.totalorder %s24, 0
    %p279 = por %p277, %p278
    %p280 = scmp.ne.s32.totalorder %s268, %s269
    %p281 = scmp.eq.s32.totalorder %s25, 1
    %p282 = por %p280, %p281
    %p284 = scmp.ne.s32.totalorder %s269, %s283
    %p285 = scmp.eq.s32.totalorder %s25, 0
    %p286 = por %p284, %p285
    %s288 = sadd.s32 %s287, 1
    %p291 = scmp.eq.s32.totalorder %s19, 1
    %p292 = scmp.ne.s32.totalorder %s287, %s289
    %p293 = scmp.eq.s32.totalorder %s19, 0
    %p294 = por %p292, %p293
    %p295 = scmp.ne.s32.totalorder %s287, %s289
    %p296 = scmp.eq.s32.totalorder %s24, 1
    %p297 = por %p295, %p296
    %p298 = scmp.ne.s32.totalorder %s289, %s290
    %p299 = scmp.eq.s32.totalorder %s24, 0
    %p300 = por %p298, %p299
    %p301 = scmp.ne.s32.totalorder %s289, %s290
    %p302 = scmp.eq.s32.totalorder %s25, 1
    %p303 = por %p301, %p302
    %p305 = scmp.ne.s32.totalorder %s290, %s304
    %p306 = scmp.eq.s32.totalorder %s25, 0
    %p307 = por %p305, %p306
    %s309 = sadd.s32 %s308, 1
    %p312 = scmp.eq.s32.totalorder %s19, 1
    %p313 = scmp.ne.s32.totalorder %s308, %s310
    %p314 = scmp.eq.s32.totalorder %s19, 0
    %p315 = por %p313, %p314
    %p316 = scmp.ne.s32.totalorder %s308, %s310
    %p317 = scmp.eq.s32.totalorder %s24, 1
    %p318 = por %p316, %p317
    %p319 = scmp.ne.s32.totalorder %s310, %s311
    %p320 = scmp.eq.s32.totalorder %s24, 0
    %p321 = por %p319, %p320
    %p322 = scmp.ne.s32.totalorder %s310, %s311
    %p323 = scmp.eq.s32.totalorder %s25, 1
    %p324 = por %p322, %p323
    %p326 = scmp.ne.s32.totalorder %s311, %s325
    %p327 = scmp.eq.s32.totalorder %s25, 0
    %p328 = por %p326, %p327
    %s329 = ssub.s32 %s26, %s38
    %s330 = ssub.s32 %s27, %s34
    %s331 = sor.u32 %s329, %s330
    %p332 = scmp.eq.s32.totalorder %s331, 0
    %s334 = sadd.s32 %s333, 1
    %s335 = scalar_select %p332, %s333, %s334
    %p338 = pneg %p332
    %p339 = scmp.eq.s32.totalorder %s19, 1
    %p340 = por %p338, %p339
    %p341 = scmp.ne.s32.totalorder %s333, %s336
    %p342 = scmp.eq.s32.totalorder %s19, 0
    %p343 = por %p341, %p342
    %p344 = scmp.ne.s32.totalorder %s333, %s336
    %p345 = scmp.eq.s32.totalorder %s24, 1
    %p346 = por %p344, %p345
    %p347 = scmp.ne.s32.totalorder %s336, %s337
    %p348 = scmp.eq.s32.totalorder %s24, 0
    %p349 = por %p347, %p348
    %p350 = scmp.ne.s32.totalorder %s336, %s337
    %p351 = scmp.eq.s32.totalorder %s25, 1
    %p352 = por %p350, %p351
    %p354 = scmp.ne.s32.totalorder %s337, %s353
    %p355 = scmp.eq.s32.totalorder %s25, 0
    %p356 = por %p354, %p355
    %p357 = scmp.le.s32.totalorder 1, %s19
    %p358 = scmp.lt.s32.totalorder %s19, 3
    %p359 = pnand %p357, %p358
    %p360 = pneg %p359
    // Predicated region
    $region9: #{transformer_decoder_layer_kg_forward.3} parent=5 // pred_check
      _
    $region10: #{transformer_decoder_layer_kg_forward.3} parent=5 // pred_check_branch
      %362 = sbr.rel (%p359) target = $region12
    $region11: #{transformer_decoder_layer_kg_forward.3} parent=5 // pred_region
      %s363 = ssub.s32 %s19, 1
      // Predicated region
      $region13: #{transformer_decoder_layer_kg_forward.3} parent=11 // pred_check
        %p364 = pneg %p132
      $region14: #{transformer_decoder_layer_kg_forward.3} parent=11 // pred_check_branch
        %366 = sbr.rel (%p364) target = $region16
      $region15: #{transformer_decoder_layer_kg_forward.3} parent=11 // pred_region
        _
      $region16: #{transformer_decoder_layer_kg_forward.3} parent=11 // pred_fallthru
        _
      // Predicated region
      $region17: #{transformer_decoder_layer_kg_forward.3} parent=11 // pred_check
        %p367 = pneg %p153
      $region18: #{transformer_decoder_layer_kg_forward.3} parent=11 // pred_check_branch
        %369 = sbr.rel (%p367) target = $region20
      $region19: #{transformer_decoder_layer_kg_forward.3} parent=11 // pred_region
        _
      $region20: #{transformer_decoder_layer_kg_forward.3} parent=11 // pred_fallthru
        _
      // Predicated region
      $region21: #{transformer_decoder_layer_kg_forward.3} parent=11 // pred_check
        %p370 = pneg %p174
      $region22: #{transformer_decoder_layer_kg_forward.3} parent=11 // pred_check_branch
        %372 = sbr.rel (%p370) target = $region24
      $region23: #{transformer_decoder_layer_kg_forward.3} parent=11 // pred_region
        _
      $region24: #{transformer_decoder_layer_kg_forward.3} parent=11 // pred_fallthru
        _
      // Predicated region
      $region25: #{transformer_decoder_layer_kg_forward.3} parent=11 // pred_check
        %p373 = pneg %p195
      $region26: #{transformer_decoder_layer_kg_forward.3} parent=11 // pred_check_branch
        %375 = sbr.rel (%p373) target = $region28
      $region27: #{transformer_decoder_layer_kg_forward.3} parent=11 // pred_region
        _
      $region28: #{transformer_decoder_layer_kg_forward.3} parent=11 // pred_fallthru
        _
      // Predicated region
      $region29: #{transformer_decoder_layer_kg_forward.3} parent=11 // pred_check
        %p376 = pneg %p216
      $region30: #{transformer_decoder_layer_kg_forward.3} parent=11 // pred_check_branch
        %378 = sbr.rel (%p376) target = $region32
      $region31: #{transformer_decoder_layer_kg_forward.3} parent=11 // pred_region
        _
      $region32: #{transformer_decoder_layer_kg_forward.3} parent=11 // pred_fallthru
        _
      // Predicated region
      $region33: #{transformer_decoder_layer_kg_forward.3} parent=11 // pred_check
        %p379 = pneg %p237
      $region34: #{transformer_decoder_layer_kg_forward.3} parent=11 // pred_check_branch
        %381 = sbr.rel (%p379) target = $region36
      $region35: #{transformer_decoder_layer_kg_forward.3} parent=11 // pred_region
        _
      $region36: #{transformer_decoder_layer_kg_forward.3} parent=11 // pred_fallthru
        _
      // Predicated region
      $region37: #{transformer_decoder_layer_kg_forward.3} parent=11 // pred_check
        %p382 = pneg %p258
      $region38: #{transformer_decoder_layer_kg_forward.3} parent=11 // pred_check_branch
        %384 = sbr.rel (%p382) target = $region40
      $region39: #{transformer_decoder_layer_kg_forward.3} parent=11 // pred_region
        _
      $region40: #{transformer_decoder_layer_kg_forward.3} parent=11 // pred_fallthru
        _
      // Predicated region
      $region41: #{transformer_decoder_layer_kg_forward.3} parent=11 // pred_check
        %p385 = pneg %p279
      $region42: #{transformer_decoder_layer_kg_forward.3} parent=11 // pred_check_branch
        %387 = sbr.rel (%p385) target = $region44
      $region43: #{transformer_decoder_layer_kg_forward.3} parent=11 // pred_region
        _
      $region44: #{transformer_decoder_layer_kg_forward.3} parent=11 // pred_fallthru
        _
      // Predicated region
      $region45: #{transformer_decoder_layer_kg_forward.3} parent=11 // pred_check
        %p388 = pneg %p300
      $region46: #{transformer_decoder_layer_kg_forward.3} parent=11 // pred_check_branch
        %390 = sbr.rel (%p388) target = $region48
      $region47: #{transformer_decoder_layer_kg_forward.3} parent=11 // pred_region
        _
      $region48: #{transformer_decoder_layer_kg_forward.3} parent=11 // pred_fallthru
        _
      // Predicated region
      $region49: #{transformer_decoder_layer_kg_forward.3} parent=11 // pred_check
        %p391 = pneg %p321
      $region50: #{transformer_decoder_layer_kg_forward.3} parent=11 // pred_check_branch
        %393 = sbr.rel (%p391) target = $region52
      $region51: #{transformer_decoder_layer_kg_forward.3} parent=11 // pred_region
        _
      $region52: #{transformer_decoder_layer_kg_forward.3} parent=11 // pred_fallthru
        _
    $region12: #{transformer_decoder_layer_kg_forward.3} parent=5 // pred_fallthru
      _
    %p394 = scmp.lt.s32.totalorder %s19, 2
    // Predicated region
    $region53: #{transformer_decoder_layer_kg_forward.3} parent=5 // pred_check
      %p395 = pneg %p394
    $region54: #{transformer_decoder_layer_kg_forward.3} parent=5 // pred_check_branch
      %397 = sbr.rel (%p395) target = $region56
    $region55: #{transformer_decoder_layer_kg_forward.3} parent=5 // pred_region
      // Predicated region
      $region57: #{transformer_decoder_layer_kg_forward.3} parent=55 // pred_check
        %p398 = pneg %p53
      $region58: #{transformer_decoder_layer_kg_forward.3} parent=55 // pred_check_branch
        %400 = sbr.rel (%p398) target = $region60
      $region59: #{transformer_decoder_layer_kg_forward.3} parent=55 // pred_region
        %p401 = scmp.lt.s32.totalorder %s26, 1
        %s402 = scalar_select %p401, %s26, 1
        %p403 = scmp.lt.s32.totalorder %s27, 0
        %s404 = scalar_select %p403, %s27, 0
        %s405 = sadd.s32 %s404, %s402
        %s406 = smul.addr %s405, 8
        %s407 = scalar_lea.vmem %s0, %s406
      $region60: #{transformer_decoder_layer_kg_forward.3} parent=55 // pred_fallthru
        _
      // Predicated region
      $region61: #{transformer_decoder_layer_kg_forward.3} parent=55 // pred_check
        %p408 = pneg %p79
      $region62: #{transformer_decoder_layer_kg_forward.3} parent=55 // pred_check_branch
        %410 = sbr.rel (%p408) target = $region64
      $region63: #{transformer_decoder_layer_kg_forward.3} parent=55 // pred_region
        %p411 = scmp.lt.s32.totalorder %s26, 1
        %s412 = scalar_select %p411, %s26, 1
        %s413 = smul.addr %s412, 8
        %s414 = scalar_lea.vmem %s1, %s413
      $region64: #{transformer_decoder_layer_kg_forward.3} parent=55 // pred_fallthru
        _
      // Predicated region
      $region65: #{transformer_decoder_layer_kg_forward.3} parent=55 // pred_check
        %p415 = pneg %p105
      $region66: #{transformer_decoder_layer_kg_forward.3} parent=55 // pred_check_branch
        %417 = sbr.rel (%p415) target = $region68
      $region67: #{transformer_decoder_layer_kg_forward.3} parent=55 // pred_region
        %p418 = scmp.lt.s32.totalorder %s26, 1
        %s419 = scalar_select %p418, %s26, 1
        %s420 = scalar_lea.vmem %s2, %s419
      $region68: #{transformer_decoder_layer_kg_forward.3} parent=55 // pred_fallthru
        _
    $region56: #{transformer_decoder_layer_kg_forward.3} parent=5 // pred_fallthru
      _
    %p421 = scmp.le.s32.totalorder 1, %s19
    %p422 = scmp.lt.s32.totalorder %s19, 3
    %p423 = pnand %p421, %p422
    %p424 = pneg %p423
    // Predicated region
    $region69: #{transformer_decoder_layer_kg_forward.3} parent=5 // pred_check
      _
    $region70: #{transformer_decoder_layer_kg_forward.3} parent=5 // pred_check_branch
      %426 = sbr.rel (%p423) target = $region72
    $region71: #{transformer_decoder_layer_kg_forward.3} parent=5 // pred_region
      %s427 = ssub.s32 %s19, 1
      %p428 = scmp.lt.s32.totalorder %s28, 1
      %s429 = scalar_select %p428, %s28, 1
      %p430 = scmp.lt.s32.totalorder %s29, 0
      %s431 = scalar_select %p430, %s29, 0
      %s432 = sadd.s32 %s431, %s429
      %s433 = smul.addr %s432, 8
      %s434 = scalar_lea.vmem %s0, %s433
      %p435 = pneg %p59
      %p436 = pneg %p56
      %p437 = scmp.lt.s32.totalorder %s28, 1
      %s438 = scalar_select %p437, %s28, 1
      %s439 = smul.addr %s438, 8
      %s440 = scalar_lea.vmem %s1, %s439
      %p441 = pneg %p85
      %p442 = pneg %p82
      %p443 = scmp.lt.s32.totalorder %s28, 1
      %s444 = scalar_select %p443, %s28, 1
      %s445 = scalar_lea.vmem %s2, %s444
      %p446 = pneg %p111
      %p447 = pneg %p108
      %p448 = pneg %p132
      %p449 = pneg %p129
      %p450 = pneg %p153
      %p451 = pneg %p150
      %p452 = pneg %p174
      %p453 = pneg %p171
      %p454 = pneg %p195
      %p455 = pneg %p192
      %p456 = pneg %p216
      %p457 = pneg %p213
      %p458 = pneg %p237
      %p459 = pneg %p234
      %p460 = pneg %p258
      %p461 = pneg %p255
      %p462 = pneg %p279
      %p463 = pneg %p276
      %p464 = pneg %p300
      %p465 = pneg %p297
      %p466 = pneg %p321
      %p467 = pneg %p318
      %p468 = pneg %p349
      %p469 = pneg %p346
      %p470 = scmp.lt.s32.totalorder %s28, 1
      %s471 = scalar_select %p470, %s28, 1
      %p472 = scmp.lt.s32.totalorder %s29, 0
      %s473 = scalar_select %p472, %s29, 0
      %s474 = sadd.s32 %s473, %s471
      %s475 = smul.addr %s474, 8
      %s476 = scalar_lea.vmem %s13, %s475
      %p477 = scmp.lt.s32.totalorder %s28, 1
      %s478 = scalar_select %p477, %s28, 1
      %p479 = scmp.lt.s32.totalorder %s29, 0
      %s480 = scalar_select %p479, %s29, 0
      %s481 = sadd.s32 %s480, %s478
      %s482 = smul.addr %s481, 8
      %s483 = scalar_lea.vmem %s0, %s482
      %p484 = scmp.lt.s32.totalorder %s28, 1
      %s485 = scalar_select %p484, %s28, 1
      %s486 = smul.addr %s485, 8
      %s487 = scalar_lea.vmem %s1, %s486
      %p488 = scmp.lt.s32.totalorder %s28, 1
      %s489 = scalar_select %p488, %s28, 1
      %s490 = scalar_lea.vmem %s2, %s489
      %p491 = scmp.lt.s32.totalorder %s28, 1
      %s492 = scalar_select %p491, %s28, 1
      %p493 = scmp.lt.s32.totalorder %s29, 0
      %s494 = scalar_select %p493, %s29, 0
      %s495 = sadd.s32 %s494, %s492
      %s496 = smul.addr %s495, 8
      %s497 = scalar_lea.vmem %s13, %s496
      %v498 = vld [vmem:[%s483] sm:$0xff]
      %v499 = vld [vmem:[%s487] sm:$0xff]
      %v500 = vld [vmem:[%s3] sm:$0xff]
      %v501 = vld [vmem:[%s3 + $0x8] sm:$0xff]
      %v502 = vld [vmem:[%s3 + $0x10] sm:$0xff]
      %v503 = vld [vmem:[%s3 + $0x18] sm:$0xff]
      %v504 = vld [vmem:[%s4] sm:$0x1]
      %v506 = vlaneseq
      %v507 = vshrl.u32 %v506, 7
      %v508 = vsub.s32 0, %v507
      %v509 = vrot.slane %v504, %v508
      %vm511 = vcmask 261120
      %v513 = vsel %vm511, %v498, 0
      %515 = vmatprep.subr.mxu0 0.0
      %516 = vmatpush1.msra.mxu0 0.0
      %517 = vmatprep.subr.mxu0 0.0
      %518 = vmatpush1.msra.mxu0 0.0
      %519 = vmatprep.subr.mxu0 0.0
      %520 = vmatpush1.msra.mxu0 0.0
      %521 = vmatprep.subr.mxu0 0.0
      %522 = vmatpush1.msra.mxu0 0.0
      %523 = vmatprep.subr.mxu0 0.0
      %524 = vmatpush1.msra.mxu0 0.0
      %525 = vmatprep.subr.mxu0 0.0
      %526 = vmatpush1.msra.mxu0 0.0
      %527 = vmatprep.subr.mxu0 0.0
      %528 = vmatpush1.msra.mxu0 0.0
      %529 = vmatprep.subr.mxu0 0.0
      %530 = vmatpush1.msra.mxu0 0.0
      %531 = vmatprep.subr.mxu0 0.0
      %532 = vmatpush1.msra.mxu0 0.0
      %533 = vmatprep.subr.mxu0 0.0
      %534 = vmatpush1.msra.mxu0 0.0
      %535 = vmatprep.subr.mxu0 0.0
      %536 = vmatpush1.msra.mxu0 0.0
      %537 = vmatprep.subr.mxu0 0.0
      %538 = vmatpush1.msra.mxu0 0.0
      %539 = vmatprep.subr.mxu0 0.0
      %540 = vmatpush1.msra.mxu0 %v503
      %541 = vmatprep.subr.mxu0 0.0
      %542 = vmatpush1.msra.mxu0 %v502
      %543 = vmatprep.subr.mxu0 0.0
      %544 = vmatpush1.msra.mxu0 %v501
      %545 = vmatprep.subr.mxu0 0.0
      %546 = vmatpush1.msra.mxu0 %v500
      %547 = vmatprep.subr.mxu0 0.0
      %548 = vmatpush2.msra.mxu0 0.0
      %549 = vmatprep.subr.mxu0 0.0
      %550 = vmatpush2.msra.mxu0 0.0
      %551 = vmatprep.subr.mxu0 0.0
      %552 = vmatpush2.msra.mxu0 0.0
      %553 = vmatprep.subr.mxu0 0.0
      %554 = vmatpush2.msra.mxu0 0.0
      %555 = vmatprep.subr.mxu0 0.0
      %556 = vmatpush2.msra.mxu0 0.0
      %557 = vmatprep.subr.mxu0 0.0
      %558 = vmatpush2.msra.mxu0 0.0
      %559 = vmatprep.subr.mxu0 0.0
      %560 = vmatpush2.msra.mxu0 0.0
      %561 = vmatprep.subr.mxu0 0.0
      %562 = vmatpush2.msra.mxu0 0.0
      %563 = vmatprep.subr.mxu0 0.0
      %564 = vmatpush2.msra.mxu0 0.0
      %565 = vmatprep.subr.mxu0 0.0
      %566 = vmatpush2.msra.mxu0 0.0
      %567 = vmatprep.subr.mxu0 0.0
      %568 = vmatpush2.msra.mxu0 0.0
      %569 = vmatprep.subr.mxu0 0.0
      %570 = vmatpush2.msra.mxu0 0.0
      %571 = vmatprep.subr.mxu0 0.0
      %572 = vmatpush2.msra.mxu0 0.0
      %573 = vmatprep.subr.mxu0 0.0
      %574 = vmatpush2.msra.mxu0 0.0
      %575 = vmatprep.subr.mxu0 0.0
      %576 = vmatpush2.msra.mxu0 0.0
      %577 = vmatprep.subr.mxu0 0.0
      %578 = vmatpush2.msra.mxu0 0.0
      %579 = vmatprep.mubr.f32.mxu0 0.0
      %580 = vmatmul.mubr.f32.gmra.mxu0 %v513
      %v581 = vpop.f32.mrf.mxu0
      %v582 = vadd.f32 %v509, %v581
      %v583 = vpop.f32.mrf.mxu0
      %584 = vdwg.mxu0
      %v585 = vmul.f32 %v582, 0.25
      %v586 = vld [vmem:[%s5] sm:$0xff]
      %v587 = vld [vmem:[%s5 + $0x8] sm:$0xff]
      %v588 = vld [vmem:[%s5 + $0x10] sm:$0xff]
      %v589 = vld [vmem:[%s5 + $0x18] sm:$0xff]
      %v590 = vld [vmem:[%s6] sm:$0x1]
      %v592 = vlaneseq
      %v593 = vshrl.u32 %v592, 7
      %v594 = vsub.s32 0, %v593
      %v595 = vrot.slane %v590, %v594
      %v598 = vsel %vm511, %v499, 0
      %600 = vmatprep.subr.mxu0 0.0
      %601 = vmatpush1.msra.mxu0 0.0
      %602 = vmatprep.subr.mxu0 0.0
      %603 = vmatpush1.msra.mxu0 0.0
      %604 = vmatprep.subr.mxu0 0.0
      %605 = vmatpush1.msra.mxu0 0.0
      %606 = vmatprep.subr.mxu0 0.0
      %607 = vmatpush1.msra.mxu0 0.0
      %608 = vmatprep.subr.mxu0 0.0
      %609 = vmatpush1.msra.mxu0 0.0
      %610 = vmatprep.subr.mxu0 0.0
      %611 = vmatpush1.msra.mxu0 0.0
      %612 = vmatprep.subr.mxu0 0.0
      %613 = vmatpush1.msra.mxu0 0.0
      %614 = vmatprep.subr.mxu0 0.0
      %615 = vmatpush1.msra.mxu0 0.0
      %616 = vmatprep.subr.mxu0 0.0
      %617 = vmatpush1.msra.mxu0 0.0
      %618 = vmatprep.subr.mxu0 0.0
      %619 = vmatpush1.msra.mxu0 0.0
      %620 = vmatprep.subr.mxu0 0.0
      %621 = vmatpush1.msra.mxu0 0.0
      %622 = vmatprep.subr.mxu0 0.0
      %623 = vmatpush1.msra.mxu0 0.0
      %624 = vmatprep.subr.mxu0 0.0
      %625 = vmatpush1.msra.mxu0 %v589
      %626 = vmatprep.subr.mxu0 0.0
      %627 = vmatpush1.msra.mxu0 %v588
      %628 = vmatprep.subr.mxu0 0.0
      %629 = vmatpush1.msra.mxu0 %v587
      %630 = vmatprep.subr.mxu0 0.0
      %631 = vmatpush1.msra.mxu0 %v586
      %632 = vmatprep.subr.mxu0 0.0
      %633 = vmatpush2.msra.mxu0 0.0
      %634 = vmatprep.subr.mxu0 0.0
      %635 = vmatpush2.msra.mxu0 0.0
      %636 = vmatprep.subr.mxu0 0.0
      %637 = vmatpush2.msra.mxu0 0.0
      %638 = vmatprep.subr.mxu0 0.0
      %639 = vmatpush2.msra.mxu0 0.0
      %640 = vmatprep.subr.mxu0 0.0
      %641 = vmatpush2.msra.mxu0 0.0
      %642 = vmatprep.subr.mxu0 0.0
      %643 = vmatpush2.msra.mxu0 0.0
      %644 = vmatprep.subr.mxu0 0.0
      %645 = vmatpush2.msra.mxu0 0.0
      %646 = vmatprep.subr.mxu0 0.0
      %647 = vmatpush2.msra.mxu0 0.0
      %648 = vmatprep.subr.mxu0 0.0
      %649 = vmatpush2.msra.mxu0 0.0
      %650 = vmatprep.subr.mxu0 0.0
      %651 = vmatpush2.msra.mxu0 0.0
      %652 = vmatprep.subr.mxu0 0.0
      %653 = vmatpush2.msra.mxu0 0.0
      %654 = vmatprep.subr.mxu0 0.0
      %655 = vmatpush2.msra.mxu0 0.0
      %656 = vmatprep.subr.mxu0 0.0
      %657 = vmatpush2.msra.mxu0 0.0
      %658 = vmatprep.subr.mxu0 0.0
      %659 = vmatpush2.msra.mxu0 0.0
      %660 = vmatprep.subr.mxu0 0.0
      %661 = vmatpush2.msra.mxu0 0.0
      %662 = vmatprep.subr.mxu0 0.0
      %663 = vmatpush2.msra.mxu0 0.0
      %664 = vmatprep.mubr.f32.mxu0 0.0
      %665 = vmatmul.mubr.f32.gmra.mxu0 %v598
      %v666 = vpop.f32.mrf.mxu0
      %v667 = vadd.f32 %v595, %v666
      %v668 = vpop.f32.mrf.mxu0
      %669 = vdwg.mxu0
      %v670 = vld [vmem:[%s7] sm:$0xff]
      %v671 = vld [vmem:[%s7 + $0x8] sm:$0xff]
      %v672 = vld [vmem:[%s7 + $0x10] sm:$0xff]
      %v673 = vld [vmem:[%s7 + $0x18] sm:$0xff]
      %v674 = vld [vmem:[%s8] sm:$0x1]
      %v676 = vlaneseq
      %v677 = vshrl.u32 %v676, 7
      %v678 = vsub.s32 0, %v677
      %v679 = vrot.slane %v674, %v678
      %681 = vmatprep.subr.mxu0 0.0
      %682 = vmatpush1.msra.mxu0 0.0
      %683 = vmatprep.subr.mxu0 0.0
      %684 = vmatpush1.msra.mxu0 0.0
      %685 = vmatprep.subr.mxu0 0.0
      %686 = vmatpush1.msra.mxu0 0.0
      %687 = vmatprep.subr.mxu0 0.0
      %688 = vmatpush1.msra.mxu0 0.0
      %689 = vmatprep.subr.mxu0 0.0
      %690 = vmatpush1.msra.mxu0 0.0
      %691 = vmatprep.subr.mxu0 0.0
      %692 = vmatpush1.msra.mxu0 0.0
      %693 = vmatprep.subr.mxu0 0.0
      %694 = vmatpush1.msra.mxu0 0.0
      %695 = vmatprep.subr.mxu0 0.0
      %696 = vmatpush1.msra.mxu0 0.0
      %697 = vmatprep.subr.mxu0 0.0
      %698 = vmatpush1.msra.mxu0 0.0
      %699 = vmatprep.subr.mxu0 0.0
      %700 = vmatpush1.msra.mxu0 0.0
      %701 = vmatprep.subr.mxu0 0.0
      %702 = vmatpush1.msra.mxu0 0.0
      %703 = vmatprep.subr.mxu0 0.0
      %704 = vmatpush1.msra.mxu0 0.0
      %705 = vmatprep.subr.mxu0 0.0
      %706 = vmatpush1.msra.mxu0 %v673
      %707 = vmatprep.subr.mxu0 0.0
      %708 = vmatpush1.msra.mxu0 %v672
      %709 = vmatprep.subr.mxu0 0.0
      %710 = vmatpush1.msra.mxu0 %v671
      %711 = vmatprep.subr.mxu0 0.0
      %712 = vmatpush1.msra.mxu0 %v670
      %713 = vmatprep.subr.mxu0 0.0
      %714 = vmatpush2.msra.mxu0 0.0
      %715 = vmatprep.subr.mxu0 0.0
      %716 = vmatpush2.msra.mxu0 0.0
      %717 = vmatprep.subr.mxu0 0.0
      %718 = vmatpush2.msra.mxu0 0.0
      %719 = vmatprep.subr.mxu0 0.0
      %720 = vmatpush2.msra.mxu0 0.0
      %721 = vmatprep.subr.mxu0 0.0
      %722 = vmatpush2.msra.mxu0 0.0
      %723 = vmatprep.subr.mxu0 0.0
      %724 = vmatpush2.msra.mxu0 0.0
      %725 = vmatprep.subr.mxu0 0.0
      %726 = vmatpush2.msra.mxu0 0.0
      %727 = vmatprep.subr.mxu0 0.0
      %728 = vmatpush2.msra.mxu0 0.0
      %729 = vmatprep.subr.mxu0 0.0
      %730 = vmatpush2.msra.mxu0 0.0
      %731 = vmatprep.subr.mxu0 0.0
      %732 = vmatpush2.msra.mxu0 0.0
      %733 = vmatprep.subr.mxu0 0.0
      %734 = vmatpush2.msra.mxu0 0.0
      %735 = vmatprep.subr.mxu0 0.0
      %736 = vmatpush2.msra.mxu0 0.0
      %737 = vmatprep.subr.mxu0 0.0
      %738 = vmatpush2.msra.mxu0 0.0
      %739 = vmatprep.subr.mxu0 0.0
      %740 = vmatpush2.msra.mxu0 0.0
      %741 = vmatprep.subr.mxu0 0.0
      %742 = vmatpush2.msra.mxu0 0.0
      %743 = vmatprep.subr.mxu0 0.0
      %744 = vmatpush2.msra.mxu0 0.0
      %745 = vmatprep.mubr.f32.mxu0 0.0
      %746 = vmatmul.mubr.f32.gmra.mxu0 %v598
      %v747 = vpop.f32.mrf.mxu0
      %v748 = vadd.f32 %v679, %v747
      %v749 = vpop.f32.mrf.mxu0
      %750 = vdwg.mxu0
      %v751 = vld [vmem:[%s490] sm:$0x1]
      %vm752 = vcmp.gt.f32.partialorder %v751, 0.5
      %v753 = vsel %vm752, 1, 0
      %v754 = vlaneseq
      %v755 = vshrl.u32 %v754, 7
      %v756 = vsub.s32 0, %v755
      %v757 = vrot.slane %v753, %v756
      %vm758 = vcmp.eq.s32.totalorder %v757, 1
      %v759 = vlaneseq
      %v760 = vshrl.u32 %v759, 7
      %s761 = smul.u32 %s29, 8
      %v762 = vstv %s761
      %v763 = vadd.s32 %v760, %v762
      %v764 = vlaneseq
      %v765 = vand.u32 %v764, 127
      %vm766 = vcmp.ge.s32.totalorder %v763, %v765
      %vm767 = vmand %vm758, %vm766
      %vm768 = vcmask 130048
      %v770 = vsel %vm768, %v585, 0
      %v773 = vsel %vm768, %v667, 0
      %775 = vmatprep.subr.mxu0 0.0
      %776 = vmatpush1.xpose.msra.mxu0 0.0
      %777 = vmatprep.subr.mxu0 0.0
      %778 = vmatpush1.xpose.msra.mxu0 0.0
      %779 = vmatprep.subr.mxu0 0.0
      %780 = vmatpush1.xpose.msra.mxu0 0.0
      %781 = vmatprep.subr.mxu0 0.0
      %782 = vmatpush1.xpose.msra.mxu0 0.0
      %783 = vmatprep.subr.mxu0 0.0
      %784 = vmatpush1.xpose.msra.mxu0 0.0
      %785 = vmatprep.subr.mxu0 0.0
      %786 = vmatpush1.xpose.msra.mxu0 0.0
      %787 = vmatprep.subr.mxu0 0.0
      %788 = vmatpush1.xpose.msra.mxu0 0.0
      %789 = vmatprep.subr.mxu0 0.0
      %790 = vmatpush1.xpose.msra.mxu0 0.0
      %791 = vmatprep.subr.mxu0 0.0
      %792 = vmatpush1.xpose.msra.mxu0 0.0
      %793 = vmatprep.subr.mxu0 0.0
      %794 = vmatpush1.xpose.msra.mxu0 0.0
      %795 = vmatprep.subr.mxu0 0.0
      %796 = vmatpush1.xpose.msra.mxu0 0.0
      %797 = vmatprep.subr.mxu0 0.0
      %798 = vmatpush1.xpose.msra.mxu0 0.0
      %799 = vmatprep.subr.mxu0 0.0
      %800 = vmatpush1.xpose.msra.mxu0 0.0
      %801 = vmatprep.subr.mxu0 0.0
      %802 = vmatpush1.xpose.msra.mxu0 0.0
      %803 = vmatprep.subr.mxu0 0.0
      %804 = vmatpush1.xpose.msra.mxu0 0.0
      %805 = vmatprep.subr.mxu0 0.0
      %806 = vmatpush1.xpose.msra.mxu0 %v773
      %807 = vmatprep.subr.mxu0 0.0
      %808 = vmatpush2.xpose.msra.mxu0 0.0
      %809 = vmatprep.subr.mxu0 0.0
      %810 = vmatpush2.xpose.msra.mxu0 0.0
      %811 = vmatprep.subr.mxu0 0.0
      %812 = vmatpush2.xpose.msra.mxu0 0.0
      %813 = vmatprep.subr.mxu0 0.0
      %814 = vmatpush2.xpose.msra.mxu0 0.0
      %815 = vmatprep.subr.mxu0 0.0
      %816 = vmatpush2.xpose.msra.mxu0 0.0
      %817 = vmatprep.subr.mxu0 0.0
      %818 = vmatpush2.xpose.msra.mxu0 0.0
      %819 = vmatprep.subr.mxu0 0.0
      %820 = vmatpush2.xpose.msra.mxu0 0.0
      %821 = vmatprep.subr.mxu0 0.0
      %822 = vmatpush2.xpose.msra.mxu0 0.0
      %823 = vmatprep.subr.mxu0 0.0
      %824 = vmatpush2.xpose.msra.mxu0 0.0
      %825 = vmatprep.subr.mxu0 0.0
      %826 = vmatpush2.xpose.msra.mxu0 0.0
      %827 = vmatprep.subr.mxu0 0.0
      %828 = vmatpush2.xpose.msra.mxu0 0.0
      %829 = vmatprep.subr.mxu0 0.0
      %830 = vmatpush2.xpose.msra.mxu0 0.0
      %831 = vmatprep.subr.mxu0 0.0
      %832 = vmatpush2.xpose.msra.mxu0 0.0
      %833 = vmatprep.subr.mxu0 0.0
      %834 = vmatpush2.xpose.msra.mxu0 0.0
      %835 = vmatprep.subr.mxu0 0.0
      %836 = vmatpush2.xpose.msra.mxu0 0.0
      %837 = vmatprep.subr.mxu0 0.0
      %838 = vmatpush2.xpose.msra.mxu0 0.0
      %839 = vmatprep.mubr.f32.mxu0 0.0
      %840 = vmatmul.mubr.f32.gmra.mxu0 %v770
      %v841 = vpop.f32.mrf.mxu0
      %v842 = vadd.f32 0.0, %v841
      %v843 = vpop.f32.mrf.mxu0
      %844 = vdwg.mxu0
      %v845 = vsel %vm767, %v842, -1e+20
      %vm846 = vcmask 64512
      %v847 = vsel %vm846, %v845, -inf
      %848 = vmax.xlane.f32.xlu0 %v847
      %v849 = vpop.xlane.xlu0 %848
      %v850 = vsub.f32 %v845, %v849
      %v851 = vmul.f32 %v850, 1.442695
      %v852 = vpow.pop %v851
      %v853 = vsel %vm846, %v852, 0.0
      %854 = vadd.xlane.f32.xlu0 %v853
      %v855 = vpop.xlane.xlu0 %854
      %v856 = vrcp.pop %v855
      %v857 = vmul.f32 %v852, %v856
      %v859 = vsel %vm846, %v857, 0
      %861 = vmatprep.subr.mxu0 0.0
      %862 = vmatpush1.msra.mxu0 0.0
      %863 = vmatprep.subr.mxu0 0.0
      %864 = vmatpush1.msra.mxu0 0.0
      %865 = vmatprep.subr.mxu0 0.0
      %866 = vmatpush1.msra.mxu0 0.0
      %867 = vmatprep.subr.mxu0 0.0
      %868 = vmatpush1.msra.mxu0 0.0
      %869 = vmatprep.subr.mxu0 0.0
      %870 = vmatpush1.msra.mxu0 0.0
      %871 = vmatprep.subr.mxu0 0.0
      %872 = vmatpush1.msra.mxu0 0.0
      %873 = vmatprep.subr.mxu0 0.0
      %874 = vmatpush1.msra.mxu0 0.0
      %875 = vmatprep.subr.mxu0 0.0
      %876 = vmatpush1.msra.mxu0 0.0
      %877 = vmatprep.subr.mxu0 0.0
      %878 = vmatpush1.msra.mxu0 0.0
      %879 = vmatprep.subr.mxu0 0.0
      %880 = vmatpush1.msra.mxu0 0.0
      %881 = vmatprep.subr.mxu0 0.0
      %882 = vmatpush1.msra.mxu0 0.0
      %883 = vmatprep.subr.mxu0 0.0
      %884 = vmatpush1.msra.mxu0 0.0
      %885 = vmatprep.subr.mxu0 0.0
      %886 = vmatpush1.msra.mxu0 0.0
      %887 = vmatprep.subr.mxu0 0.0
      %888 = vmatpush1.msra.mxu0 0.0
      %889 = vmatprep.subr.mxu0 0.0
      %890 = vmatpush1.msra.mxu0 0.0
      %891 = vmatprep.subr.mxu0 0.0
      %892 = vmatpush1.msra.mxu0 %v748
      %893 = vmatprep.subr.mxu0 0.0
      %894 = vmatpush2.msra.mxu0 0.0
      %895 = vmatprep.subr.mxu0 0.0
      %896 = vmatpush2.msra.mxu0 0.0
      %897 = vmatprep.subr.mxu0 0.0
      %898 = vmatpush2.msra.mxu0 0.0
      %899 = vmatprep.subr.mxu0 0.0
      %900 = vmatpush2.msra.mxu0 0.0
      %901 = vmatprep.subr.mxu0 0.0
      %902 = vmatpush2.msra.mxu0 0.0
      %903 = vmatprep.subr.mxu0 0.0
      %904 = vmatpush2.msra.mxu0 0.0
      %905 = vmatprep.subr.mxu0 0.0
      %906 = vmatpush2.msra.mxu0 0.0
      %907 = vmatprep.subr.mxu0 0.0
      %908 = vmatpush2.msra.mxu0 0.0
      %909 = vmatprep.subr.mxu0 0.0
      %910 = vmatpush2.msra.mxu0 0.0
      %911 = vmatprep.subr.mxu0 0.0
      %912 = vmatpush2.msra.mxu0 0.0
      %913 = vmatprep.subr.mxu0 0.0
      %914 = vmatpush2.msra.mxu0 0.0
      %915 = vmatprep.subr.mxu0 0.0
      %916 = vmatpush2.msra.mxu0 0.0
      %917 = vmatprep.subr.mxu0 0.0
      %918 = vmatpush2.msra.mxu0 0.0
      %919 = vmatprep.subr.mxu0 0.0
      %920 = vmatpush2.msra.mxu0 0.0
      %921 = vmatprep.subr.mxu0 0.0
      %922 = vmatpush2.msra.mxu0 0.0
      %923 = vmatprep.subr.mxu0 0.0
      %924 = vmatpush2.msra.mxu0 0.0
      %925 = vmatprep.mubr.f32.mxu0 0.0
      %926 = vmatmul.mubr.f32.gmra.mxu0 %v859
      %v927 = vpop.f32.mrf.mxu0
      %v928 = vadd.f32 0.0, %v927
      %v929 = vpop.f32.mrf.mxu0
      %930 = vdwg.mxu0
      %931 = vrot.lane.b32.xlu0 %v585, 112
      %v932 = vpop.permute.xlu0 %931
      %933 = vrot.lane.b32.xlu0 %v667, 112
      %v934 = vpop.permute.xlu0 %933
      %v935 = vsel %vm768, %v932, 0
      %v937 = vsel %vm768, %v934, 0
      %939 = vmatprep.subr.mxu0 0.0
      %940 = vmatpush1.xpose.msra.mxu0 0.0
      %941 = vmatprep.subr.mxu0 0.0
      %942 = vmatpush1.xpose.msra.mxu0 0.0
      %943 = vmatprep.subr.mxu0 0.0
      %944 = vmatpush1.xpose.msra.mxu0 0.0
      %945 = vmatprep.subr.mxu0 0.0
      %946 = vmatpush1.xpose.msra.mxu0 0.0
      %947 = vmatprep.subr.mxu0 0.0
      %948 = vmatpush1.xpose.msra.mxu0 0.0
      %949 = vmatprep.subr.mxu0 0.0
      %950 = vmatpush1.xpose.msra.mxu0 0.0
      %951 = vmatprep.subr.mxu0 0.0
      %952 = vmatpush1.xpose.msra.mxu0 0.0
      %953 = vmatprep.subr.mxu0 0.0
      %954 = vmatpush1.xpose.msra.mxu0 0.0
      %955 = vmatprep.subr.mxu0 0.0
      %956 = vmatpush1.xpose.msra.mxu0 0.0
      %957 = vmatprep.subr.mxu0 0.0
      %958 = vmatpush1.xpose.msra.mxu0 0.0
      %959 = vmatprep.subr.mxu0 0.0
      %960 = vmatpush1.xpose.msra.mxu0 0.0
      %961 = vmatprep.subr.mxu0 0.0
      %962 = vmatpush1.xpose.msra.mxu0 0.0
      %963 = vmatprep.subr.mxu0 0.0
      %964 = vmatpush1.xpose.msra.mxu0 0.0
      %965 = vmatprep.subr.mxu0 0.0
      %966 = vmatpush1.xpose.msra.mxu0 0.0
      %967 = vmatprep.subr.mxu0 0.0
      %968 = vmatpush1.xpose.msra.mxu0 0.0
      %969 = vmatprep.subr.mxu0 0.0
      %970 = vmatpush1.xpose.msra.mxu0 %v937
      %971 = vmatprep.subr.mxu0 0.0
      %972 = vmatpush2.xpose.msra.mxu0 0.0
      %973 = vmatprep.subr.mxu0 0.0
      %974 = vmatpush2.xpose.msra.mxu0 0.0
      %975 = vmatprep.subr.mxu0 0.0
      %976 = vmatpush2.xpose.msra.mxu0 0.0
      %977 = vmatprep.subr.mxu0 0.0
      %978 = vmatpush2.xpose.msra.mxu0 0.0
      %979 = vmatprep.subr.mxu0 0.0
      %980 = vmatpush2.xpose.msra.mxu0 0.0
      %981 = vmatprep.subr.mxu0 0.0
      %982 = vmatpush2.xpose.msra.mxu0 0.0
      %983 = vmatprep.subr.mxu0 0.0
      %984 = vmatpush2.xpose.msra.mxu0 0.0
      %985 = vmatprep.subr.mxu0 0.0
      %986 = vmatpush2.xpose.msra.mxu0 0.0
      %987 = vmatprep.subr.mxu0 0.0
      %988 = vmatpush2.xpose.msra.mxu0 0.0
      %989 = vmatprep.subr.mxu0 0.0
      %990 = vmatpush2.xpose.msra.mxu0 0.0
      %991 = vmatprep.subr.mxu0 0.0
      %992 = vmatpush2.xpose.msra.mxu0 0.0
      %993 = vmatprep.subr.mxu0 0.0
      %994 = vmatpush2.xpose.msra.mxu0 0.0
      %995 = vmatprep.subr.mxu0 0.0
      %996 = vmatpush2.xpose.msra.mxu0 0.0
      %997 = vmatprep.subr.mxu0 0.0
      %998 = vmatpush2.xpose.msra.mxu0 0.0
      %999 = vmatprep.subr.mxu0 0.0
      %1000 = vmatpush2.xpose.msra.mxu0 0.0
      %1001 = vmatprep.subr.mxu0 0.0
      %1002 = vmatpush2.xpose.msra.mxu0 0.0
      %1003 = vmatprep.mubr.f32.mxu0 0.0
      %1004 = vmatmul.mubr.f32.gmra.mxu0 %v935
      %v1005 = vpop.f32.mrf.mxu0
      %v1006 = vadd.f32 0.0, %v1005
      %v1007 = vpop.f32.mrf.mxu0
      %1008 = vdwg.mxu0
      %v1009 = vsel %vm767, %v1006, -1e+20
      %v1010 = vsel %vm846, %v1009, -inf
      %1011 = vmax.xlane.f32.xlu0 %v1010
      %v1012 = vpop.xlane.xlu0 %1011
      %v1013 = vsub.f32 %v1009, %v1012
      %v1014 = vmul.f32 %v1013, 1.442695
      %v1015 = vpow.pop %v1014
      %v1016 = vsel %vm846, %v1015, 0.0
      %1017 = vadd.xlane.f32.xlu0 %v1016
      %v1018 = vpop.xlane.xlu0 %1017
      %v1019 = vrcp.pop %v1018
      %v1020 = vmul.f32 %v1015, %v1019
      %1022 = vrot.lane.b32.xlu0 %v748, 112
      %v1023 = vpop.permute.xlu0 %1022
      %v1026 = vsel %vm846, %v1020, 0
      %1028 = vmatprep.subr.mxu0 0.0
      %1029 = vmatpush1.msra.mxu0 0.0
      %1030 = vmatprep.subr.mxu0 0.0
      %1031 = vmatpush1.msra.mxu0 0.0
      %1032 = vmatprep.subr.mxu0 0.0
      %1033 = vmatpush1.msra.mxu0 0.0
      %1034 = vmatprep.subr.mxu0 0.0
      %1035 = vmatpush1.msra.mxu0 0.0
      %1036 = vmatprep.subr.mxu0 0.0
      %1037 = vmatpush1.msra.mxu0 0.0
      %1038 = vmatprep.subr.mxu0 0.0
      %1039 = vmatpush1.msra.mxu0 0.0
      %1040 = vmatprep.subr.mxu0 0.0
      %1041 = vmatpush1.msra.mxu0 0.0
      %1042 = vmatprep.subr.mxu0 0.0
      %1043 = vmatpush1.msra.mxu0 0.0
      %1044 = vmatprep.subr.mxu0 0.0
      %1045 = vmatpush1.msra.mxu0 0.0
      %1046 = vmatprep.subr.mxu0 0.0
      %1047 = vmatpush1.msra.mxu0 0.0
      %1048 = vmatprep.subr.mxu0 0.0
      %1049 = vmatpush1.msra.mxu0 0.0
      %1050 = vmatprep.subr.mxu0 0.0
      %1051 = vmatpush1.msra.mxu0 0.0
      %1052 = vmatprep.subr.mxu0 0.0
      %1053 = vmatpush1.msra.mxu0 0.0
      %1054 = vmatprep.subr.mxu0 0.0
      %1055 = vmatpush1.msra.mxu0 0.0
      %1056 = vmatprep.subr.mxu0 0.0
      %1057 = vmatpush1.msra.mxu0 0.0
      %1058 = vmatprep.subr.mxu0 0.0
      %1059 = vmatpush1.msra.mxu0 %v1023
      %1060 = vmatprep.subr.mxu0 0.0
      %1061 = vmatpush2.msra.mxu0 0.0
      %1062 = vmatprep.subr.mxu0 0.0
      %1063 = vmatpush2.msra.mxu0 0.0
      %1064 = vmatprep.subr.mxu0 0.0
      %1065 = vmatpush2.msra.mxu0 0.0
      %1066 = vmatprep.subr.mxu0 0.0
      %1067 = vmatpush2.msra.mxu0 0.0
      %1068 = vmatprep.subr.mxu0 0.0
      %1069 = vmatpush2.msra.mxu0 0.0
      %1070 = vmatprep.subr.mxu0 0.0
      %1071 = vmatpush2.msra.mxu0 0.0
      %1072 = vmatprep.subr.mxu0 0.0
      %1073 = vmatpush2.msra.mxu0 0.0
      %1074 = vmatprep.subr.mxu0 0.0
      %1075 = vmatpush2.msra.mxu0 0.0
      %1076 = vmatprep.subr.mxu0 0.0
      %1077 = vmatpush2.msra.mxu0 0.0
      %1078 = vmatprep.subr.mxu0 0.0
      %1079 = vmatpush2.msra.mxu0 0.0
      %1080 = vmatprep.subr.mxu0 0.0
      %1081 = vmatpush2.msra.mxu0 0.0
      %1082 = vmatprep.subr.mxu0 0.0
      %1083 = vmatpush2.msra.mxu0 0.0
      %1084 = vmatprep.subr.mxu0 0.0
      %1085 = vmatpush2.msra.mxu0 0.0
      %1086 = vmatprep.subr.mxu0 0.0
      %1087 = vmatpush2.msra.mxu0 0.0
      %1088 = vmatprep.subr.mxu0 0.0
      %1089 = vmatpush2.msra.mxu0 0.0
      %1090 = vmatprep.subr.mxu0 0.0
      %1091 = vmatpush2.msra.mxu0 0.0
      %1092 = vmatprep.mubr.f32.mxu0 0.0
      %1093 = vmatmul.mubr.f32.gmra.mxu0 %v1026
      %v1094 = vpop.f32.mrf.mxu0
      %v1095 = vadd.f32 0.0, %v1094
      %v1096 = vpop.f32.mrf.mxu0
      %1097 = vdwg.mxu0
      %1099 = vrot.lane.b32.xlu0 %v1095, 16
      %v1100 = vpop.permute.xlu0 %1099
      %v1102 = vsel %vm768, %v928, %v1100
      %v1103 = vld [vmem:[%s9] sm:$0xff]
      %v1104 = vld [vmem:[%s9 + $0x8] sm:$0xff]
      %v1105 = vld [vmem:[%s9 + $0x10] sm:$0xff]
      %v1106 = vld [vmem:[%s9 + $0x18] sm:$0xff]
      %v1107 = vld [vmem:[%s10] sm:$0x1]
      %v1109 = vlaneseq
      %v1110 = vshrl.u32 %v1109, 7
      %v1111 = vsub.s32 0, %v1110
      %v1112 = vrot.slane %v1107, %v1111
      %v1115 = vsel %vm511, %v1102, 0
      %1117 = vmatprep.subr.mxu0 0.0
      %1118 = vmatpush1.msra.mxu0 0.0
      %1119 = vmatprep.subr.mxu0 0.0
      %1120 = vmatpush1.msra.mxu0 0.0
      %1121 = vmatprep.subr.mxu0 0.0
      %1122 = vmatpush1.msra.mxu0 0.0
      %1123 = vmatprep.subr.mxu0 0.0
      %1124 = vmatpush1.msra.mxu0 0.0
      %1125 = vmatprep.subr.mxu0 0.0
      %1126 = vmatpush1.msra.mxu0 0.0
      %1127 = vmatprep.subr.mxu0 0.0
      %1128 = vmatpush1.msra.mxu0 0.0
      %1129 = vmatprep.subr.mxu0 0.0
      %1130 = vmatpush1.msra.mxu0 0.0
      %1131 = vmatprep.subr.mxu0 0.0
      %1132 = vmatpush1.msra.mxu0 0.0
      %1133 = vmatprep.subr.mxu0 0.0
      %1134 = vmatpush1.msra.mxu0 0.0
      %1135 = vmatprep.subr.mxu0 0.0
      %1136 = vmatpush1.msra.mxu0 0.0
      %1137 = vmatprep.subr.mxu0 0.0
      %1138 = vmatpush1.msra.mxu0 0.0
      %1139 = vmatprep.subr.mxu0 0.0
      %1140 = vmatpush1.msra.mxu0 0.0
      %1141 = vmatprep.subr.mxu0 0.0
      %1142 = vmatpush1.msra.mxu0 %v1106
      %1143 = vmatprep.subr.mxu0 0.0
      %1144 = vmatpush1.msra.mxu0 %v1105
      %1145 = vmatprep.subr.mxu0 0.0
      %1146 = vmatpush1.msra.mxu0 %v1104
      %1147 = vmatprep.subr.mxu0 0.0
      %1148 = vmatpush1.msra.mxu0 %v1103
      %1149 = vmatprep.subr.mxu0 0.0
      %1150 = vmatpush2.msra.mxu0 0.0
      %1151 = vmatprep.subr.mxu0 0.0
      %1152 = vmatpush2.msra.mxu0 0.0
      %1153 = vmatprep.subr.mxu0 0.0
      %1154 = vmatpush2.msra.mxu0 0.0
      %1155 = vmatprep.subr.mxu0 0.0
      %1156 = vmatpush2.msra.mxu0 0.0
      %1157 = vmatprep.subr.mxu0 0.0
      %1158 = vmatpush2.msra.mxu0 0.0
      %1159 = vmatprep.subr.mxu0 0.0
      %1160 = vmatpush2.msra.mxu0 0.0
      %1161 = vmatprep.subr.mxu0 0.0
      %1162 = vmatpush2.msra.mxu0 0.0
      %1163 = vmatprep.subr.mxu0 0.0
      %1164 = vmatpush2.msra.mxu0 0.0
      %1165 = vmatprep.subr.mxu0 0.0
      %1166 = vmatpush2.msra.mxu0 0.0
      %1167 = vmatprep.subr.mxu0 0.0
      %1168 = vmatpush2.msra.mxu0 0.0
      %1169 = vmatprep.subr.mxu0 0.0
      %1170 = vmatpush2.msra.mxu0 0.0
      %1171 = vmatprep.subr.mxu0 0.0
      %1172 = vmatpush2.msra.mxu0 0.0
      %1173 = vmatprep.subr.mxu0 0.0
      %1174 = vmatpush2.msra.mxu0 0.0
      %1175 = vmatprep.subr.mxu0 0.0
      %1176 = vmatpush2.msra.mxu0 0.0
      %1177 = vmatprep.subr.mxu0 0.0
      %1178 = vmatpush2.msra.mxu0 0.0
      %1179 = vmatprep.subr.mxu0 0.0
      %1180 = vmatpush2.msra.mxu0 0.0
      %1181 = vmatprep.mubr.f32.mxu0 0.0
      %1182 = vmatmul.mubr.f32.gmra.mxu0 %v1115
      %v1183 = vpop.f32.mrf.mxu0
      %v1184 = vadd.f32 %v1112, %v1183
      %v1185 = vpop.f32.mrf.mxu0
      %1186 = vdwg.mxu0
      %v1187 = vadd.f32 %v498, %v1184
      %v1188 = vsel %vm511, %v1187, 0.0
      %1189 = vadd.xlane.f32.xlu0 %v1188
      %v1190 = vpop.xlane.xlu0 %1189
      %v1191 = vrcp.pop 32.0
      %v1192 = vmul.f32 %v1190, %v1191
      %v1193 = vsub.f32 %v1187, %v1192
      %v1194 = vmul.f32 %v1193, %v1193
      %v1195 = vsel %vm511, %v1194, 0.0
      %1196 = vadd.xlane.f32.xlu0 %v1195
      %v1197 = vpop.xlane.xlu0 %1196
      %v1198 = vmul.f32 %v1197, %v1191
      %v1199 = vadd.f32 %v1198, 1e-05
      %v1200 = vrsqrt.pop %v1199
      %v1201 = vmul.f32 %v1193, %v1200
      %v1202 = vld [vmem:[%s11] sm:$0x1]
      %v1204 = vlaneseq
      %v1205 = vshrl.u32 %v1204, 7
      %v1206 = vsub.s32 0, %v1205
      %v1207 = vrot.slane %v1202, %v1206
      %v1209 = vmul.f32 %v1201, %v1207
      %v1210 = vld [vmem:[%s12] sm:$0x1]
      %v1212 = vlaneseq
      %v1213 = vshrl.u32 %v1212, 7
      %v1214 = vsub.s32 0, %v1213
      %v1215 = vrot.slane %v1210, %v1214
      %v1217 = vadd.f32 %v1209, %v1215
      %1218 = vst.msk [vmem:[%s497] sm:$0xff] %vm511, %v1217
      %p1219 = scmp.lt.s32.totalorder %s28, 1
      %s1220 = scalar_select %p1219, %s28, 1
      %p1221 = scmp.lt.s32.totalorder %s29, 0
      %s1222 = scalar_select %p1221, %s29, 0
      %s1223 = sadd.s32 %s1222, %s1220
      %s1224 = smul.addr %s1223, 8
      %s1225 = scalar_lea.vmem %s13, %s1224
      // Predicated region
      $region73: #{transformer_decoder_layer_kg_forward.3} parent=71 // pred_check
        %p1226 = pneg %p346
      $region74: #{transformer_decoder_layer_kg_forward.3} parent=71 // pred_check_branch
        %1228 = sbr.rel (%p1226) target = $region76
      $region75: #{transformer_decoder_layer_kg_forward.3} parent=71 // pred_region
        _
      $region76: #{transformer_decoder_layer_kg_forward.3} parent=71 // pred_fallthru
        _
    $region72: #{transformer_decoder_layer_kg_forward.3} parent=5 // pred_fallthru
      _
    %p1229 = scmp.le.s32.totalorder 2, %s19
    // Predicated region
    $region77: #{transformer_decoder_layer_kg_forward.3} parent=5 // pred_check
      %p1230 = pneg %p1229
    $region78: #{transformer_decoder_layer_kg_forward.3} parent=5 // pred_check_branch
      %1232 = sbr.rel (%p1230) target = $region80
    $region79: #{transformer_decoder_layer_kg_forward.3} parent=5 // pred_region
      %s1233 = ssub.s32 %s19, 2
      // Predicated region
      $region81: #{transformer_decoder_layer_kg_forward.3} parent=79 // pred_check
        %p1234 = pneg %p352
      $region82: #{transformer_decoder_layer_kg_forward.3} parent=79 // pred_check_branch
        %1236 = sbr.rel (%p1234) target = $region84
      $region83: #{transformer_decoder_layer_kg_forward.3} parent=79 // pred_region
        %p1237 = scmp.lt.s32.totalorder %s30, 1
        %s1238 = scalar_select %p1237, %s30, 1
        %p1239 = scmp.lt.s32.totalorder %s31, 0
        %s1240 = scalar_select %p1239, %s31, 0
        %s1241 = sadd.s32 %s1240, %s1238
        %s1242 = smul.addr %s1241, 8
        %s1243 = scalar_lea.vmem %s13, %s1242
      $region84: #{transformer_decoder_layer_kg_forward.3} parent=79 // pred_fallthru
        _
    $region80: #{transformer_decoder_layer_kg_forward.3} parent=5 // pred_fallthru
      _
  $region6: #{transformer_decoder_layer_kg_forward.3} parent=0 // loop_footer
    %s23 = sadd.s32 1, %s19
  $region7: #{transformer_decoder_layer_kg_forward.3} parent=0 // loop_footer_branch
    %18 = sbr.rel target = $region3
  $region8: #{transformer_decoder_layer_kg_forward.3} parent=0 // loop_exit
    _

// kernel: transformer_decoder_layer_kg_forward.4
$region0: #{transformer_decoder_layer_kg_forward.4}
  #allocation0 [shape = 'u32[]', space=smem, size = 0x4, offset = 0x4, fixed_abs, tag = 'smem constant byte address 0x4 - core index']
  #allocation1 [shape = 'u32[144,128]{1,0:T(1,128)}', space=vmem, size = 0x12000, scoped, tag = 'internal scratch']
  %s0 = inlined_call_operand.vmem [shape: f32[2,8,32], index: 0, kind: input, shape index: {}]
  %s1 = inlined_call_operand.vmem [shape: f32[2,12,32], index: 1, kind: input, shape index: {}]
  %s2 = inlined_call_operand.vmem [shape: f32[2,1,12], index: 2, kind: input, shape index: {}]
  %s3 = inlined_call_operand.vmem [shape: f32[32,32], index: 3, kind: input, shape index: {}]
  %s4 = inlined_call_operand.vmem [shape: f32[1,32], index: 4, kind: input, shape index: {}]
  %s5 = inlined_call_operand.vmem [shape: f32[32,32], index: 5, kind: input, shape index: {}]
  %s6 = inlined_call_operand.vmem [shape: f32[1,32], index: 6, kind: input, shape index: {}]
  %s7 = inlined_call_operand.vmem [shape: f32[32,32], index: 7, kind: input, shape index: {}]
  %s8 = inlined_call_operand.vmem [shape: f32[1,32], index: 8, kind: input, shape index: {}]
  %s9 = inlined_call_operand.vmem [shape: f32[32,32], index: 9, kind: input, shape index: {}]
  %s10 = inlined_call_operand.vmem [shape: f32[1,32], index: 10, kind: input, shape index: {}]
  %s11 = inlined_call_operand.vmem [shape: f32[1,32], index: 11, kind: input, shape index: {}]
  %s12 = inlined_call_operand.vmem [shape: f32[1,32], index: 12, kind: input, shape index: {}]
  %s13 = inlined_call_operand.vmem [shape: f32[2,8,32], index: 13, kind: output, shape index: {}]
  %s14 = sld [smem:[#allocation0]]
  $region85: #{transformer_decoder_layer_kg_forward.4} parent=0
    _
  %s16 = ssub.s32 1, %s14
  %s17 = scalar_select 0, %s16, %s14
  loop: start=0, step=1, limit=4
  $region2: #{transformer_decoder_layer_kg_forward.4} parent=0 // loop_pre_header
    _
  $region3: #{transformer_decoder_layer_kg_forward.4} parent=0 // loop_header
    %s19 = sphi 0, %s23
    %p20 = scmp.ge.s32.totalorder %s19, 4
    %s26 = sphi 0, %s38
    %s27 = sphi 0, %s34
    %s28 = sphi 0, %s26
    %s29 = sphi 0, %s27
    %s30 = sphi 0, %s28
    %s31 = sphi 0, %s29
    %s43 = sphi 0, %s45
    %s46 = sphi 0, %s43
    %s47 = sphi 0, %s46
    %s63 = sphi 0, %s47
    %s69 = sphi 0, %s71
    %s72 = sphi 0, %s69
    %s73 = sphi 0, %s72
    %s89 = sphi 0, %s73
    %s95 = sphi 0, %s97
    %s98 = sphi 0, %s95
    %s99 = sphi 0, %s98
    %s115 = sphi 0, %s99
    %s119 = sphi 0, %s119
    %s121 = sphi 0, %s119
    %s122 = sphi 0, %s121
    %s136 = sphi 0, %s122
    %s140 = sphi 0, %s140
    %s142 = sphi 0, %s140
    %s143 = sphi 0, %s142
    %s157 = sphi 0, %s143
    %s161 = sphi 0, %s161
    %s163 = sphi 0, %s161
    %s164 = sphi 0, %s163
    %s178 = sphi 0, %s164
    %s182 = sphi 0, %s182
    %s184 = sphi 0, %s182
    %s185 = sphi 0, %s184
    %s199 = sphi 0, %s185
    %s203 = sphi 0, %s203
    %s205 = sphi 0, %s203
    %s206 = sphi 0, %s205
    %s220 = sphi 0, %s206
    %s224 = sphi 0, %s224
    %s226 = sphi 0, %s224
    %s227 = sphi 0, %s226
    %s241 = sphi 0, %s227
    %s245 = sphi 0, %s245
    %s247 = sphi 0, %s245
    %s248 = sphi 0, %s247
    %s262 = sphi 0, %s248
    %s266 = sphi 0, %s266
    %s268 = sphi 0, %s266
    %s269 = sphi 0, %s268
    %s283 = sphi 0, %s269
    %s287 = sphi 0, %s287
    %s289 = sphi 0, %s287
    %s290 = sphi 0, %s289
    %s304 = sphi 0, %s290
    %s308 = sphi 0, %s308
    %s310 = sphi 0, %s308
    %s311 = sphi 0, %s310
    %s325 = sphi 0, %s311
    %s333 = sphi 0, %s335
    %s336 = sphi 0, %s333
    %s337 = sphi 0, %s336
    %s353 = sphi 0, %s337
  $region4: #{transformer_decoder_layer_kg_forward.4} parent=0 // loop_header_branch
    %22 = sbr.rel (%p20) target = $region8
  $region5: #{transformer_decoder_layer_kg_forward.4} parent=0 // loop_body
    %s24 = ssub.s32 %s19, 1
    %s25 = ssub.s32 %s19, 2
    %s32 = sadd.s32 1, %s27
    %p33 = scmp.ge.s32.totalorder %s32, 1
    %s34 = scalar_select %p33, 0, %s32
    %s35 = sadd.s32 1, %s26
    %s36 = scalar_select %p33, %s35, %s26
    %p37 = scmp.ge.s32.totalorder %s36, 2
    %s38 = scalar_select %p37, 0, %s36
    %s39 = ssub.s32 %s26, %s38
    %s40 = ssub.s32 %s27, %s34
    %s41 = sor.u32 %s39, %s40
    %p42 = scmp.eq.s32.totalorder %s41, 0
    %s44 = sadd.s32 %s43, 1
    %s45 = scalar_select %p42, %s43, %s44
    %p48 = pneg %p42
    %p49 = scmp.eq.s32.totalorder %s19, 1
    %p50 = por %p48, %p49
    %p51 = scmp.ne.s32.totalorder %s43, %s46
    %p52 = scmp.eq.s32.totalorder %s19, 0
    %p53 = por %p51, %p52
    %p54 = scmp.ne.s32.totalorder %s43, %s46
    %p55 = scmp.eq.s32.totalorder %s24, 1
    %p56 = por %p54, %p55
    %p57 = scmp.ne.s32.totalorder %s46, %s47
    %p58 = scmp.eq.s32.totalorder %s24, 0
    %p59 = por %p57, %p58
    %p60 = scmp.ne.s32.totalorder %s46, %s47
    %p61 = scmp.eq.s32.totalorder %s25, 1
    %p62 = por %p60, %p61
    %p64 = scmp.ne.s32.totalorder %s47, %s63
    %p65 = scmp.eq.s32.totalorder %s25, 0
    %p66 = por %p64, %p65
    %s67 = ssub.s32 %s26, %s38
    %p68 = scmp.eq.s32.totalorder %s67, 0
    %s70 = sadd.s32 %s69, 1
    %s71 = scalar_select %p68, %s69, %s70
    %p74 = pneg %p68
    %p75 = scmp.eq.s32.totalorder %s19, 1
    %p76 = por %p74, %p75
    %p77 = scmp.ne.s32.totalorder %s69, %s72
    %p78 = scmp.eq.s32.totalorder %s19, 0
    %p79 = por %p77, %p78
    %p80 = scmp.ne.s32.totalorder %s69, %s72
    %p81 = scmp.eq.s32.totalorder %s24, 1
    %p82 = por %p80, %p81
    %p83 = scmp.ne.s32.totalorder %s72, %s73
    %p84 = scmp.eq.s32.totalorder %s24, 0
    %p85 = por %p83, %p84
    %p86 = scmp.ne.s32.totalorder %s72, %s73
    %p87 = scmp.eq.s32.totalorder %s25, 1
    %p88 = por %p86, %p87
    %p90 = scmp.ne.s32.totalorder %s73, %s89
    %p91 = scmp.eq.s32.totalorder %s25, 0
    %p92 = por %p90, %p91
    %s93 = ssub.s32 %s26, %s38
    %p94 = scmp.eq.s32.totalorder %s93, 0
    %s96 = sadd.s32 %s95, 1
    %s97 = scalar_select %p94, %s95, %s96
    %p100 = pneg %p94
    %p101 = scmp.eq.s32.totalorder %s19, 1
    %p102 = por %p100, %p101
    %p103 = scmp.ne.s32.totalorder %s95, %s98
    %p104 = scmp.eq.s32.totalorder %s19, 0
    %p105 = por %p103, %p104
    %p106 = scmp.ne.s32.totalorder %s95, %s98
    %p107 = scmp.eq.s32.totalorder %s24, 1
    %p108 = por %p106, %p107
    %p109 = scmp.ne.s32.totalorder %s98, %s99
    %p110 = scmp.eq.s32.totalorder %s24, 0
    %p111 = por %p109, %p110
    %p112 = scmp.ne.s32.totalorder %s98, %s99
    %p113 = scmp.eq.s32.totalorder %s25, 1
    %p114 = por %p112, %p113
    %p116 = scmp.ne.s32.totalorder %s99, %s115
    %p117 = scmp.eq.s32.totalorder %s25, 0
    %p118 = por %p116, %p117
    %s120 = sadd.s32 %s119, 1
    %p123 = scmp.eq.s32.totalorder %s19, 1
    %p124 = scmp.ne.s32.totalorder %s119, %s121
    %p125 = scmp.eq.s32.totalorder %s19, 0
    %p126 = por %p124, %p125
    %p127 = scmp.ne.s32.totalorder %s119, %s121
    %p128 = scmp.eq.s32.totalorder %s24, 1
    %p129 = por %p127, %p128
    %p130 = scmp.ne.s32.totalorder %s121, %s122
    %p131 = scmp.eq.s32.totalorder %s24, 0
    %p132 = por %p130, %p131
    %p133 = scmp.ne.s32.totalorder %s121, %s122
    %p134 = scmp.eq.s32.totalorder %s25, 1
    %p135 = por %p133, %p134
    %p137 = scmp.ne.s32.totalorder %s122, %s136
    %p138 = scmp.eq.s32.totalorder %s25, 0
    %p139 = por %p137, %p138
    %s141 = sadd.s32 %s140, 1
    %p144 = scmp.eq.s32.totalorder %s19, 1
    %p145 = scmp.ne.s32.totalorder %s140, %s142
    %p146 = scmp.eq.s32.totalorder %s19, 0
    %p147 = por %p145, %p146
    %p148 = scmp.ne.s32.totalorder %s140, %s142
    %p149 = scmp.eq.s32.totalorder %s24, 1
    %p150 = por %p148, %p149
    %p151 = scmp.ne.s32.totalorder %s142, %s143
    %p152 = scmp.eq.s32.totalorder %s24, 0
    %p153 = por %p151, %p152
    %p154 = scmp.ne.s32.totalorder %s142, %s143
    %p155 = scmp.eq.s32.totalorder %s25, 1
    %p156 = por %p154, %p155
    %p158 = scmp.ne.s32.totalorder %s143, %s157
    %p159 = scmp.eq.s32.totalorder %s25, 0
    %p160 = por %p158, %p159
    %s162 = sadd.s32 %s161, 1
    %p165 = scmp.eq.s32.totalorder %s19, 1
    %p166 = scmp.ne.s32.totalorder %s161, %s163
    %p167 = scmp.eq.s32.totalorder %s19, 0
    %p168 = por %p166, %p167
    %p169 = scmp.ne.s32.totalorder %s161, %s163
    %p170 = scmp.eq.s32.totalorder %s24, 1
    %p171 = por %p169, %p170
    %p172 = scmp.ne.s32.totalorder %s163, %s164
    %p173 = scmp.eq.s32.totalorder %s24, 0
    %p174 = por %p172, %p173
    %p175 = scmp.ne.s32.totalorder %s163, %s164
    %p176 = scmp.eq.s32.totalorder %s25, 1
    %p177 = por %p175, %p176
    %p179 = scmp.ne.s32.totalorder %s164, %s178
    %p180 = scmp.eq.s32.totalorder %s25, 0
    %p181 = por %p179, %p180
    %s183 = sadd.s32 %s182, 1
    %p186 = scmp.eq.s32.totalorder %s19, 1
    %p187 = scmp.ne.s32.totalorder %s182, %s184
    %p188 = scmp.eq.s32.totalorder %s19, 0
    %p189 = por %p187, %p188
    %p190 = scmp.ne.s32.totalorder %s182, %s184
    %p191 = scmp.eq.s32.totalorder %s24, 1
    %p192 = por %p190, %p191
    %p193 = scmp.ne.s32.totalorder %s184, %s185
    %p194 = scmp.eq.s32.totalorder %s24, 0
    %p195 = por %p193, %p194
    %p196 = scmp.ne.s32.totalorder %s184, %s185
    %p197 = scmp.eq.s32.totalorder %s25, 1
    %p198 = por %p196, %p197
    %p200 = scmp.ne.s32.totalorder %s185, %s199
    %p201 = scmp.eq.s32.totalorder %s25, 0
    %p202 = por %p200, %p201
    %s204 = sadd.s32 %s203, 1
    %p207 = scmp.eq.s32.totalorder %s19, 1
    %p208 = scmp.ne.s32.totalorder %s203, %s205
    %p209 = scmp.eq.s32.totalorder %s19, 0
    %p210 = por %p208, %p209
    %p211 = scmp.ne.s32.totalorder %s203, %s205
    %p212 = scmp.eq.s32.totalorder %s24, 1
    %p213 = por %p211, %p212
    %p214 = scmp.ne.s32.totalorder %s205, %s206
    %p215 = scmp.eq.s32.totalorder %s24, 0
    %p216 = por %p214, %p215
    %p217 = scmp.ne.s32.totalorder %s205, %s206
    %p218 = scmp.eq.s32.totalorder %s25, 1
    %p219 = por %p217, %p218
    %p221 = scmp.ne.s32.totalorder %s206, %s220
    %p222 = scmp.eq.s32.totalorder %s25, 0
    %p223 = por %p221, %p222
    %s225 = sadd.s32 %s224, 1
    %p228 = scmp.eq.s32.totalorder %s19, 1
    %p229 = scmp.ne.s32.totalorder %s224, %s226
    %p230 = scmp.eq.s32.totalorder %s19, 0
    %p231 = por %p229, %p230
    %p232 = scmp.ne.s32.totalorder %s224, %s226
    %p233 = scmp.eq.s32.totalorder %s24, 1
    %p234 = por %p232, %p233
    %p235 = scmp.ne.s32.totalorder %s226, %s227
    %p236 = scmp.eq.s32.totalorder %s24, 0
    %p237 = por %p235, %p236
    %p238 = scmp.ne.s32.totalorder %s226, %s227
    %p239 = scmp.eq.s32.totalorder %s25, 1
    %p240 = por %p238, %p239
    %p242 = scmp.ne.s32.totalorder %s227, %s241
    %p243 = scmp.eq.s32.totalorder %s25, 0
    %p244 = por %p242, %p243
    %s246 = sadd.s32 %s245, 1
    %p249 = scmp.eq.s32.totalorder %s19, 1
    %p250 = scmp.ne.s32.totalorder %s245, %s247
    %p251 = scmp.eq.s32.totalorder %s19, 0
    %p252 = por %p250, %p251
    %p253 = scmp.ne.s32.totalorder %s245, %s247
    %p254 = scmp.eq.s32.totalorder %s24, 1
    %p255 = por %p253, %p254
    %p256 = scmp.ne.s32.totalorder %s247, %s248
    %p257 = scmp.eq.s32.totalorder %s24, 0
    %p258 = por %p256, %p257
    %p259 = scmp.ne.s32.totalorder %s247, %s248
    %p260 = scmp.eq.s32.totalorder %s25, 1
    %p261 = por %p259, %p260
    %p263 = scmp.ne.s32.totalorder %s248, %s262
    %p264 = scmp.eq.s32.totalorder %s25, 0
    %p265 = por %p263, %p264
    %s267 = sadd.s32 %s266, 1
    %p270 = scmp.eq.s32.totalorder %s19, 1
    %p271 = scmp.ne.s32.totalorder %s266, %s268
    %p272 = scmp.eq.s32.totalorder %s19, 0
    %p273 = por %p271, %p272
    %p274 = scmp.ne.s32.totalorder %s266, %s268
    %p275 = scmp.eq.s32.totalorder %s24, 1
    %p276 = por %p274, %p275
    %p277 = scmp.ne.s32.totalorder %s268, %s269
    %p278 = scmp.eq.s32.totalorder %s24, 0
    %p279 = por %p277, %p278
    %p280 = scmp.ne.s32.totalorder %s268, %s269
    %p281 = scmp.eq.s32.totalorder %s25, 1
    %p282 = por %p280, %p281
    %p284 = scmp.ne.s32.totalorder %s269, %s283
    %p285 = scmp.eq.s32.totalorder %s25, 0
    %p286 = por %p284, %p285
    %s288 = sadd.s32 %s287, 1
    %p291 = scmp.eq.s32.totalorder %s19, 1
    %p292 = scmp.ne.s32.totalorder %s287, %s289
    %p293 = scmp.eq.s32.totalorder %s19, 0
    %p294 = por %p292, %p293
    %p295 = scmp.ne.s32.totalorder %s287, %s289
    %p296 = scmp.eq.s32.totalorder %s24, 1
    %p297 = por %p295, %p296
    %p298 = scmp.ne.s32.totalorder %s289, %s290
    %p299 = scmp.eq.s32.totalorder %s24, 0
    %p300 = por %p298, %p299
    %p301 = scmp.ne.s32.totalorder %s289, %s290
    %p302 = scmp.eq.s32.totalorder %s25, 1
    %p303 = por %p301, %p302
    %p305 = scmp.ne.s32.totalorder %s290, %s304
    %p306 = scmp.eq.s32.totalorder %s25, 0
    %p307 = por %p305, %p306
    %s309 = sadd.s32 %s308, 1
    %p312 = scmp.eq.s32.totalorder %s19, 1
    %p313 = scmp.ne.s32.totalorder %s308, %s310
    %p314 = scmp.eq.s32.totalorder %s19, 0
    %p315 = por %p313, %p314
    %p316 = scmp.ne.s32.totalorder %s308, %s310
    %p317 = scmp.eq.s32.totalorder %s24, 1
    %p318 = por %p316, %p317
    %p319 = scmp.ne.s32.totalorder %s310, %s311
    %p320 = scmp.eq.s32.totalorder %s24, 0
    %p321 = por %p319, %p320
    %p322 = scmp.ne.s32.totalorder %s310, %s311
    %p323 = scmp.eq.s32.totalorder %s25, 1
    %p324 = por %p322, %p323
    %p326 = scmp.ne.s32.totalorder %s311, %s325
    %p327 = scmp.eq.s32.totalorder %s25, 0
    %p328 = por %p326, %p327
    %s329 = ssub.s32 %s26, %s38
    %s330 = ssub.s32 %s27, %s34
    %s331 = sor.u32 %s329, %s330
    %p332 = scmp.eq.s32.totalorder %s331, 0
    %s334 = sadd.s32 %s333, 1
    %s335 = scalar_select %p332, %s333, %s334
    %p338 = pneg %p332
    %p339 = scmp.eq.s32.totalorder %s19, 1
    %p340 = por %p338, %p339
    %p341 = scmp.ne.s32.totalorder %s333, %s336
    %p342 = scmp.eq.s32.totalorder %s19, 0
    %p343 = por %p341, %p342
    %p344 = scmp.ne.s32.totalorder %s333, %s336
    %p345 = scmp.eq.s32.totalorder %s24, 1
    %p346 = por %p344, %p345
    %p347 = scmp.ne.s32.totalorder %s336, %s337
    %p348 = scmp.eq.s32.totalorder %s24, 0
    %p349 = por %p347, %p348
    %p350 = scmp.ne.s32.totalorder %s336, %s337
    %p351 = scmp.eq.s32.totalorder %s25, 1
    %p352 = por %p350, %p351
    %p354 = scmp.ne.s32.totalorder %s337, %s353
    %p355 = scmp.eq.s32.totalorder %s25, 0
    %p356 = por %p354, %p355
    %p357 = scmp.le.s32.totalorder 1, %s19
    %p358 = scmp.lt.s32.totalorder %s19, 3
    %p359 = pnand %p357, %p358
    %p360 = pneg %p359
    // Predicated region
    $region9: #{transformer_decoder_layer_kg_forward.4} parent=5 // pred_check
      _
    $region10: #{transformer_decoder_layer_kg_forward.4} parent=5 // pred_check_branch
      %362 = sbr.rel (%p359) target = $region12
    $region11: #{transformer_decoder_layer_kg_forward.4} parent=5 // pred_region
      %s363 = ssub.s32 %s19, 1
      // Predicated region
      $region13: #{transformer_decoder_layer_kg_forward.4} parent=11 // pred_check
        %p364 = pneg %p132
      $region14: #{transformer_decoder_layer_kg_forward.4} parent=11 // pred_check_branch
        %366 = sbr.rel (%p364) target = $region16
      $region15: #{transformer_decoder_layer_kg_forward.4} parent=11 // pred_region
        _
      $region16: #{transformer_decoder_layer_kg_forward.4} parent=11 // pred_fallthru
        _
      // Predicated region
      $region17: #{transformer_decoder_layer_kg_forward.4} parent=11 // pred_check
        %p367 = pneg %p153
      $region18: #{transformer_decoder_layer_kg_forward.4} parent=11 // pred_check_branch
        %369 = sbr.rel (%p367) target = $region20
      $region19: #{transformer_decoder_layer_kg_forward.4} parent=11 // pred_region
        _
      $region20: #{transformer_decoder_layer_kg_forward.4} parent=11 // pred_fallthru
        _
      // Predicated region
      $region21: #{transformer_decoder_layer_kg_forward.4} parent=11 // pred_check
        %p370 = pneg %p174
      $region22: #{transformer_decoder_layer_kg_forward.4} parent=11 // pred_check_branch
        %372 = sbr.rel (%p370) target = $region24
      $region23: #{transformer_decoder_layer_kg_forward.4} parent=11 // pred_region
        _
      $region24: #{transformer_decoder_layer_kg_forward.4} parent=11 // pred_fallthru
        _
      // Predicated region
      $region25: #{transformer_decoder_layer_kg_forward.4} parent=11 // pred_check
        %p373 = pneg %p195
      $region26: #{transformer_decoder_layer_kg_forward.4} parent=11 // pred_check_branch
        %375 = sbr.rel (%p373) target = $region28
      $region27: #{transformer_decoder_layer_kg_forward.4} parent=11 // pred_region
        _
      $region28: #{transformer_decoder_layer_kg_forward.4} parent=11 // pred_fallthru
        _
      // Predicated region
      $region29: #{transformer_decoder_layer_kg_forward.4} parent=11 // pred_check
        %p376 = pneg %p216
      $region30: #{transformer_decoder_layer_kg_forward.4} parent=11 // pred_check_branch
        %378 = sbr.rel (%p376) target = $region32
      $region31: #{transformer_decoder_layer_kg_forward.4} parent=11 // pred_region
        _
      $region32: #{transformer_decoder_layer_kg_forward.4} parent=11 // pred_fallthru
        _
      // Predicated region
      $region33: #{transformer_decoder_layer_kg_forward.4} parent=11 // pred_check
        %p379 = pneg %p237
      $region34: #{transformer_decoder_layer_kg_forward.4} parent=11 // pred_check_branch
        %381 = sbr.rel (%p379) target = $region36
      $region35: #{transformer_decoder_layer_kg_forward.4} parent=11 // pred_region
        _
      $region36: #{transformer_decoder_layer_kg_forward.4} parent=11 // pred_fallthru
        _
      // Predicated region
      $region37: #{transformer_decoder_layer_kg_forward.4} parent=11 // pred_check
        %p382 = pneg %p258
      $region38: #{transformer_decoder_layer_kg_forward.4} parent=11 // pred_check_branch
        %384 = sbr.rel (%p382) target = $region40
      $region39: #{transformer_decoder_layer_kg_forward.4} parent=11 // pred_region
        _
      $region40: #{transformer_decoder_layer_kg_forward.4} parent=11 // pred_fallthru
        _
      // Predicated region
      $region41: #{transformer_decoder_layer_kg_forward.4} parent=11 // pred_check
        %p385 = pneg %p279
      $region42: #{transformer_decoder_layer_kg_forward.4} parent=11 // pred_check_branch
        %387 = sbr.rel (%p385) target = $region44
      $region43: #{transformer_decoder_layer_kg_forward.4} parent=11 // pred_region
        _
      $region44: #{transformer_decoder_layer_kg_forward.4} parent=11 // pred_fallthru
        _
      // Predicated region
      $region45: #{transformer_decoder_layer_kg_forward.4} parent=11 // pred_check
        %p388 = pneg %p300
      $region46: #{transformer_decoder_layer_kg_forward.4} parent=11 // pred_check_branch
        %390 = sbr.rel (%p388) target = $region48
      $region47: #{transformer_decoder_layer_kg_forward.4} parent=11 // pred_region
        _
      $region48: #{transformer_decoder_layer_kg_forward.4} parent=11 // pred_fallthru
        _
      // Predicated region
      $region49: #{transformer_decoder_layer_kg_forward.4} parent=11 // pred_check
        %p391 = pneg %p321
      $region50: #{transformer_decoder_layer_kg_forward.4} parent=11 // pred_check_branch
        %393 = sbr.rel (%p391) target = $region52
      $region51: #{transformer_decoder_layer_kg_forward.4} parent=11 // pred_region
        _
      $region52: #{transformer_decoder_layer_kg_forward.4} parent=11 // pred_fallthru
        _
    $region12: #{transformer_decoder_layer_kg_forward.4} parent=5 // pred_fallthru
      _
    %p394 = scmp.lt.s32.totalorder %s19, 2
    // Predicated region
    $region53: #{transformer_decoder_layer_kg_forward.4} parent=5 // pred_check
      %p395 = pneg %p394
    $region54: #{transformer_decoder_layer_kg_forward.4} parent=5 // pred_check_branch
      %397 = sbr.rel (%p395) target = $region56
    $region55: #{transformer_decoder_layer_kg_forward.4} parent=5 // pred_region
      // Predicated region
      $region57: #{transformer_decoder_layer_kg_forward.4} parent=55 // pred_check
        %p398 = pneg %p53
      $region58: #{transformer_decoder_layer_kg_forward.4} parent=55 // pred_check_branch
        %400 = sbr.rel (%p398) target = $region60
      $region59: #{transformer_decoder_layer_kg_forward.4} parent=55 // pred_region
        %p401 = scmp.lt.s32.totalorder %s26, 1
        %s402 = scalar_select %p401, %s26, 1
        %p403 = scmp.lt.s32.totalorder %s27, 0
        %s404 = scalar_select %p403, %s27, 0
        %s405 = sadd.s32 %s404, %s402
        %s406 = smul.addr %s405, 8
        %s407 = scalar_lea.vmem %s0, %s406
      $region60: #{transformer_decoder_layer_kg_forward.4} parent=55 // pred_fallthru
        _
      // Predicated region
      $region61: #{transformer_decoder_layer_kg_forward.4} parent=55 // pred_check
        %p408 = pneg %p79
      $region62: #{transformer_decoder_layer_kg_forward.4} parent=55 // pred_check_branch
        %410 = sbr.rel (%p408) target = $region64
      $region63: #{transformer_decoder_layer_kg_forward.4} parent=55 // pred_region
        %p411 = scmp.lt.s32.totalorder %s26, 1
        %s412 = scalar_select %p411, %s26, 1
        %s413 = smul.addr %s412, 2
        %s414 = smul.addr %s413, 8
        %s415 = scalar_lea.vmem %s1, %s414
      $region64: #{transformer_decoder_layer_kg_forward.4} parent=55 // pred_fallthru
        _
      // Predicated region
      $region65: #{transformer_decoder_layer_kg_forward.4} parent=55 // pred_check
        %p416 = pneg %p105
      $region66: #{transformer_decoder_layer_kg_forward.4} parent=55 // pred_check_branch
        %418 = sbr.rel (%p416) target = $region68
      $region67: #{transformer_decoder_layer_kg_forward.4} parent=55 // pred_region
        %p419 = scmp.lt.s32.totalorder %s26, 1
        %s420 = scalar_select %p419, %s26, 1
        %s421 = scalar_lea.vmem %s2, %s420
      $region68: #{transformer_decoder_layer_kg_forward.4} parent=55 // pred_fallthru
        _
    $region56: #{transformer_decoder_layer_kg_forward.4} parent=5 // pred_fallthru
      _
    %p422 = scmp.le.s32.totalorder 1, %s19
    %p423 = scmp.lt.s32.totalorder %s19, 3
    %p424 = pnand %p422, %p423
    %p425 = pneg %p424
    // Predicated region
    $region69: #{transformer_decoder_layer_kg_forward.4} parent=5 // pred_check
      _
    $region70: #{transformer_decoder_layer_kg_forward.4} parent=5 // pred_check_branch
      %427 = sbr.rel (%p424) target = $region72
    $region71: #{transformer_decoder_layer_kg_forward.4} parent=5 // pred_region
      %s428 = ssub.s32 %s19, 1
      %p429 = scmp.lt.s32.totalorder %s28, 1
      %s430 = scalar_select %p429, %s28, 1
      %p431 = scmp.lt.s32.totalorder %s29, 0
      %s432 = scalar_select %p431, %s29, 0
      %s433 = sadd.s32 %s432, %s430
      %s434 = smul.addr %s433, 8
      %s435 = scalar_lea.vmem %s0, %s434
      %p436 = pneg %p59
      %p437 = pneg %p56
      %p438 = scmp.lt.s32.totalorder %s28, 1
      %s439 = scalar_select %p438, %s28, 1
      %s440 = smul.addr %s439, 2
      %s441 = smul.addr %s440, 8
      %s442 = scalar_lea.vmem %s1, %s441
      %p443 = pneg %p85
      %p444 = pneg %p82
      %p445 = scmp.lt.s32.totalorder %s28, 1
      %s446 = scalar_select %p445, %s28, 1
      %s447 = scalar_lea.vmem %s2, %s446
      %p448 = pneg %p111
      %p449 = pneg %p108
      %p450 = pneg %p132
      %p451 = pneg %p129
      %p452 = pneg %p153
      %p453 = pneg %p150
      %p454 = pneg %p174
      %p455 = pneg %p171
      %p456 = pneg %p195
      %p457 = pneg %p192
      %p458 = pneg %p216
      %p459 = pneg %p213
      %p460 = pneg %p237
      %p461 = pneg %p234
      %p462 = pneg %p258
      %p463 = pneg %p255
      %p464 = pneg %p279
      %p465 = pneg %p276
      %p466 = pneg %p300
      %p467 = pneg %p297
      %p468 = pneg %p321
      %p469 = pneg %p318
      %p470 = pneg %p349
      %p471 = pneg %p346
      %p472 = scmp.lt.s32.totalorder %s28, 1
      %s473 = scalar_select %p472, %s28, 1
      %p474 = scmp.lt.s32.totalorder %s29, 0
      %s475 = scalar_select %p474, %s29, 0
      %s476 = sadd.s32 %s475, %s473
      %s477 = smul.addr %s476, 8
      %s478 = scalar_lea.vmem %s13, %s477
      %p479 = scmp.lt.s32.totalorder %s28, 1
      %s480 = scalar_select %p479, %s28, 1
      %p481 = scmp.lt.s32.totalorder %s29, 0
      %s482 = scalar_select %p481, %s29, 0
      %s483 = sadd.s32 %s482, %s480
      %s484 = smul.addr %s483, 8
      %s485 = scalar_lea.vmem %s0, %s484
      %p486 = scmp.lt.s32.totalorder %s28, 1
      %s487 = scalar_select %p486, %s28, 1
      %s488 = smul.addr %s487, 2
      %s489 = smul.addr %s488, 8
      %s490 = scalar_lea.vmem %s1, %s489
      %p491 = scmp.lt.s32.totalorder %s28, 1
      %s492 = scalar_select %p491, %s28, 1
      %s493 = scalar_lea.vmem %s2, %s492
      %p494 = scmp.lt.s32.totalorder %s28, 1
      %s495 = scalar_select %p494, %s28, 1
      %p496 = scmp.lt.s32.totalorder %s29, 0
      %s497 = scalar_select %p496, %s29, 0
      %s498 = sadd.s32 %s497, %s495
      %s499 = smul.addr %s498, 8
      %s500 = scalar_lea.vmem %s13, %s499
      %v501 = vld [vmem:[%s485] sm:$0xff]
      %v502 = vld [vmem:[%s490] sm:$0xff]
      %v503 = vld [vmem:[%s490 + $0x8] sm:$0xf]
      %v504 = vld [vmem:[%s3] sm:$0xff]
      %v505 = vld [vmem:[%s3 + $0x8] sm:$0xff]
      %v506 = vld [vmem:[%s3 + $0x10] sm:$0xff]
      %v507 = vld [vmem:[%s3 + $0x18] sm:$0xff]
      %v508 = vld [vmem:[%s4] sm:$0x1]
      %v510 = vlaneseq
      %v511 = vshrl.u32 %v510, 7
      %v512 = vsub.s32 0, %v511
      %v513 = vrot.slane %v508, %v512
      %vm515 = vcmask 261120
      %v517 = vsel %vm515, %v501, 0
      %519 = vmatprep.subr.mxu0 0.0
      %520 = vmatpush1.msra.mxu0 0.0
      %521 = vmatprep.subr.mxu0 0.0
      %522 = vmatpush1.msra.mxu0 0.0
      %523 = vmatprep.subr.mxu0 0.0
      %524 = vmatpush1.msra.mxu0 0.0
      %525 = vmatprep.subr.mxu0 0.0
      %526 = vmatpush1.msra.mxu0 0.0
      %527 = vmatprep.subr.mxu0 0.0
      %528 = vmatpush1.msra.mxu0 0.0
      %529 = vmatprep.subr.mxu0 0.0
      %530 = vmatpush1.msra.mxu0 0.0
      %531 = vmatprep.subr.mxu0 0.0
      %532 = vmatpush1.msra.mxu0 0.0
      %533 = vmatprep.subr.mxu0 0.0
      %534 = vmatpush1.msra.mxu0 0.0
      %535 = vmatprep.subr.mxu0 0.0
      %536 = vmatpush1.msra.mxu0 0.0
      %537 = vmatprep.subr.mxu0 0.0
      %538 = vmatpush1.msra.mxu0 0.0
      %539 = vmatprep.subr.mxu0 0.0
      %540 = vmatpush1.msra.mxu0 0.0
      %541 = vmatprep.subr.mxu0 0.0
      %542 = vmatpush1.msra.mxu0 0.0
      %543 = vmatprep.subr.mxu0 0.0
      %544 = vmatpush1.msra.mxu0 %v507
      %545 = vmatprep.subr.mxu0 0.0
      %546 = vmatpush1.msra.mxu0 %v506
      %547 = vmatprep.subr.mxu0 0.0
      %548 = vmatpush1.msra.mxu0 %v505
      %549 = vmatprep.subr.mxu0 0.0
      %550 = vmatpush1.msra.mxu0 %v504
      %551 = vmatprep.subr.mxu0 0.0
      %552 = vmatpush2.msra.mxu0 0.0
      %553 = vmatprep.subr.mxu0 0.0
      %554 = vmatpush2.msra.mxu0 0.0
      %555 = vmatprep.subr.mxu0 0.0
      %556 = vmatpush2.msra.mxu0 0.0
      %557 = vmatprep.subr.mxu0 0.0
      %558 = vmatpush2.msra.mxu0 0.0
      %559 = vmatprep.subr.mxu0 0.0
      %560 = vmatpush2.msra.mxu0 0.0
      %561 = vmatprep.subr.mxu0 0.0
      %562 = vmatpush2.msra.mxu0 0.0
      %563 = vmatprep.subr.mxu0 0.0
      %564 = vmatpush2.msra.mxu0 0.0
      %565 = vmatprep.subr.mxu0 0.0
      %566 = vmatpush2.msra.mxu0 0.0
      %567 = vmatprep.subr.mxu0 0.0
      %568 = vmatpush2.msra.mxu0 0.0
      %569 = vmatprep.subr.mxu0 0.0
      %570 = vmatpush2.msra.mxu0 0.0
      %571 = vmatprep.subr.mxu0 0.0
      %572 = vmatpush2.msra.mxu0 0.0
      %573 = vmatprep.subr.mxu0 0.0
      %574 = vmatpush2.msra.mxu0 0.0
      %575 = vmatprep.subr.mxu0 0.0
      %576 = vmatpush2.msra.mxu0 0.0
      %577 = vmatprep.subr.mxu0 0.0
      %578 = vmatpush2.msra.mxu0 0.0
      %579 = vmatprep.subr.mxu0 0.0
      %580 = vmatpush2.msra.mxu0 0.0
      %581 = vmatprep.subr.mxu0 0.0
      %582 = vmatpush2.msra.mxu0 0.0
      %583 = vmatprep.mubr.f32.mxu0 0.0
      %584 = vmatmul.mubr.f32.gmra.mxu0 %v517
      %v585 = vpop.f32.mrf.mxu0
      %v586 = vadd.f32 %v513, %v585
      %v587 = vpop.f32.mrf.mxu0
      %588 = vdwg.mxu0
      %v589 = vmul.f32 %v586, 0.25
      %v590 = vld [vmem:[%s5] sm:$0xff]
      %v591 = vld [vmem:[%s5 + $0x8] sm:$0xff]
      %v592 = vld [vmem:[%s5 + $0x10] sm:$0xff]
      %v593 = vld [vmem:[%s5 + $0x18] sm:$0xff]
      %v594 = vld [vmem:[%s6] sm:$0x1]
      %v596 = vlaneseq
      %v597 = vshrl.u32 %v596, 7
      %v598 = vsub.s32 0, %v597
      %v599 = vrot.slane %v594, %v598
      %v602 = vsel %vm515, %v502, 0
      %v605 = vsel %vm515, %v503, 0
      %607 = vmatprep.subr.mxu0 0.0
      %608 = vmatpush1.msra.mxu0 0.0
      %609 = vmatprep.subr.mxu0 0.0
      %610 = vmatpush1.msra.mxu0 0.0
      %611 = vmatprep.subr.mxu0 0.0
      %612 = vmatpush1.msra.mxu0 0.0
      %613 = vmatprep.subr.mxu0 0.0
      %614 = vmatpush1.msra.mxu0 0.0
      %615 = vmatprep.subr.mxu0 0.0
      %616 = vmatpush1.msra.mxu0 0.0
      %617 = vmatprep.subr.mxu0 0.0
      %618 = vmatpush1.msra.mxu0 0.0
      %619 = vmatprep.subr.mxu0 0.0
      %620 = vmatpush1.msra.mxu0 0.0
      %621 = vmatprep.subr.mxu0 0.0
      %622 = vmatpush1.msra.mxu0 0.0
      %623 = vmatprep.subr.mxu0 0.0
      %624 = vmatpush1.msra.mxu0 0.0
      %625 = vmatprep.subr.mxu0 0.0
      %626 = vmatpush1.msra.mxu0 0.0
      %627 = vmatprep.subr.mxu0 0.0
      %628 = vmatpush1.msra.mxu0 0.0
      %629 = vmatprep.subr.mxu0 0.0
      %630 = vmatpush1.msra.mxu0 0.0
      %631 = vmatprep.subr.mxu0 0.0
      %632 = vmatpush1.msra.mxu0 %v593
      %633 = vmatprep.subr.mxu0 0.0
      %634 = vmatpush1.msra.mxu0 %v592
      %635 = vmatprep.subr.mxu0 0.0
      %636 = vmatpush1.msra.mxu0 %v591
      %637 = vmatprep.subr.mxu0 0.0
      %638 = vmatpush1.msra.mxu0 %v590
      %639 = vmatprep.subr.mxu0 0.0
      %640 = vmatpush2.msra.mxu0 0.0
      %641 = vmatprep.subr.mxu0 0.0
      %642 = vmatpush2.msra.mxu0 0.0
      %643 = vmatprep.subr.mxu0 0.0
      %644 = vmatpush2.msra.mxu0 0.0
      %645 = vmatprep.subr.mxu0 0.0
      %646 = vmatpush2.msra.mxu0 0.0
      %647 = vmatprep.subr.mxu0 0.0
      %648 = vmatpush2.msra.mxu0 0.0
      %649 = vmatprep.subr.mxu0 0.0
      %650 = vmatpush2.msra.mxu0 0.0
      %651 = vmatprep.subr.mxu0 0.0
      %652 = vmatpush2.msra.mxu0 0.0
      %653 = vmatprep.subr.mxu0 0.0
      %654 = vmatpush2.msra.mxu0 0.0
      %655 = vmatprep.subr.mxu0 0.0
      %656 = vmatpush2.msra.mxu0 0.0
      %657 = vmatprep.subr.mxu0 0.0
      %658 = vmatpush2.msra.mxu0 0.0
      %659 = vmatprep.subr.mxu0 0.0
      %660 = vmatpush2.msra.mxu0 0.0
      %661 = vmatprep.subr.mxu0 0.0
      %662 = vmatpush2.msra.mxu0 0.0
      %663 = vmatprep.subr.mxu0 0.0
      %664 = vmatpush2.msra.mxu0 0.0
      %665 = vmatprep.subr.mxu0 0.0
      %666 = vmatpush2.msra.mxu0 0.0
      %667 = vmatprep.subr.mxu0 0.0
      %668 = vmatpush2.msra.mxu0 0.0
      %669 = vmatprep.subr.mxu0 0.0
      %670 = vmatpush2.msra.mxu0 0.0
      %671 = vmatprep.mubr.f32.mxu0 0.0
      %672 = vmatmul.mubr.f32.gmra.mxu0 %v602
      %v673 = vpop.f32.mrf.mxu0
      %v674 = vadd.f32 %v599, %v673
      %v675 = vpop.f32.mrf.mxu0
      %676 = vmatprep.mubr.f32.mxu0 0.0
      %677 = vmatmul.mubr.f32.gmra.mxu0 %v605
      %v678 = vpop.f32.mrf.mxu0
      %v679 = vadd.f32 %v599, %v678
      %v680 = vpop.f32.mrf.mxu0
      %681 = vdwg.mxu0
      %v682 = vld [vmem:[%s7] sm:$0xff]
      %v683 = vld [vmem:[%s7 + $0x8] sm:$0xff]
      %v684 = vld [vmem:[%s7 + $0x10] sm:$0xff]
      %v685 = vld [vmem:[%s7 + $0x18] sm:$0xff]
      %v686 = vld [vmem:[%s8] sm:$0x1]
      %v688 = vlaneseq
      %v689 = vshrl.u32 %v688, 7
      %v690 = vsub.s32 0, %v689
      %v691 = vrot.slane %v686, %v690
      %693 = vmatprep.subr.mxu0 0.0
      %694 = vmatpush1.msra.mxu0 0.0
      %695 = vmatprep.subr.mxu0 0.0
      %696 = vmatpush1.msra.mxu0 0.0
      %697 = vmatprep.subr.mxu0 0.0
      %698 = vmatpush1.msra.mxu0 0.0
      %699 = vmatprep.subr.mxu0 0.0
      %700 = vmatpush1.msra.mxu0 0.0
      %701 = vmatprep.subr.mxu0 0.0
      %702 = vmatpush1.msra.mxu0 0.0
      %703 = vmatprep.subr.mxu0 0.0
      %704 = vmatpush1.msra.mxu0 0.0
      %705 = vmatprep.subr.mxu0 0.0
      %706 = vmatpush1.msra.mxu0 0.0
      %707 = vmatprep.subr.mxu0 0.0
      %708 = vmatpush1.msra.mxu0 0.0
      %709 = vmatprep.subr.mxu0 0.0
      %710 = vmatpush1.msra.mxu0 0.0
      %711 = vmatprep.subr.mxu0 0.0
      %712 = vmatpush1.msra.mxu0 0.0
      %713 = vmatprep.subr.mxu0 0.0
      %714 = vmatpush1.msra.mxu0 0.0
      %715 = vmatprep.subr.mxu0 0.0
      %716 = vmatpush1.msra.mxu0 0.0
      %717 = vmatprep.subr.mxu0 0.0
      %718 = vmatpush1.msra.mxu0 %v685
      %719 = vmatprep.subr.mxu0 0.0
      %720 = vmatpush1.msra.mxu0 %v684
      %721 = vmatprep.subr.mxu0 0.0
      %722 = vmatpush1.msra.mxu0 %v683
      %723 = vmatprep.subr.mxu0 0.0
      %724 = vmatpush1.msra.mxu0 %v682
      %725 = vmatprep.subr.mxu0 0.0
      %726 = vmatpush2.msra.mxu0 0.0
      %727 = vmatprep.subr.mxu0 0.0
      %728 = vmatpush2.msra.mxu0 0.0
      %729 = vmatprep.subr.mxu0 0.0
      %730 = vmatpush2.msra.mxu0 0.0
      %731 = vmatprep.subr.mxu0 0.0
      %732 = vmatpush2.msra.mxu0 0.0
      %733 = vmatprep.subr.mxu0 0.0
      %734 = vmatpush2.msra.mxu0 0.0
      %735 = vmatprep.subr.mxu0 0.0
      %736 = vmatpush2.msra.mxu0 0.0
      %737 = vmatprep.subr.mxu0 0.0
      %738 = vmatpush2.msra.mxu0 0.0
      %739 = vmatprep.subr.mxu0 0.0
      %740 = vmatpush2.msra.mxu0 0.0
      %741 = vmatprep.subr.mxu0 0.0
      %742 = vmatpush2.msra.mxu0 0.0
      %743 = vmatprep.subr.mxu0 0.0
      %744 = vmatpush2.msra.mxu0 0.0
      %745 = vmatprep.subr.mxu0 0.0
      %746 = vmatpush2.msra.mxu0 0.0
      %747 = vmatprep.subr.mxu0 0.0
      %748 = vmatpush2.msra.mxu0 0.0
      %749 = vmatprep.subr.mxu0 0.0
      %750 = vmatpush2.msra.mxu0 0.0
      %751 = vmatprep.subr.mxu0 0.0
      %752 = vmatpush2.msra.mxu0 0.0
      %753 = vmatprep.subr.mxu0 0.0
      %754 = vmatpush2.msra.mxu0 0.0
      %755 = vmatprep.subr.mxu0 0.0
      %756 = vmatpush2.msra.mxu0 0.0
      %757 = vmatprep.mubr.f32.mxu0 0.0
      %758 = vmatmul.mubr.f32.gmra.mxu0 %v602
      %v759 = vpop.f32.mrf.mxu0
      %v760 = vadd.f32 %v691, %v759
      %v761 = vpop.f32.mrf.mxu0
      %762 = vmatprep.mubr.f32.mxu0 0.0
      %763 = vmatmul.mubr.f32.gmra.mxu0 %v605
      %v764 = vpop.f32.mrf.mxu0
      %v765 = vadd.f32 %v691, %v764
      %v766 = vpop.f32.mrf.mxu0
      %767 = vdwg.mxu0
      %v768 = vld [vmem:[%s493] sm:$0x1]
      %vm769 = vcmp.gt.f32.partialorder %v768, 0.5
      %v770 = vsel %vm769, 1, 0
      %v771 = vlaneseq
      %v772 = vshrl.u32 %v771, 7
      %v773 = vsub.s32 0, %v772
      %v774 = vrot.slane %v770, %v773
      %vm775 = vcmp.eq.s32.totalorder %v774, 1
      %vm776 = vcmask 130048
      %v778 = vsel %vm776, %v589, 0
      %v781 = vsel %vm776, %v674, 0
      %v784 = vsel %vm776, %v679, 0
      %786 = vmatprep.subr.mxu0 0.0
      %787 = vmatpush1.xpose.msra.mxu0 0.0
      %788 = vmatprep.subr.mxu0 0.0
      %789 = vmatpush1.xpose.msra.mxu0 0.0
      %790 = vmatprep.subr.mxu0 0.0
      %791 = vmatpush1.xpose.msra.mxu0 0.0
      %792 = vmatprep.subr.mxu0 0.0
      %793 = vmatpush1.xpose.msra.mxu0 0.0
      %794 = vmatprep.subr.mxu0 0.0
      %795 = vmatpush1.xpose.msra.mxu0 0.0
      %796 = vmatprep.subr.mxu0 0.0
      %797 = vmatpush1.xpose.msra.mxu0 0.0
      %798 = vmatprep.subr.mxu0 0.0
      %799 = vmatpush1.xpose.msra.mxu0 0.0
      %800 = vmatprep.subr.mxu0 0.0
      %801 = vmatpush1.xpose.msra.mxu0 0.0
      %802 = vmatprep.subr.mxu0 0.0
      %803 = vmatpush1.xpose.msra.mxu0 0.0
      %804 = vmatprep.subr.mxu0 0.0
      %805 = vmatpush1.xpose.msra.mxu0 0.0
      %806 = vmatprep.subr.mxu0 0.0
      %807 = vmatpush1.xpose.msra.mxu0 0.0
      %808 = vmatprep.subr.mxu0 0.0
      %809 = vmatpush1.xpose.msra.mxu0 0.0
      %810 = vmatprep.subr.mxu0 0.0
      %811 = vmatpush1.xpose.msra.mxu0 0.0
      %812 = vmatprep.subr.mxu0 0.0
      %813 = vmatpush1.xpose.msra.mxu0 0.0
      %814 = vmatprep.subr.mxu0 0.0
      %815 = vmatpush1.xpose.msra.mxu0 %v784
      %816 = vmatprep.subr.mxu0 0.0
      %817 = vmatpush1.xpose.msra.mxu0 %v781
      %818 = vmatprep.subr.mxu0 0.0
      %819 = vmatpush2.xpose.msra.mxu0 0.0
      %820 = vmatprep.subr.mxu0 0.0
      %821 = vmatpush2.xpose.msra.mxu0 0.0
      %822 = vmatprep.subr.mxu0 0.0
      %823 = vmatpush2.xpose.msra.mxu0 0.0
      %824 = vmatprep.subr.mxu0 0.0
      %825 = vmatpush2.xpose.msra.mxu0 0.0
      %826 = vmatprep.subr.mxu0 0.0
      %827 = vmatpush2.xpose.msra.mxu0 0.0
      %828 = vmatprep.subr.mxu0 0.0
      %829 = vmatpush2.xpose.msra.mxu0 0.0
      %830 = vmatprep.subr.mxu0 0.0
      %831 = vmatpush2.xpose.msra.mxu0 0.0
      %832 = vmatprep.subr.mxu0 0.0
      %833 = vmatpush2.xpose.msra.mxu0 0.0
      %834 = vmatprep.subr.mxu0 0.0
      %835 = vmatpush2.xpose.msra.mxu0 0.0
      %836 = vmatprep.subr.mxu0 0.0
      %837 = vmatpush2.xpose.msra.mxu0 0.0
      %838 = vmatprep.subr.mxu0 0.0
      %839 = vmatpush2.xpose.msra.mxu0 0.0
      %840 = vmatprep.subr.mxu0 0.0
      %841 = vmatpush2.xpose.msra.mxu0 0.0
      %842 = vmatprep.subr.mxu0 0.0
      %843 = vmatpush2.xpose.msra.mxu0 0.0
      %844 = vmatprep.subr.mxu0 0.0
      %845 = vmatpush2.xpose.msra.mxu0 0.0
      %846 = vmatprep.subr.mxu0 0.0
      %847 = vmatpush2.xpose.msra.mxu0 0.0
      %848 = vmatprep.subr.mxu0 0.0
      %849 = vmatpush2.xpose.msra.mxu0 0.0
      %850 = vmatprep.mubr.f32.mxu0 0.0
      %851 = vmatmul.mubr.f32.gmra.mxu0 %v778
      %v852 = vpop.f32.mrf.mxu0
      %v853 = vadd.f32 0.0, %v852
      %v854 = vpop.f32.mrf.mxu0
      %855 = vdwg.mxu0
      %v856 = vsel %vm775, %v853, -1e+20
      %vm857 = vcmask 97280
      %v858 = vsel %vm857, %v856, -inf
      %859 = vmax.xlane.f32.xlu0 %v858
      %v860 = vpop.xlane.xlu0 %859
      %v861 = vsub.f32 %v856, %v860
      %v862 = vmul.f32 %v861, 1.442695
      %v863 = vpow.pop %v862
      %v864 = vsel %vm857, %v863, 0.0
      %865 = vadd.xlane.f32.xlu0 %v864
      %v866 = vpop.xlane.xlu0 %865
      %v867 = vrcp.pop %v866
      %v868 = vmul.f32 %v863, %v867
      %v870 = vsel %vm857, %v868, 0
      %vm872 = vcmask 1043456
      %v874 = vsel %vm872, %v765, 0
      %876 = vmatprep.subr.mxu0 0.0
      %877 = vmatpush1.msra.mxu0 0.0
      %878 = vmatprep.subr.mxu0 0.0
      %879 = vmatpush1.msra.mxu0 0.0
      %880 = vmatprep.subr.mxu0 0.0
      %881 = vmatpush1.msra.mxu0 0.0
      %882 = vmatprep.subr.mxu0 0.0
      %883 = vmatpush1.msra.mxu0 0.0
      %884 = vmatprep.subr.mxu0 0.0
      %885 = vmatpush1.msra.mxu0 0.0
      %886 = vmatprep.subr.mxu0 0.0
      %887 = vmatpush1.msra.mxu0 0.0
      %888 = vmatprep.subr.mxu0 0.0
      %889 = vmatpush1.msra.mxu0 0.0
      %890 = vmatprep.subr.mxu0 0.0
      %891 = vmatpush1.msra.mxu0 0.0
      %892 = vmatprep.subr.mxu0 0.0
      %893 = vmatpush1.msra.mxu0 0.0
      %894 = vmatprep.subr.mxu0 0.0
      %895 = vmatpush1.msra.mxu0 0.0
      %896 = vmatprep.subr.mxu0 0.0
      %897 = vmatpush1.msra.mxu0 0.0
      %898 = vmatprep.subr.mxu0 0.0
      %899 = vmatpush1.msra.mxu0 0.0
      %900 = vmatprep.subr.mxu0 0.0
      %901 = vmatpush1.msra.mxu0 0.0
      %902 = vmatprep.subr.mxu0 0.0
      %903 = vmatpush1.msra.mxu0 0.0
      %904 = vmatprep.subr.mxu0 0.0
      %905 = vmatpush1.msra.mxu0 %v874
      %906 = vmatprep.subr.mxu0 0.0
      %907 = vmatpush1.msra.mxu0 %v760
      %908 = vmatprep.subr.mxu0 0.0
      %909 = vmatpush2.msra.mxu0 0.0
      %910 = vmatprep.subr.mxu0 0.0
      %911 = vmatpush2.msra.mxu0 0.0
      %912 = vmatprep.subr.mxu0 0.0
      %913 = vmatpush2.msra.mxu0 0.0
      %914 = vmatprep.subr.mxu0 0.0
      %915 = vmatpush2.msra.mxu0 0.0
      %916 = vmatprep.subr.mxu0 0.0
      %917 = vmatpush2.msra.mxu0 0.0
      %918 = vmatprep.subr.mxu0 0.0
      %919 = vmatpush2.msra.mxu0 0.0
      %920 = vmatprep.subr.mxu0 0.0
      %921 = vmatpush2.msra.mxu0 0.0
      %922 = vmatprep.subr.mxu0 0.0
      %923 = vmatpush2.msra.mxu0 0.0
      %924 = vmatprep.subr.mxu0 0.0
      %925 = vmatpush2.msra.mxu0 0.0
      %926 = vmatprep.subr.mxu0 0.0
      %927 = vmatpush2.msra.mxu0 0.0
      %928 = vmatprep.subr.mxu0 0.0
      %929 = vmatpush2.msra.mxu0 0.0
      %930 = vmatprep.subr.mxu0 0.0
      %931 = vmatpush2.msra.mxu0 0.0
      %932 = vmatprep.subr.mxu0 0.0
      %933 = vmatpush2.msra.mxu0 0.0
      %934 = vmatprep.subr.mxu0 0.0
      %935 = vmatpush2.msra.mxu0 0.0
      %936 = vmatprep.subr.mxu0 0.0
      %937 = vmatpush2.msra.mxu0 0.0
      %938 = vmatprep.subr.mxu0 0.0
      %939 = vmatpush2.msra.mxu0 0.0
      %940 = vmatprep.mubr.f32.mxu0 0.0
      %941 = vmatmul.mubr.f32.gmra.mxu0 %v870
      %v942 = vpop.f32.mrf.mxu0
      %v943 = vadd.f32 0.0, %v942
      %v944 = vpop.f32.mrf.mxu0
      %945 = vdwg.mxu0
      %946 = vrot.lane.b32.xlu0 %v589, 112
      %v947 = vpop.permute.xlu0 %946
      %948 = vrot.lane.b32.xlu0 %v674, 112
      %v949 = vpop.permute.xlu0 %948
      %950 = vrot.lane.b32.xlu0 %v679, 112
      %v951 = vpop.permute.xlu0 %950
      %v952 = vsel %vm776, %v947, 0
      %v954 = vsel %vm776, %v949, 0
      %v956 = vsel %vm776, %v951, 0
      %958 = vmatprep.subr.mxu0 0.0
      %959 = vmatpush1.xpose.msra.mxu0 0.0
      %960 = vmatprep.subr.mxu0 0.0
      %961 = vmatpush1.xpose.msra.mxu0 0.0
      %962 = vmatprep.subr.mxu0 0.0
      %963 = vmatpush1.xpose.msra.mxu0 0.0
      %964 = vmatprep.subr.mxu0 0.0
      %965 = vmatpush1.xpose.msra.mxu0 0.0
      %966 = vmatprep.subr.mxu0 0.0
      %967 = vmatpush1.xpose.msra.mxu0 0.0
      %968 = vmatprep.subr.mxu0 0.0
      %969 = vmatpush1.xpose.msra.mxu0 0.0
      %970 = vmatprep.subr.mxu0 0.0
      %971 = vmatpush1.xpose.msra.mxu0 0.0
      %972 = vmatprep.subr.mxu0 0.0
      %973 = vmatpush1.xpose.msra.mxu0 0.0
      %974 = vmatprep.subr.mxu0 0.0
      %975 = vmatpush1.xpose.msra.mxu0 0.0
      %976 = vmatprep.subr.mxu0 0.0
      %977 = vmatpush1.xpose.msra.mxu0 0.0
      %978 = vmatprep.subr.mxu0 0.0
      %979 = vmatpush1.xpose.msra.mxu0 0.0
      %980 = vmatprep.subr.mxu0 0.0
      %981 = vmatpush1.xpose.msra.mxu0 0.0
      %982 = vmatprep.subr.mxu0 0.0
      %983 = vmatpush1.xpose.msra.mxu0 0.0
      %984 = vmatprep.subr.mxu0 0.0
      %985 = vmatpush1.xpose.msra.mxu0 0.0
      %986 = vmatprep.subr.mxu0 0.0
      %987 = vmatpush1.xpose.msra.mxu0 %v956
      %988 = vmatprep.subr.mxu0 0.0
      %989 = vmatpush1.xpose.msra.mxu0 %v954
      %990 = vmatprep.subr.mxu0 0.0
      %991 = vmatpush2.xpose.msra.mxu0 0.0
      %992 = vmatprep.subr.mxu0 0.0
      %993 = vmatpush2.xpose.msra.mxu0 0.0
      %994 = vmatprep.subr.mxu0 0.0
      %995 = vmatpush2.xpose.msra.mxu0 0.0
      %996 = vmatprep.subr.mxu0 0.0
      %997 = vmatpush2.xpose.msra.mxu0 0.0
      %998 = vmatprep.subr.mxu0 0.0
      %999 = vmatpush2.xpose.msra.mxu0 0.0
      %1000 = vmatprep.subr.mxu0 0.0
      %1001 = vmatpush2.xpose.msra.mxu0 0.0
      %1002 = vmatprep.subr.mxu0 0.0
      %1003 = vmatpush2.xpose.msra.mxu0 0.0
      %1004 = vmatprep.subr.mxu0 0.0
      %1005 = vmatpush2.xpose.msra.mxu0 0.0
      %1006 = vmatprep.subr.mxu0 0.0
      %1007 = vmatpush2.xpose.msra.mxu0 0.0
      %1008 = vmatprep.subr.mxu0 0.0
      %1009 = vmatpush2.xpose.msra.mxu0 0.0
      %1010 = vmatprep.subr.mxu0 0.0
      %1011 = vmatpush2.xpose.msra.mxu0 0.0
      %1012 = vmatprep.subr.mxu0 0.0
      %1013 = vmatpush2.xpose.msra.mxu0 0.0
      %1014 = vmatprep.subr.mxu0 0.0
      %1015 = vmatpush2.xpose.msra.mxu0 0.0
      %1016 = vmatprep.subr.mxu0 0.0
      %1017 = vmatpush2.xpose.msra.mxu0 0.0
      %1018 = vmatprep.subr.mxu0 0.0
      %1019 = vmatpush2.xpose.msra.mxu0 0.0
      %1020 = vmatprep.subr.mxu0 0.0
      %1021 = vmatpush2.xpose.msra.mxu0 0.0
      %1022 = vmatprep.mubr.f32.mxu0 0.0
      %1023 = vmatmul.mubr.f32.gmra.mxu0 %v952
      %v1024 = vpop.f32.mrf.mxu0
      %v1025 = vadd.f32 0.0, %v1024
      %v1026 = vpop.f32.mrf.mxu0
      %1027 = vdwg.mxu0
      %v1028 = vsel %vm775, %v1025, -1e+20
      %v1029 = vsel %vm857, %v1028, -inf
      %1030 = vmax.xlane.f32.xlu0 %v1029
      %v1031 = vpop.xlane.xlu0 %1030
      %v1032 = vsub.f32 %v1028, %v1031
      %v1033 = vmul.f32 %v1032, 1.442695
      %v1034 = vpow.pop %v1033
      %v1035 = vsel %vm857, %v1034, 0.0
      %1036 = vadd.xlane.f32.xlu0 %v1035
      %v1037 = vpop.xlane.xlu0 %1036
      %v1038 = vrcp.pop %v1037
      %v1039 = vmul.f32 %v1034, %v1038
      %1041 = vrot.lane.b32.xlu0 %v760, 112
      %v1042 = vpop.permute.xlu0 %1041
      %1043 = vrot.lane.b32.xlu0 %v765, 112
      %v1044 = vpop.permute.xlu0 %1043
      %v1047 = vsel %vm857, %v1039, 0
      %v1049 = vsel %vm872, %v1044, 0
      %1051 = vmatprep.subr.mxu0 0.0
      %1052 = vmatpush1.msra.mxu0 0.0
      %1053 = vmatprep.subr.mxu0 0.0
      %1054 = vmatpush1.msra.mxu0 0.0
      %1055 = vmatprep.subr.mxu0 0.0
      %1056 = vmatpush1.msra.mxu0 0.0
      %1057 = vmatprep.subr.mxu0 0.0
      %1058 = vmatpush1.msra.mxu0 0.0
      %1059 = vmatprep.subr.mxu0 0.0
      %1060 = vmatpush1.msra.mxu0 0.0
      %1061 = vmatprep.subr.mxu0 0.0
      %1062 = vmatpush1.msra.mxu0 0.0
      %1063 = vmatprep.subr.mxu0 0.0
      %1064 = vmatpush1.msra.mxu0 0.0
      %1065 = vmatprep.subr.mxu0 0.0
      %1066 = vmatpush1.msra.mxu0 0.0
      %1067 = vmatprep.subr.mxu0 0.0
      %1068 = vmatpush1.msra.mxu0 0.0
      %1069 = vmatprep.subr.mxu0 0.0
      %1070 = vmatpush1.msra.mxu0 0.0
      %1071 = vmatprep.subr.mxu0 0.0
      %1072 = vmatpush1.msra.mxu0 0.0
      %1073 = vmatprep.subr.mxu0 0.0
      %1074 = vmatpush1.msra.mxu0 0.0
      %1075 = vmatprep.subr.mxu0 0.0
      %1076 = vmatpush1.msra.mxu0 0.0
      %1077 = vmatprep.subr.mxu0 0.0
      %1078 = vmatpush1.msra.mxu0 0.0
      %1079 = vmatprep.subr.mxu0 0.0
      %1080 = vmatpush1.msra.mxu0 %v1049
      %1081 = vmatprep.subr.mxu0 0.0
      %1082 = vmatpush1.msra.mxu0 %v1042
      %1083 = vmatprep.subr.mxu0 0.0
      %1084 = vmatpush2.msra.mxu0 0.0
      %1085 = vmatprep.subr.mxu0 0.0
      %1086 = vmatpush2.msra.mxu0 0.0
      %1087 = vmatprep.subr.mxu0 0.0
      %1088 = vmatpush2.msra.mxu0 0.0
      %1089 = vmatprep.subr.mxu0 0.0
      %1090 = vmatpush2.msra.mxu0 0.0
      %1091 = vmatprep.subr.mxu0 0.0
      %1092 = vmatpush2.msra.mxu0 0.0
      %1093 = vmatprep.subr.mxu0 0.0
      %1094 = vmatpush2.msra.mxu0 0.0
      %1095 = vmatprep.subr.mxu0 0.0
      %1096 = vmatpush2.msra.mxu0 0.0
      %1097 = vmatprep.subr.mxu0 0.0
      %1098 = vmatpush2.msra.mxu0 0.0
      %1099 = vmatprep.subr.mxu0 0.0
      %1100 = vmatpush2.msra.mxu0 0.0
      %1101 = vmatprep.subr.mxu0 0.0
      %1102 = vmatpush2.msra.mxu0 0.0
      %1103 = vmatprep.subr.mxu0 0.0
      %1104 = vmatpush2.msra.mxu0 0.0
      %1105 = vmatprep.subr.mxu0 0.0
      %1106 = vmatpush2.msra.mxu0 0.0
      %1107 = vmatprep.subr.mxu0 0.0
      %1108 = vmatpush2.msra.mxu0 0.0
      %1109 = vmatprep.subr.mxu0 0.0
      %1110 = vmatpush2.msra.mxu0 0.0
      %1111 = vmatprep.subr.mxu0 0.0
      %1112 = vmatpush2.msra.mxu0 0.0
      %1113 = vmatprep.subr.mxu0 0.0
      %1114 = vmatpush2.msra.mxu0 0.0
      %1115 = vmatprep.mubr.f32.mxu0 0.0
      %1116 = vmatmul.mubr.f32.gmra.mxu0 %v1047
      %v1117 = vpop.f32.mrf.mxu0
      %v1118 = vadd.f32 0.0, %v1117
      %v1119 = vpop.f32.mrf.mxu0
      %1120 = vdwg.mxu0
      %1122 = vrot.lane.b32.xlu0 %v1118, 16
      %v1123 = vpop.permute.xlu0 %1122
      %v1125 = vsel %vm776, %v943, %v1123
      %v1126 = vld [vmem:[%s9] sm:$0xff]
      %v1127 = vld [vmem:[%s9 + $0x8] sm:$0xff]
      %v1128 = vld [vmem:[%s9 + $0x10] sm:$0xff]
      %v1129 = vld [vmem:[%s9 + $0x18] sm:$0xff]
      %v1130 = vld [vmem:[%s10] sm:$0x1]
      %v1132 = vlaneseq
      %v1133 = vshrl.u32 %v1132, 7
      %v1134 = vsub.s32 0, %v1133
      %v1135 = vrot.slane %v1130, %v1134
      %v1138 = vsel %vm515, %v1125, 0
      %1140 = vmatprep.subr.mxu0 0.0
      %1141 = vmatpush1.msra.mxu0 0.0
      %1142 = vmatprep.subr.mxu0 0.0
      %1143 = vmatpush1.msra.mxu0 0.0
      %1144 = vmatprep.subr.mxu0 0.0
      %1145 = vmatpush1.msra.mxu0 0.0
      %1146 = vmatprep.subr.mxu0 0.0
      %1147 = vmatpush1.msra.mxu0 0.0
      %1148 = vmatprep.subr.mxu0 0.0
      %1149 = vmatpush1.msra.mxu0 0.0
      %1150 = vmatprep.subr.mxu0 0.0
      %1151 = vmatpush1.msra.mxu0 0.0
      %1152 = vmatprep.subr.mxu0 0.0
      %1153 = vmatpush1.msra.mxu0 0.0
      %1154 = vmatprep.subr.mxu0 0.0
      %1155 = vmatpush1.msra.mxu0 0.0
      %1156 = vmatprep.subr.mxu0 0.0
      %1157 = vmatpush1.msra.mxu0 0.0
      %1158 = vmatprep.subr.mxu0 0.0
      %1159 = vmatpush1.msra.mxu0 0.0
      %1160 = vmatprep.subr.mxu0 0.0
      %1161 = vmatpush1.msra.mxu0 0.0
      %1162 = vmatprep.subr.mxu0 0.0
      %1163 = vmatpush1.msra.mxu0 0.0
      %1164 = vmatprep.subr.mxu0 0.0
      %1165 = vmatpush1.msra.mxu0 %v1129
      %1166 = vmatprep.subr.mxu0 0.0
      %1167 = vmatpush1.msra.mxu0 %v1128
      %1168 = vmatprep.subr.mxu0 0.0
      %1169 = vmatpush1.msra.mxu0 %v1127
      %1170 = vmatprep.subr.mxu0 0.0
      %1171 = vmatpush1.msra.mxu0 %v1126
      %1172 = vmatprep.subr.mxu0 0.0
      %1173 = vmatpush2.msra.mxu0 0.0
      %1174 = vmatprep.subr.mxu0 0.0
      %1175 = vmatpush2.msra.mxu0 0.0
      %1176 = vmatprep.subr.mxu0 0.0
      %1177 = vmatpush2.msra.mxu0 0.0
      %1178 = vmatprep.subr.mxu0 0.0
      %1179 = vmatpush2.msra.mxu0 0.0
      %1180 = vmatprep.subr.mxu0 0.0
      %1181 = vmatpush2.msra.mxu0 0.0
      %1182 = vmatprep.subr.mxu0 0.0
      %1183 = vmatpush2.msra.mxu0 0.0
      %1184 = vmatprep.subr.mxu0 0.0
      %1185 = vmatpush2.msra.mxu0 0.0
      %1186 = vmatprep.subr.mxu0 0.0
      %1187 = vmatpush2.msra.mxu0 0.0
      %1188 = vmatprep.subr.mxu0 0.0
      %1189 = vmatpush2.msra.mxu0 0.0
      %1190 = vmatprep.subr.mxu0 0.0
      %1191 = vmatpush2.msra.mxu0 0.0
      %1192 = vmatprep.subr.mxu0 0.0
      %1193 = vmatpush2.msra.mxu0 0.0
      %1194 = vmatprep.subr.mxu0 0.0
      %1195 = vmatpush2.msra.mxu0 0.0
      %1196 = vmatprep.subr.mxu0 0.0
      %1197 = vmatpush2.msra.mxu0 0.0
      %1198 = vmatprep.subr.mxu0 0.0
      %1199 = vmatpush2.msra.mxu0 0.0
      %1200 = vmatprep.subr.mxu0 0.0
      %1201 = vmatpush2.msra.mxu0 0.0
      %1202 = vmatprep.subr.mxu0 0.0
      %1203 = vmatpush2.msra.mxu0 0.0
      %1204 = vmatprep.mubr.f32.mxu0 0.0
      %1205 = vmatmul.mubr.f32.gmra.mxu0 %v1138
      %v1206 = vpop.f32.mrf.mxu0
      %v1207 = vadd.f32 %v1135, %v1206
      %v1208 = vpop.f32.mrf.mxu0
      %1209 = vdwg.mxu0
      %v1210 = vadd.f32 %v501, %v1207
      %v1211 = vsel %vm515, %v1210, 0.0
      %1212 = vadd.xlane.f32.xlu0 %v1211
      %v1213 = vpop.xlane.xlu0 %1212
      %v1214 = vrcp.pop 32.0
      %v1215 = vmul.f32 %v1213, %v1214
      %v1216 = vsub.f32 %v1210, %v1215
      %v1217 = vmul.f32 %v1216, %v1216
      %v1218 = vsel %vm515, %v1217, 0.0
      %1219 = vadd.xlane.f32.xlu0 %v1218
      %v1220 = vpop.xlane.xlu0 %1219
      %v1221 = vmul.f32 %v1220, %v1214
      %v1222 = vadd.f32 %v1221, 1e-05
      %v1223 = vrsqrt.pop %v1222
      %v1224 = vmul.f32 %v1216, %v1223
      %v1225 = vld [vmem:[%s11] sm:$0x1]
      %v1227 = vlaneseq
      %v1228 = vshrl.u32 %v1227, 7
      %v1229 = vsub.s32 0, %v1228
      %v1230 = vrot.slane %v1225, %v1229
      %v1232 = vmul.f32 %v1224, %v1230
      %v1233 = vld [vmem:[%s12] sm:$0x1]
      %v1235 = vlaneseq
      %v1236 = vshrl.u32 %v1235, 7
      %v1237 = vsub.s32 0, %v1236
      %v1238 = vrot.slane %v1233, %v1237
      %v1240 = vadd.f32 %v1232, %v1238
      %1241 = vst.msk [vmem:[%s500] sm:$0xff] %vm515, %v1240
      %p1242 = scmp.lt.s32.totalorder %s28, 1
      %s1243 = scalar_select %p1242, %s28, 1
      %p1244 = scmp.lt.s32.totalorder %s29, 0
      %s1245 = scalar_select %p1244, %s29, 0
      %s1246 = sadd.s32 %s1245, %s1243
      %s1247 = smul.addr %s1246, 8
      %s1248 = scalar_lea.vmem %s13, %s1247
      // Predicated region
      $region73: #{transformer_decoder_layer_kg_forward.4} parent=71 // pred_check
        %p1249 = pneg %p346
      $region74: #{transformer_decoder_layer_kg_forward.4} parent=71 // pred_check_branch
        %1251 = sbr.rel (%p1249) target = $region76
      $region75: #{transformer_decoder_layer_kg_forward.4} parent=71 // pred_region
        _
      $region76: #{transformer_decoder_layer_kg_forward.4} parent=71 // pred_fallthru
        _
    $region72: #{transformer_decoder_layer_kg_forward.4} parent=5 // pred_fallthru
      _
    %p1252 = scmp.le.s32.totalorder 2, %s19
    // Predicated region
    $region77: #{transformer_decoder_layer_kg_forward.4} parent=5 // pred_check
      %p1253 = pneg %p1252
    $region78: #{transformer_decoder_layer_kg_forward.4} parent=5 // pred_check_branch
      %1255 = sbr.rel (%p1253) target = $region80
    $region79: #{transformer_decoder_layer_kg_forward.4} parent=5 // pred_region
      %s1256 = ssub.s32 %s19, 2
      // Predicated region
      $region81: #{transformer_decoder_layer_kg_forward.4} parent=79 // pred_check
        %p1257 = pneg %p352
      $region82: #{transformer_decoder_layer_kg_forward.4} parent=79 // pred_check_branch
        %1259 = sbr.rel (%p1257) target = $region84
      $region83: #{transformer_decoder_layer_kg_forward.4} parent=79 // pred_region
        %p1260 = scmp.lt.s32.totalorder %s30, 1
        %s1261 = scalar_select %p1260, %s30, 1
        %p1262 = scmp.lt.s32.totalorder %s31, 0
        %s1263 = scalar_select %p1262, %s31, 0
        %s1264 = sadd.s32 %s1263, %s1261
        %s1265 = smul.addr %s1264, 8
        %s1266 = scalar_lea.vmem %s13, %s1265
      $region84: #{transformer_decoder_layer_kg_forward.4} parent=79 // pred_fallthru
        _
    $region80: #{transformer_decoder_layer_kg_forward.4} parent=5 // pred_fallthru
      _
  $region6: #{transformer_decoder_layer_kg_forward.4} parent=0 // loop_footer
    %s23 = sadd.s32 1, %s19
  $region7: #{transformer_decoder_layer_kg_forward.4} parent=0 // loop_footer_branch
    %18 = sbr.rel target = $region3
  $region8: #{transformer_decoder_layer_kg_forward.4} parent=0 // loop_exit
    _

</llo_original>
